<compile_context>
chip_gen: v7x
topology: tpu7x:2x2x1
jax: 0.10.0
libtpu: 0.0.40
codegen_flags: <defaults>
</compile_context>

<pallas_src>
import functools

import jax
import jax.numpy as jnp
from jax.experimental import pallas as pl
from jax.experimental.pallas import tpu as pltpu


# ---------------------------------------------------------------------------
# Kernel 1: fc1 stream     h1 = relu(x @ W1 + b1)
#   grid = (nh, nk): nh = fc1 output-column tiles (parallel, v7x megacore),
#                    nk = K reduction tiles (arbitrary).
# ---------------------------------------------------------------------------
def _fc1_kernel(x_ref, w1_ref, b1_ref, h1_ref, acc_ref, *, tk, x_resident):
    k = pl.program_id(1)

    @pl.when(k == 0)
    def _():
        acc_ref[...] = jnp.zeros_like(acc_ref)

    if x_resident:
        # x is one resident (B, K) block; slice the current K chunk.
        x_chunk = x_ref[:, pl.ds(pl.multiple_of(k * tk, tk), tk)]
    else:
        # x is streamed along K with the same index_map as w1.
        x_chunk = x_ref[...]

    acc_ref[...] += jnp.dot(x_chunk.astype(w1_ref.dtype), w1_ref[...],
                            preferred_element_type=jnp.float32)

    @pl.when(k == pl.num_programs(1) - 1)
    def _():
        h1_ref[...] = jnp.maximum(acc_ref[...] + b1_ref[...],
                                  0.0).astype(h1_ref.dtype)


# ---------------------------------------------------------------------------
# Kernel 2: tiny tail      out = ((relu(h1@W2+b2) relu(@W3+b3)) @ W4 + b4
#   <0.1% of FLOPs/bytes; one full-block grid step.
# ---------------------------------------------------------------------------
def _tail_kernel(h1_ref, w2_ref, b2_ref, w3_ref, b3_ref, w4_ref, b4_ref, o_ref):
    cdt = w2_ref.dtype
    h2 = jnp.maximum(
        jnp.dot(h1_ref[...], w2_ref[...],
                preferred_element_type=jnp.float32) + b2_ref[...], 0.0)
    h3 = jnp.maximum(
        jnp.dot(h2.astype(cdt), w3_ref[...],
                preferred_element_type=jnp.float32) + b3_ref[...], 0.0)
    o_ref[...] = (jnp.dot(h3.astype(cdt), w4_ref[...],
                          preferred_element_type=jnp.float32)
                  + b4_ref[...]).astype(o_ref.dtype)


# ---------------------------------------------------------------------------
# Tiling plan (derived from the local TPU generation's VMEM capacity).
# ---------------------------------------------------------------------------
def _vmem_capacity_bytes():
    try:
        return int(pltpu.get_tpu_info().vmem_capacity_bytes)
    except Exception:
        return 64 << 20  # conservative (v7x per-core)


def _plan_tiles(B, K, H1, wbytes, vmem_cap):
    # Two fc1 output-column tiles -> parallel axis for v7x's 2 TensorCores.
    tn = H1 // 2 if (H1 >= 256 and (H1 // 2) % 128 == 0) else H1

    # Keep x resident only while it is comfortably small.
    x_resident = (B * K * 4) <= vmem_cap // 8

    headroom = max(8 << 20, vmem_cap // 8)
    budget = vmem_cap - headroom - (B * K * 4 if x_resident else 0)
    budget = max(budget, 4 << 20)

    def step_bytes(t):
        b = 2 * t * tn * wbytes          # double-buffered w1 slab
        if not x_resident:
            b += 2 * B * t * 4           # double-buffered f32 x slab
        return b

    tk = K
    while tk > 512 and tk % 2 == 0 and step_bytes(tk) > budget:
        tk //= 2
    assert K % tk == 0 and (tk == K or tk % 128 == 0), (K, tk)
    return tn, tk, x_resident


# ---------------------------------------------------------------------------
# Forward pass.  `params` must come from prepare_params (weights already in
# the narrow streaming dtype, biases f32) -- no per-call casts inside jit.
# ---------------------------------------------------------------------------
@functools.partial(jax.jit, static_argnames=("single_buffer_x",))
def simple_model_forward(x, params, *, single_buffer_x=True):
    """x: (B, C, H, W) float32. Returns (B, 6) float32."""
    w1, b1, w2, b2, w3, b3, w4, b4 = params
    B = x.shape[0]
    x_flat = x.reshape(B, -1)                 # row-major, like torch reshape
    K = x_flat.shape[1]
    H1 = w1.shape[1]
    D2, D3, OUT = w2.shape[1], w3.shape[1], w4.shape[1]
    assert w1.shape[0] == K

    wdtype = w1.dtype
    wbytes = jnp.dtype(wdtype).itemsize
    vmem_cap = _vmem_capacity_bytes()
    tn, tk, x_resident = _plan_tiles(B, K, H1, wbytes, vmem_cap)
    nh, nk = H1 // tn, K // tk

    if x_resident:
        xkw = {"pipeline_mode": pl.Buffered(1)} if single_buffer_x else {}
        x_spec = pl.BlockSpec((B, K), lambda h, k: (0, 0), **xkw)
        x_vmem = B * K * 4 * (1 if single_buffer_x else 2)
    else:
        x_spec = pl.BlockSpec((B, tk), lambda h, k: (0, k))
        x_vmem = 2 * B * tk * 4

    Bp = max(B, 8)
    vmem_needed = (x_vmem
                   + 2 * tk * tn * wbytes       # streamed w1 tiles
                   + 2 * 8 * tn * 4             # b1 tile (sublane padded)
                   + Bp * tn * 4                # f32 accumulator scratch
                   + 2 * Bp * tn * wbytes)      # h1 output blocks
    vmem_limit = int(min(vmem_cap, max(32 << 20, vmem_needed + (8 << 20))))

    fc1_cost = pl.CostEstimate(
        flops=2 * B * K * H1, transcendentals=0,
        bytes_accessed=(K * H1 * wbytes + B * K * 4 + H1 * 4 + B * H1 * wbytes))

    h1 = pl.pallas_call(
        functools.partial(_fc1_kernel, tk=tk, x_resident=x_resident),
        out_shape=jax.ShapeDtypeStruct((B, H1), wdtype),
        grid_spec=pl.GridSpec(
            grid=(nh, nk),
            in_specs=[
                x_spec,                                        # x
                pl.BlockSpec((tk, tn), lambda h, k: (k, h)),   # w1: streamed
                pl.BlockSpec((1, tn), lambda h, k: (0, h)),    # b1
            ],
            out_specs=pl.BlockSpec((B, tn), lambda h, k: (0, h)),
            scratch_shapes=[pltpu.VMEM((B, tn), jnp.float32)],
        ),
        compiler_params=pltpu.CompilerParams(
            dimension_semantics=("parallel", "arbitrary"),
            vmem_limit_bytes=vmem_limit),
        cost_estimate=fc1_cost,
    )(x_flat, w1, b1)

    tail_cost = pl.CostEstimate(
        flops=2 * B * (H1 * D2 + D2 * D3 + D3 * OUT), transcendentals=0,
        bytes_accessed=(B * H1 * wbytes
                        + (w2.size + w3.size + w4.size) * wbytes
                        + (b2.size + b3.size + b4.size) * 4
                        + B * OUT * 4))

    out = pl.pallas_call(
        _tail_kernel,
        out_shape=jax.ShapeDtypeStruct((B, OUT), jnp.float32),
        grid_spec=pl.GridSpec(
            grid=(1,),
            in_specs=[pl.BlockSpec(s, lambda i: (0, 0)) for s in
                      ((B, H1), w2.shape, b2.shape, w3.shape, b3.shape,
                       w4.shape, b4.shape)],
            out_specs=pl.BlockSpec((B, OUT), lambda i: (0, 0)),
        ),
        compiler_params=pltpu.CompilerParams(
            dimension_semantics=("arbitrary",)),
        cost_estimate=tail_cost,
    )(h1, w2, b2, w3, b3, w4, b4)
    return out


# ---------------------------------------------------------------------------
# Parameter utilities and pure-JAX reference.
# ---------------------------------------------------------------------------
def init_params(key, dims):
    """torch.nn.Linear-style init (U[-1/sqrt(fan_in), 1/sqrt(fan_in)]).
    Weights stored (in, out); biases stored (1, out); all float32."""
    params = []
    for i in range(len(dims) - 1):
        fan_in, fan_out = dims[i], dims[i + 1]
        key, kw, kb = jax.random.split(key, 3)
        bound = 1.0 / (fan_in ** 0.5)
        w = jax.random.uniform(kw, (fan_in, fan_out), jnp.float32, -bound, bound)
        b = jax.random.uniform(kb, (1, fan_out), jnp.float32, -bound, bound)
        params += [w, b]
    return tuple(params)


def prepare_params(params, weight_dtype=jnp.bfloat16):
    """ONE-TIME conversion at load time: weights -> narrow streaming dtype,
    biases stay f32. Done outside the jitted forward (perf feedback #1)."""
    w1, b1, w2, b2, w3, b3, w4, b4 = params
    return (w1.astype(weight_dtype), b1, w2.astype(weight_dtype), b2,
            w3.astype(weight_dtype), b3, w4.astype(weight_dtype), b4)


def reference_forward(x, params):
    """Pure-JAX reference with the same narrow-weights / f32-accumulate numerics."""
    w1, b1, w2, b2, w3, b3, w4, b4 = params
    cdt = w1.dtype
    h = x.reshape(x.shape[0], -1).astype(cdt)
    h = jnp.maximum(jnp.dot(h, w1, preferred_element_type=jnp.float32) + b1, 0.0)
    h = jnp.maximum(jnp.dot(h.astype(cdt), w2,
                            preferred_element_type=jnp.float32) + b2, 0.0)
    h = jnp.maximum(jnp.dot(h.astype(cdt), w3,
                            preferred_element_type=jnp.float32) + b3, 0.0)
    return jnp.dot(h.astype(cdt), w4,
                   preferred_element_type=jnp.float32) + b4


if __name__ == "__main__":
    # Small, structure-preserving shapes: (B, C, H, W) = (2, 8, 16, 32)
    B, C, H, W = 2, 8, 16, 32
    K = C * H * W                     # 4096 (stands in for 8*128*256)
    dims = (K, 256, 128, 64, 6)       # stands in for (262144, 2048, 256, 64, 6)

    key = jax.random.PRNGKey(0)
    kx, kp = jax.random.split(key)
    x = jax.random.normal(kx, (B, C, H, W), jnp.float32)
    params = prepare_params(init_params(kp, dims))   # weights -> bf16, once

    try:
        out = jax.block_until_ready(simple_model_forward(x, params))
    except Exception:
        # Fallback: installed JAX rejects pl.Buffered(1) on the resident x
        # block -> rerun with default double buffering (correctness identical).
        out = jax.block_until_ready(
            simple_model_forward(x, params, single_buffer_x=False))

    ref = reference_forward(x, params)
    assert out.shape == (B, dims[-1])
    assert jnp.allclose(out, ref, atol=2e-3, rtol=2e-3), \
        float(jnp.max(jnp.abs(out - ref)))

    print("KERNEL_OK")
</pallas_src>

<mosaic_0001>
module attributes {stable_mosaic.version = 11 : i64} {
  func.func @_fc1_kernel(%arg0: i32, %arg1: i32, %arg2: memref<2x4096xf32, #tpu.memory_space<vmem>>, %arg3: memref<4096x128xbf16, #tpu.memory_space<vmem>>, %arg4: memref<1x128xf32, #tpu.memory_space<vmem>>, %arg5: memref<2x128xbf16, #tpu.memory_space<vmem>>, %arg6: memref<2x128xf32, #tpu.memory_space<vmem>>) attributes {dimension_semantics = [#tpu.dimension_semantics<parallel>, #tpu.dimension_semantics<arbitrary>], iteration_bounds = array<i64: 2, 1>, scalar_prefetch = 0 : i64, scratch_operands = 1 : i64, tpu.core_type = #tpu.core_type<tc>, window_params = [{pipeline_mode = #tpu.pipeline_mode<synchronous>, transform_indices = @transform_0, window_bounds = array<i64: 2, 4096>}, {transform_indices = @transform_1, window_bounds = array<i64: 4096, 128>}, {transform_indices = @transform_2, window_bounds = array<i64: 1, 128>}, {transform_indices = @transform_3, window_bounds = array<i64: 2, 128>}]} {
    %c0_i32 = arith.constant 0 : i32
    %0 = arith.cmpi eq, %arg1, %c0_i32 : i32
    %1 = arith.extui %0 : i1 to i32
    %c0_i32_0 = arith.constant 0 : i32
    %2 = arith.cmpi ne, %1, %c0_i32_0 : i32
    scf.if %2 {
      %cst_9 = arith.constant 0.000000e+00 : f32
      %16 = vector.broadcast %cst_9 : f32 to vector<2x128xf32>
      %c0_10 = arith.constant 0 : index
      %c0_11 = arith.constant 0 : index
      %17 = vector.load %arg6[%c0_10, %c0_11] : memref<2x128xf32, #tpu.memory_space<vmem>>, vector<2x128xf32>
      tpu.vector_store %arg6[%c0_10, %c0_11], %16 {strides = array<i32>} : memref<2x128xf32, #tpu.memory_space<vmem>>, vector<2x128xf32>,
    } else {
    }
    %c4096_i32 = arith.constant 4096 : i32
    %3 = arith.muli %arg1, %c4096_i32 : i32
    %4 = tpu.assume_multiple %3, 4096 : i32
    %c0 = arith.constant 0 : index
    %5 = arith.index_cast %4 : i32 to index
    %6 = vector.load %arg2[%c0, %5] : memref<2x4096xf32, #tpu.memory_space<vmem>>, vector<2x4096xf32>
    %c0_1 = arith.constant 0 : index
    %c0_2 = arith.constant 0 : index
    %7 = vector.load %arg6[%c0_1, %c0_2] : memref<2x128xf32, #tpu.memory_space<vmem>>, vector<2x128xf32>
    %8 = arith.truncf %6 : vector<2x4096xf32> to vector<2x4096xbf16>
    %c0_3 = arith.constant 0 : index
    %c0_4 = arith.constant 0 : index
    %9 = vector.load %arg3[%c0_3, %c0_4] : memref<4096x128xbf16, #tpu.memory_space<vmem>>, vector<4096x128xbf16>
    %cst = arith.constant dense<0.000000e+00> : vector<2x128xf32>
    %10 = tpu.matmul %8, %9, %cst {dimension_numbers = #tpu.dot_dimension_numbers<[1], [0], [0], [1], [0, 0, 1, 1], [], []>} : vector<2x4096xbf16>, vector<4096x128xbf16>, vector<2x128xf32> -> vector<2x128xf32>
    %11 = arith.addf %7, %10 : vector<2x128xf32>
    %c0_5 = arith.constant 0 : index
    %c0_6 = arith.constant 0 : index
    %12 = vector.load %arg6[%c0_5, %c0_6] : memref<2x128xf32, #tpu.memory_space<vmem>>, vector<2x128xf32>
    tpu.vector_store %arg6[%c0_5, %c0_6], %11 {strides = array<i32>} : memref<2x128xf32, #tpu.memory_space<vmem>>, vector<2x128xf32>,
    %c0_i32_7 = arith.constant 0 : i32
    %13 = arith.cmpi eq, %arg1, %c0_i32_7 : i32
    %14 = arith.extui %13 : i1 to i32
    %c0_i32_8 = arith.constant 0 : i32
    %15 = arith.cmpi ne, %14, %c0_i32_8 : i32
    scf.if %15 {
      %c0_9 = arith.constant 0 : index
      %c0_10 = arith.constant 0 : index
      %16 = vector.load %arg6[%c0_9, %c0_10] : memref<2x128xf32, #tpu.memory_space<vmem>>, vector<2x128xf32>
      %c0_11 = arith.constant 0 : index
      %c0_12 = arith.constant 0 : index
      %17 = vector.load %arg4[%c0_11, %c0_12] : memref<1x128xf32, #tpu.memory_space<vmem>>, vector<1x128xf32>
      %18 = vector.broadcast %17 : vector<1x128xf32> to vector<2x128xf32>
      %19 = arith.addf %16, %18 : vector<2x128xf32>
      %cst_13 = arith.constant 0.000000e+00 : f32
      %20 = vector.broadcast %cst_13 : f32 to vector<2x128xf32>
      %21 = arith.maximumf %19, %20 : vector<2x128xf32>
      %22 = arith.truncf %21 : vector<2x128xf32> to vector<2x128xbf16>
      %c0_14 = arith.constant 0 : index
      %c0_15 = arith.constant 0 : index
      %23 = vector.load %arg5[%c0_14, %c0_15] : memref<2x128xbf16, #tpu.memory_space<vmem>>, vector<2x128xbf16>
      tpu.vector_store %arg5[%c0_14, %c0_15], %22 {strides = array<i32>} : memref<2x128xbf16, #tpu.memory_space<vmem>>, vector<2x128xbf16>,
    } else {
    }
    return
  }
  func.func @transform_0(%arg0: i32, %arg1: i32) -> (i32, i32) {
    %c0_i32 = arith.constant 0 : i32
    %c0_i32_0 = arith.constant 0 : i32
    %c0_i32_1 = arith.constant 0 : i32
    return %c0_i32, %c0_i32_0 : i32, i32
  }
  func.func @transform_1(%arg0: i32, %arg1: i32) -> (i32, i32) {
    %c0_i32 = arith.constant 0 : i32
    return %arg1, %arg0 : i32, i32
  }
  func.func @transform_2(%arg0: i32, %arg1: i32) -> (i32, i32) {
    %c0_i32 = arith.constant 0 : i32
    %c0_i32_0 = arith.constant 0 : i32
    return %c0_i32, %arg0 : i32, i32
  }
  func.func @transform_3(%arg0: i32, %arg1: i32) -> (i32, i32) {
    %c0_i32 = arith.constant 0 : i32
    %c0_i32_0 = arith.constant 0 : i32
    return %c0_i32, %arg0 : i32, i32
  }
}

module attributes {stable_mosaic.version = 11 : i64} {
  func.func @_tail_kernel(%arg0: i32, %arg1: memref<2x256xbf16, #tpu.memory_space<vmem>>, %arg2: memref<256x128xbf16, #tpu.memory_space<vmem>>, %arg3: memref<1x128xf32, #tpu.memory_space<vmem>>, %arg4: memref<128x64xbf16, #tpu.memory_space<vmem>>, %arg5: memref<1x64xf32, #tpu.memory_space<vmem>>, %arg6: memref<64x6xbf16, #tpu.memory_space<vmem>>, %arg7: memref<1x6xf32, #tpu.memory_space<vmem>>, %arg8: memref<2x6xf32, #tpu.memory_space<vmem>>) attributes {dimension_semantics = [#tpu.dimension_semantics<arbitrary>], iteration_bounds = array<i64: 1>, scalar_prefetch = 0 : i64, scratch_operands = 0 : i64, tpu.core_type = #tpu.core_type<tc>, window_params = [{pipeline_mode = #tpu.pipeline_mode<synchronous>, transform_indices = @transform_0, window_bounds = array<i64: 2, 256>}, {pipeline_mode = #tpu.pipeline_mode<synchronous>, transform_indices = @transform_1, window_bounds = array<i64: 256, 128>}, {pipeline_mode = #tpu.pipeline_mode<synchronous>, transform_indices = @transform_2, window_bounds = array<i64: 1, 128>}, {pipeline_mode = #tpu.pipeline_mode<synchronous>, transform_indices = @transform_3, window_bounds = array<i64: 128, 64>}, {pipeline_mode = #tpu.pipeline_mode<synchronous>, transform_indices = @transform_4, window_bounds = array<i64: 1, 64>}, {pipeline_mode = #tpu.pipeline_mode<synchronous>, transform_indices = @transform_5, window_bounds = array<i64: 64, 6>}, {pipeline_mode = #tpu.pipeline_mode<synchronous>, transform_indices = @transform_6, window_bounds = array<i64: 1, 6>}, {pipeline_mode = #tpu.pipeline_mode<synchronous>, transform_indices = @transform_7, window_bounds = array<i64: 2, 6>}]} {
    %c0 = arith.constant 0 : index
    %c0_0 = arith.constant 0 : index
    %0 = vector.load %arg1[%c0, %c0_0] : memref<2x256xbf16, #tpu.memory_space<vmem>>, vector<2x256xbf16>
    %c0_1 = arith.constant 0 : index
    %c0_2 = arith.constant 0 : index
    %1 = vector.load %arg2[%c0_1, %c0_2] : memref<256x128xbf16, #tpu.memory_space<vmem>>, vector<256x128xbf16>
    %cst = arith.constant dense<0.000000e+00> : vector<2x128xf32>
    %2 = tpu.matmul %0, %1, %cst {dimension_numbers = #tpu.dot_dimension_numbers<[1], [0], [0], [1], [0, 0, 1, 1], [], []>} : vector<2x256xbf16>, vector<256x128xbf16>, vector<2x128xf32> -> vector<2x128xf32>
    %c0_3 = arith.constant 0 : index
    %c0_4 = arith.constant 0 : index
    %3 = vector.load %arg3[%c0_3, %c0_4] : memref<1x128xf32, #tpu.memory_space<vmem>>, vector<1x128xf32>
    %4 = vector.broadcast %3 : vector<1x128xf32> to vector<2x128xf32>
    %5 = arith.addf %2, %4 : vector<2x128xf32>
    %cst_5 = arith.constant 0.000000e+00 : f32
    %6 = vector.broadcast %cst_5 : f32 to vector<2x128xf32>
    %7 = arith.maximumf %5, %6 : vector<2x128xf32>
    %8 = arith.truncf %7 : vector<2x128xf32> to vector<2x128xbf16>
    %c0_6 = arith.constant 0 : index
    %c0_7 = arith.constant 0 : index
    %9 = vector.load %arg4[%c0_6, %c0_7] : memref<128x64xbf16, #tpu.memory_space<vmem>>, vector<128x64xbf16>
    %cst_8 = arith.constant dense<0.000000e+00> : vector<2x64xf32>
    %10 = tpu.matmul %8, %9, %cst_8 {dimension_numbers = #tpu.dot_dimension_numbers<[1], [0], [0], [1], [0, 0, 1, 1], [], []>} : vector<2x128xbf16>, vector<128x64xbf16>, vector<2x64xf32> -> vector<2x64xf32>
    %c0_9 = arith.constant 0 : index
    %c0_10 = arith.constant 0 : index
    %11 = vector.load %arg5[%c0_9, %c0_10] : memref<1x64xf32, #tpu.memory_space<vmem>>, vector<1x64xf32>
    %12 = vector.broadcast %11 : vector<1x64xf32> to vector<2x64xf32>
    %13 = arith.addf %10, %12 : vector<2x64xf32>
    %cst_11 = arith.constant 0.000000e+00 : f32
    %14 = vector.broadcast %cst_11 : f32 to vector<2x64xf32>
    %15 = arith.maximumf %13, %14 : vector<2x64xf32>
    %16 = arith.truncf %15 : vector<2x64xf32> to vector<2x64xbf16>
    %c0_12 = arith.constant 0 : index
    %c0_13 = arith.constant 0 : index
    %17 = vector.load %arg6[%c0_12, %c0_13] : memref<64x6xbf16, #tpu.memory_space<vmem>>, vector<64x6xbf16>
    %cst_14 = arith.constant dense<0.000000e+00> : vector<2x6xf32>
    %18 = tpu.matmul %16, %17, %cst_14 {dimension_numbers = #tpu.dot_dimension_numbers<[1], [0], [0], [1], [0, 0, 1, 1], [], []>} : vector<2x64xbf16>, vector<64x6xbf16>, vector<2x6xf32> -> vector<2x6xf32>
    %c0_15 = arith.constant 0 : index
    %c0_16 = arith.constant 0 : index
    %19 = vector.load %arg7[%c0_15, %c0_16] : memref<1x6xf32, #tpu.memory_space<vmem>>, vector<1x6xf32>
    %20 = vector.broadcast %19 : vector<1x6xf32> to vector<2x6xf32>
    %21 = arith.addf %18, %20 : vector<2x6xf32>
    %c0_17 = arith.constant 0 : index
    %c0_18 = arith.constant 0 : index
    %22 = vector.load %arg8[%c0_17, %c0_18] : memref<2x6xf32, #tpu.memory_space<vmem>>, vector<2x6xf32>
    tpu.vector_store %arg8[%c0_17, %c0_18], %21 {strides = array<i32>} : memref<2x6xf32, #tpu.memory_space<vmem>>, vector<2x6xf32>,
    return
  }
  func.func @transform_0(%arg0: i32) -> (i32, i32) {
    %c0_i32 = arith.constant 0 : i32
    %c0_i32_0 = arith.constant 0 : i32
    %c0_i32_1 = arith.constant 0 : i32
    return %c0_i32, %c0_i32_0 : i32, i32
  }
  func.func @transform_1(%arg0: i32) -> (i32, i32) {
    %c0_i32 = arith.constant 0 : i32
    %c0_i32_0 = arith.constant 0 : i32
    %c0_i32_1 = arith.constant 0 : i32
    return %c0_i32, %c0_i32_0 : i32, i32
  }
  func.func @transform_2(%arg0: i32) -> (i32, i32) {
    %c0_i32 = arith.constant 0 : i32
    %c0_i32_0 = arith.constant 0 : i32
    %c0_i32_1 = arith.constant 0 : i32
    return %c0_i32, %c0_i32_0 : i32, i32
  }
  func.func @transform_3(%arg0: i32) -> (i32, i32) {
    %c0_i32 = arith.constant 0 : i32
    %c0_i32_0 = arith.constant 0 : i32
    %c0_i32_1 = arith.constant 0 : i32
    return %c0_i32, %c0_i32_0 : i32, i32
  }
  func.func @transform_4(%arg0: i32) -> (i32, i32) {
    %c0_i32 = arith.constant 0 : i32
    %c0_i32_0 = arith.constant 0 : i32
    %c0_i32_1 = arith.constant 0 : i32
    return %c0_i32, %c0_i32_0 : i32, i32
  }
  func.func @transform_5(%arg0: i32) -> (i32, i32) {
    %c0_i32 = arith.constant 0 : i32
    %c0_i32_0 = arith.constant 0 : i32
    %c0_i32_1 = arith.constant 0 : i32
    return %c0_i32, %c0_i32_0 : i32, i32
  }
  func.func @transform_6(%arg0: i32) -> (i32, i32) {
    %c0_i32 = arith.constant 0 : i32
    %c0_i32_0 = arith.constant 0 : i32
    %c0_i32_1 = arith.constant 0 : i32
    return %c0_i32, %c0_i32_0 : i32, i32
  }
  func.func @transform_7(%arg0: i32) -> (i32, i32) {
    %c0_i32 = arith.constant 0 : i32
    %c0_i32_0 = arith.constant 0 : i32
    %c0_i32_1 = arith.constant 0 : i32
    return %c0_i32, %c0_i32_0 : i32, i32
  }
}

module attributes {stable_mosaic.version = 11 : i64} {
  func.func @_tail_kernel(%arg0: i32, %arg1: memref<2x256xbf16, #tpu.memory_space<vmem>>, %arg2: memref<256x128xbf16, #tpu.memory_space<vmem>>, %arg3: memref<1x128xf32, #tpu.memory_space<vmem>>, %arg4: memref<128x64xbf16, #tpu.memory_space<vmem>>, %arg5: memref<1x64xf32, #tpu.memory_space<vmem>>, %arg6: memref<64x6xbf16, #tpu.memory_space<vmem>>, %arg7: memref<1x6xf32, #tpu.memory_space<vmem>>, %arg8: memref<2x6xf32, #tpu.memory_space<vmem>>) attributes {dimension_semantics = [#tpu.dimension_semantics<arbitrary>], iteration_bounds = array<i64: 1>, scalar_prefetch = 0 : i64, scratch_operands = 0 : i64, tpu.core_type = #tpu.core_type<tc>, window_params = [{pipeline_mode = #tpu.pipeline_mode<synchronous>, transform_indices = @transform_0, window_bounds = array<i64: 2, 256>}, {pipeline_mode = #tpu.pipeline_mode<synchronous>, transform_indices = @transform_1, window_bounds = array<i64: 256, 128>}, {pipeline_mode = #tpu.pipeline_mode<synchronous>, transform_indices = @transform_2, window_bounds = array<i64: 1, 128>}, {pipeline_mode = #tpu.pipeline_mode<synchronous>, transform_indices = @transform_3, window_bounds = array<i64: 128, 64>}, {pipeline_mode = #tpu.pipeline_mode<synchronous>, transform_indices = @transform_4, window_bounds = array<i64: 1, 64>}, {pipeline_mode = #tpu.pipeline_mode<synchronous>, transform_indices = @transform_5, window_bounds = array<i64: 64, 6>}, {pipeline_mode = #tpu.pipeline_mode<synchronous>, transform_indices = @transform_6, window_bounds = array<i64: 1, 6>}, {pipeline_mode = #tpu.pipeline_mode<synchronous>, transform_indices = @transform_7, window_bounds = array<i64: 2, 6>}]} {
    %c0 = arith.constant 0 : index
    %c0_0 = arith.constant 0 : index
    %0 = vector.load %arg1[%c0, %c0_0] : memref<2x256xbf16, #tpu.memory_space<vmem>>, vector<2x256xbf16>
    %c0_1 = arith.constant 0 : index
    %c0_2 = arith.constant 0 : index
    %1 = vector.load %arg2[%c0_1, %c0_2] : memref<256x128xbf16, #tpu.memory_space<vmem>>, vector<256x128xbf16>
    %cst = arith.constant dense<0.000000e+00> : vector<2x128xf32>
    %2 = tpu.matmul %0, %1, %cst {dimension_numbers = #tpu.dot_dimension_numbers<[1], [0], [0], [1], [0, 0, 1, 1], [], []>} : vector<2x256xbf16>, vector<256x128xbf16>, vector<2x128xf32> -> vector<2x128xf32>
    %c0_3 = arith.constant 0 : index
    %c0_4 = arith.constant 0 : index
    %3 = vector.load %arg3[%c0_3, %c0_4] : memref<1x128xf32, #tpu.memory_space<vmem>>, vector<1x128xf32>
    %4 = vector.broadcast %3 : vector<1x128xf32> to vector<2x128xf32>
    %5 = arith.addf %2, %4 : vector<2x128xf32>
    %cst_5 = arith.constant 0.000000e+00 : f32
    %6 = vector.broadcast %cst_5 : f32 to vector<2x128xf32>
    %7 = arith.maximumf %5, %6 : vector<2x128xf32>
    %8 = arith.truncf %7 : vector<2x128xf32> to vector<2x128xbf16>
    %c0_6 = arith.constant 0 : index
    %c0_7 = arith.constant 0 : index
    %9 = vector.load %arg4[%c0_6, %c0_7] : memref<128x64xbf16, #tpu.memory_space<vmem>>, vector<128x64xbf16>
    %cst_8 = arith.constant dense<0.000000e+00> : vector<2x64xf32>
    %10 = tpu.matmul %8, %9, %cst_8 {dimension_numbers = #tpu.dot_dimension_numbers<[1], [0], [0], [1], [0, 0, 1, 1], [], []>} : vector<2x128xbf16>, vector<128x64xbf16>, vector<2x64xf32> -> vector<2x64xf32>
    %c0_9 = arith.constant 0 : index
    %c0_10 = arith.constant 0 : index
    %11 = vector.load %arg5[%c0_9, %c0_10] : memref<1x64xf32, #tpu.memory_space<vmem>>, vector<1x64xf32>
    %12 = vector.broadcast %11 : vector<1x64xf32> to vector<2x64xf32>
    %13 = arith.addf %10, %12 : vector<2x64xf32>
    %cst_11 = arith.constant 0.000000e+00 : f32
    %14 = vector.broadcast %cst_11 : f32 to vector<2x64xf32>
    %15 = arith.maximumf %13, %14 : vector<2x64xf32>
    %16 = arith.truncf %15 : vector<2x64xf32> to vector<2x64xbf16>
    %c0_12 = arith.constant 0 : index
    %c0_13 = arith.constant 0 : index
    %17 = vector.load %arg6[%c0_12, %c0_13] : memref<64x6xbf16, #tpu.memory_space<vmem>>, vector<64x6xbf16>
    %cst_14 = arith.constant dense<0.000000e+00> : vector<2x6xf32>
    %18 = tpu.matmul %16, %17, %cst_14 {dimension_numbers = #tpu.dot_dimension_numbers<[1], [0], [0], [1], [0, 0, 1, 1], [], []>} : vector<2x64xbf16>, vector<64x6xbf16>, vector<2x6xf32> -> vector<2x6xf32>
    %c0_15 = arith.constant 0 : index
    %c0_16 = arith.constant 0 : index
    %19 = vector.load %arg7[%c0_15, %c0_16] : memref<1x6xf32, #tpu.memory_space<vmem>>, vector<1x6xf32>
    %20 = vector.broadcast %19 : vector<1x6xf32> to vector<2x6xf32>
    %21 = arith.addf %18, %20 : vector<2x6xf32>
    %c0_17 = arith.constant 0 : index
    %c0_18 = arith.constant 0 : index
    %22 = vector.load %arg8[%c0_17, %c0_18] : memref<2x6xf32, #tpu.memory_space<vmem>>, vector<2x6xf32>
    tpu.vector_store %arg8[%c0_17, %c0_18], %21 {strides = array<i32>} : memref<2x6xf32, #tpu.memory_space<vmem>>, vector<2x6xf32>,
    return
  }
  func.func @transform_0(%arg0: i32) -> (i32, i32) {
    %c0_i32 = arith.constant 0 : i32
    %c0_i32_0 = arith.constant 0 : i32
    %c0_i32_1 = arith.constant 0 : i32
    return %c0_i32, %c0_i32_0 : i32, i32
  }
  func.func @transform_1(%arg0: i32) -> (i32, i32) {
    %c0_i32 = arith.constant 0 : i32
    %c0_i32_0 = arith.constant 0 : i32
    %c0_i32_1 = arith.constant 0 : i32
    return %c0_i32, %c0_i32_0 : i32, i32
  }
  func.func @transform_2(%arg0: i32) -> (i32, i32) {
    %c0_i32 = arith.constant 0 : i32
    %c0_i32_0 = arith.constant 0 : i32
    %c0_i32_1 = arith.constant 0 : i32
    return %c0_i32, %c0_i32_0 : i32, i32
  }
  func.func @transform_3(%arg0: i32) -> (i32, i32) {
    %c0_i32 = arith.constant 0 : i32
    %c0_i32_0 = arith.constant 0 : i32
    %c0_i32_1 = arith.constant 0 : i32
    return %c0_i32, %c0_i32_0 : i32, i32
  }
  func.func @transform_4(%arg0: i32) -> (i32, i32) {
    %c0_i32 = arith.constant 0 : i32
    %c0_i32_0 = arith.constant 0 : i32
    %c0_i32_1 = arith.constant 0 : i32
    return %c0_i32, %c0_i32_0 : i32, i32
  }
  func.func @transform_5(%arg0: i32) -> (i32, i32) {
    %c0_i32 = arith.constant 0 : i32
    %c0_i32_0 = arith.constant 0 : i32
    %c0_i32_1 = arith.constant 0 : i32
    return %c0_i32, %c0_i32_0 : i32, i32
  }
  func.func @transform_6(%arg0: i32) -> (i32, i32) {
    %c0_i32 = arith.constant 0 : i32
    %c0_i32_0 = arith.constant 0 : i32
    %c0_i32_1 = arith.constant 0 : i32
    return %c0_i32, %c0_i32_0 : i32, i32
  }
  func.func @transform_7(%arg0: i32) -> (i32, i32) {
    %c0_i32 = arith.constant 0 : i32
    %c0_i32_0 = arith.constant 0 : i32
    %c0_i32_1 = arith.constant 0 : i32
    return %c0_i32, %c0_i32_0 : i32, i32
  }
}

module attributes {stable_mosaic.version = 11 : i64} {
  func.func @_fc1_kernel(%arg0: i32, %arg1: i32, %arg2: memref<2x4096xf32, #tpu.memory_space<vmem>>, %arg3: memref<4096x128xbf16, #tpu.memory_space<vmem>>, %arg4: memref<1x128xf32, #tpu.memory_space<vmem>>, %arg5: memref<2x128xbf16, #tpu.memory_space<vmem>>, %arg6: memref<2x128xf32, #tpu.memory_space<vmem>>) attributes {dimension_semantics = [#tpu.dimension_semantics<parallel>, #tpu.dimension_semantics<arbitrary>], iteration_bounds = array<i64: 2, 1>, scalar_prefetch = 0 : i64, scratch_operands = 1 : i64, tpu.core_type = #tpu.core_type<tc>, window_params = [{pipeline_mode = #tpu.pipeline_mode<synchronous>, transform_indices = @transform_0, window_bounds = array<i64: 2, 4096>}, {transform_indices = @transform_1, window_bounds = array<i64: 4096, 128>}, {transform_indices = @transform_2, window_bounds = array<i64: 1, 128>}, {transform_indices = @transform_3, window_bounds = array<i64: 2, 128>}]} {
    %c0_i32 = arith.constant 0 : i32
    %0 = arith.cmpi eq, %arg1, %c0_i32 : i32
    %1 = arith.extui %0 : i1 to i32
    %c0_i32_0 = arith.constant 0 : i32
    %2 = arith.cmpi ne, %1, %c0_i32_0 : i32
    scf.if %2 {
      %cst_9 = arith.constant 0.000000e+00 : f32
      %16 = vector.broadcast %cst_9 : f32 to vector<2x128xf32>
      %c0_10 = arith.constant 0 : index
      %c0_11 = arith.constant 0 : index
      %17 = vector.load %arg6[%c0_10, %c0_11] : memref<2x128xf32, #tpu.memory_space<vmem>>, vector<2x128xf32>
      tpu.vector_store %arg6[%c0_10, %c0_11], %16 {strides = array<i32>} : memref<2x128xf32, #tpu.memory_space<vmem>>, vector<2x128xf32>,
    } else {
    }
    %c4096_i32 = arith.constant 4096 : i32
    %3 = arith.muli %arg1, %c4096_i32 : i32
    %4 = tpu.assume_multiple %3, 4096 : i32
    %c0 = arith.constant 0 : index
    %5 = arith.index_cast %4 : i32 to index
    %6 = vector.load %arg2[%c0, %5] : memref<2x4096xf32, #tpu.memory_space<vmem>>, vector<2x4096xf32>
    %c0_1 = arith.constant 0 : index
    %c0_2 = arith.constant 0 : index
    %7 = vector.load %arg6[%c0_1, %c0_2] : memref<2x128xf32, #tpu.memory_space<vmem>>, vector<2x128xf32>
    %8 = arith.truncf %6 : vector<2x4096xf32> to vector<2x4096xbf16>
    %c0_3 = arith.constant 0 : index
    %c0_4 = arith.constant 0 : index
    %9 = vector.load %arg3[%c0_3, %c0_4] : memref<4096x128xbf16, #tpu.memory_space<vmem>>, vector<4096x128xbf16>
    %cst = arith.constant dense<0.000000e+00> : vector<2x128xf32>
    %10 = tpu.matmul %8, %9, %cst {dimension_numbers = #tpu.dot_dimension_numbers<[1], [0], [0], [1], [0, 0, 1, 1], [], []>} : vector<2x4096xbf16>, vector<4096x128xbf16>, vector<2x128xf32> -> vector<2x128xf32>
    %11 = arith.addf %7, %10 : vector<2x128xf32>
    %c0_5 = arith.constant 0 : index
    %c0_6 = arith.constant 0 : index
    %12 = vector.load %arg6[%c0_5, %c0_6] : memref<2x128xf32, #tpu.memory_space<vmem>>, vector<2x128xf32>
    tpu.vector_store %arg6[%c0_5, %c0_6], %11 {strides = array<i32>} : memref<2x128xf32, #tpu.memory_space<vmem>>, vector<2x128xf32>,
    %c0_i32_7 = arith.constant 0 : i32
    %13 = arith.cmpi eq, %arg1, %c0_i32_7 : i32
    %14 = arith.extui %13 : i1 to i32
    %c0_i32_8 = arith.constant 0 : i32
    %15 = arith.cmpi ne, %14, %c0_i32_8 : i32
    scf.if %15 {
      %c0_9 = arith.constant 0 : index
      %c0_10 = arith.constant 0 : index
      %16 = vector.load %arg6[%c0_9, %c0_10] : memref<2x128xf32, #tpu.memory_space<vmem>>, vector<2x128xf32>
      %c0_11 = arith.constant 0 : index
      %c0_12 = arith.constant 0 : index
      %17 = vector.load %arg4[%c0_11, %c0_12] : memref<1x128xf32, #tpu.memory_space<vmem>>, vector<1x128xf32>
      %18 = vector.broadcast %17 : vector<1x128xf32> to vector<2x128xf32>
      %19 = arith.addf %16, %18 : vector<2x128xf32>
      %cst_13 = arith.constant 0.000000e+00 : f32
      %20 = vector.broadcast %cst_13 : f32 to vector<2x128xf32>
      %21 = arith.maximumf %19, %20 : vector<2x128xf32>
      %22 = arith.truncf %21 : vector<2x128xf32> to vector<2x128xbf16>
      %c0_14 = arith.constant 0 : index
      %c0_15 = arith.constant 0 : index
      %23 = vector.load %arg5[%c0_14, %c0_15] : memref<2x128xbf16, #tpu.memory_space<vmem>>, vector<2x128xbf16>
      tpu.vector_store %arg5[%c0_14, %c0_15], %22 {strides = array<i32>} : memref<2x128xbf16, #tpu.memory_space<vmem>>, vector<2x128xbf16>,
    } else {
    }
    return
  }
  func.func @transform_0(%arg0: i32, %arg1: i32) -> (i32, i32) {
    %c0_i32 = arith.constant 0 : i32
    %c0_i32_0 = arith.constant 0 : i32
    %c0_i32_1 = arith.constant 0 : i32
    return %c0_i32, %c0_i32_0 : i32, i32
  }
  func.func @transform_1(%arg0: i32, %arg1: i32) -> (i32, i32) {
    %c0_i32 = arith.constant 0 : i32
    return %arg1, %arg0 : i32, i32
  }
  func.func @transform_2(%arg0: i32, %arg1: i32) -> (i32, i32) {
    %c0_i32 = arith.constant 0 : i32
    %c0_i32_0 = arith.constant 0 : i32
    return %c0_i32, %arg0 : i32, i32
  }
  func.func @transform_3(%arg0: i32, %arg1: i32) -> (i32, i32) {
    %c0_i32 = arith.constant 0 : i32
    %c0_i32_0 = arith.constant 0 : i32
    return %c0_i32, %arg0 : i32, i32
  }
}

</mosaic_0001>

<llo_original>
// kernel: simple_model_forward.3
$region0: #{simple_model_forward.3}
  #allocation0 [shape = 'u32[]', space=smem, size = 0x4, offset = 0x4, fixed_abs, tag = 'smem constant byte address 0x4 - core index']
  #allocation1 [shape = 'u32[144,128]{1,0:T(1,128)}', space=vmem, size = 0x12000, scoped, tag = 'internal scratch']
  %s0 = inlined_call_operand.vmem [shape: bf16[2,256], index: 0, kind: input, shape index: {}]
  %s1 = inlined_call_operand.vmem [shape: bf16[256,128], index: 1, kind: input, shape index: {}]
  %s2 = inlined_call_operand.vmem [shape: f32[1,128], index: 2, kind: input, shape index: {}]
  %s3 = inlined_call_operand.vmem [shape: bf16[128,64], index: 3, kind: input, shape index: {}]
  %s4 = inlined_call_operand.vmem [shape: f32[1,64], index: 4, kind: input, shape index: {}]
  %s5 = inlined_call_operand.vmem [shape: bf16[64,6], index: 5, kind: input, shape index: {}]
  %s6 = inlined_call_operand.vmem [shape: f32[1,6], index: 6, kind: input, shape index: {}]
  %s7 = inlined_call_operand.hbm [shape: f32[2,6], index: 7, kind: output, shape index: {}]
  %s8 = sld [smem:[#allocation0]]
  $region38: #{simple_model_forward.3} parent=0
    _
  %s10 = ssub.s32 1, %s8
  %s11 = scalar_select 0, %s10, %s8
  $region1: #{simple_model_forward.3} parent=0
    #allocation2 [shape = 'u8[1024]{0}', space=vmem, size = 0x400, scoped, tag = 'output window, operand 0, single buffered']
    #allocation3 [shape = 's32[1]{0}', space=sflag, size = 0x4, scoped, tag = 'scoped memory for simple_model_forward.3']
    %12 = vsyncpa [#allocation3], 0
    // Predicated region
    $region2: #{simple_model_forward.3} parent=1 // pred_check
      _
    $region3: #{simple_model_forward.3} parent=1 // pred_check_branch
      %14 = sbr.rel (0) target = $region5
    $region4: #{simple_model_forward.3} parent=1 // pred_region
      _
    $region5: #{simple_model_forward.3} parent=1 // pred_fallthru
      _
    // Predicated region
    $region6: #{simple_model_forward.3} parent=1 // pred_check
      _
    $region7: #{simple_model_forward.3} parent=1 // pred_check_branch
      %16 = sbr.rel (0) target = $region9
    $region8: #{simple_model_forward.3} parent=1 // pred_region
      _
    $region9: #{simple_model_forward.3} parent=1 // pred_fallthru
      _
    // Predicated region
    $region10: #{simple_model_forward.3} parent=1 // pred_check
      _
    $region11: #{simple_model_forward.3} parent=1 // pred_check_branch
      %18 = sbr.rel (0) target = $region13
    $region12: #{simple_model_forward.3} parent=1 // pred_region
      _
    $region13: #{simple_model_forward.3} parent=1 // pred_fallthru
      _
    // Predicated region
    $region14: #{simple_model_forward.3} parent=1 // pred_check
      _
    $region15: #{simple_model_forward.3} parent=1 // pred_check_branch
      %20 = sbr.rel (0) target = $region17
    $region16: #{simple_model_forward.3} parent=1 // pred_region
      _
    $region17: #{simple_model_forward.3} parent=1 // pred_fallthru
      _
    // Predicated region
    $region18: #{simple_model_forward.3} parent=1 // pred_check
      _
    $region19: #{simple_model_forward.3} parent=1 // pred_check_branch
      %22 = sbr.rel (0) target = $region21
    $region20: #{simple_model_forward.3} parent=1 // pred_region
      _
    $region21: #{simple_model_forward.3} parent=1 // pred_fallthru
      _
    // Predicated region
    $region22: #{simple_model_forward.3} parent=1 // pred_check
      _
    $region23: #{simple_model_forward.3} parent=1 // pred_check_branch
      %24 = sbr.rel (0) target = $region25
    $region24: #{simple_model_forward.3} parent=1 // pred_region
      _
    $region25: #{simple_model_forward.3} parent=1 // pred_fallthru
      _
    // Predicated region
    $region26: #{simple_model_forward.3} parent=1 // pred_check
      _
    $region27: #{simple_model_forward.3} parent=1 // pred_check_branch
      %26 = sbr.rel (0) target = $region29
    $region28: #{simple_model_forward.3} parent=1 // pred_region
      _
    $region29: #{simple_model_forward.3} parent=1 // pred_fallthru
      _
    %v28 = vld [vmem:[%s0] sm:$0x3]
    %v29 = vld [vmem:[%s1] sm:$0xf]
    %v30 = vld [vmem:[%s1 + $0x4] sm:$0xf]
    %v31 = vld [vmem:[%s1 + $0x8] sm:$0xf]
    %v32 = vld [vmem:[%s1 + $0xc] sm:$0xf]
    %v33 = vld [vmem:[%s1 + $0x10] sm:$0xf]
    %v34 = vld [vmem:[%s1 + $0x14] sm:$0xf]
    %v35 = vld [vmem:[%s1 + $0x18] sm:$0xf]
    %v36 = vld [vmem:[%s1 + $0x1c] sm:$0xf]
    %v37 = vld [vmem:[%s1 + $0x20] sm:$0xf]
    %v38 = vld [vmem:[%s1 + $0x24] sm:$0xf]
    %v39 = vld [vmem:[%s1 + $0x28] sm:$0xf]
    %v40 = vld [vmem:[%s1 + $0x2c] sm:$0xf]
    %v41 = vld [vmem:[%s1 + $0x30] sm:$0xf]
    %v42 = vld [vmem:[%s1 + $0x34] sm:$0xf]
    %v43 = vld [vmem:[%s1 + $0x38] sm:$0xf]
    %v44 = vld [vmem:[%s1 + $0x3c] sm:$0xf]
    %v45 = vld [vmem:[%s1 + $0x40] sm:$0xf]
    %v46 = vld [vmem:[%s1 + $0x44] sm:$0xf]
    %v47 = vld [vmem:[%s1 + $0x48] sm:$0xf]
    %v48 = vld [vmem:[%s1 + $0x4c] sm:$0xf]
    %v49 = vld [vmem:[%s1 + $0x50] sm:$0xf]
    %v50 = vld [vmem:[%s1 + $0x54] sm:$0xf]
    %v51 = vld [vmem:[%s1 + $0x58] sm:$0xf]
    %v52 = vld [vmem:[%s1 + $0x5c] sm:$0xf]
    %v53 = vld [vmem:[%s1 + $0x60] sm:$0xf]
    %v54 = vld [vmem:[%s1 + $0x64] sm:$0xf]
    %v55 = vld [vmem:[%s1 + $0x68] sm:$0xf]
    %v56 = vld [vmem:[%s1 + $0x6c] sm:$0xf]
    %v57 = vld [vmem:[%s1 + $0x70] sm:$0xf]
    %v58 = vld [vmem:[%s1 + $0x74] sm:$0xf]
    %v59 = vld [vmem:[%s1 + $0x78] sm:$0xf]
    %v60 = vld [vmem:[%s1 + $0x7c] sm:$0xf]
    %v61 = vld [vmem:[%s2] sm:$0x1]
    %v63 = vlaneseq
    %v64 = vshrl.u32 %v63, 7
    %v65 = vsub.s32 0, %v64
    %v66 = vrot.slane %v61, %v65
    %v70 = vunpack.c.l.s4 1966171168
    %v71 = vunpack.c.0.s8 %v70
    %v72 = vlaneseq
    %v73 = vshrl.u32 %v72, 7
    %v74 = vsub.s32 %v71, %v73
    %v75 = vrot.slane %v28, %v74
    %v76 = vcombine.high %v75, %v75
    %v78 = vunpack.c.l.s4 1966171168
    %v79 = vunpack.c.0.s8 %v78
    %v80 = vlaneseq
    %v81 = vshrl.u32 %v80, 7
    %v82 = vsub.s32 %v79, %v81
    %v83 = vrot.slane %v75, %v82
    %v85 = vunpack.c.l.s4 1966171168
    %v86 = vunpack.c.0.s8 %v85
    %v87 = vlaneseq
    %v88 = vshrl.u32 %v87, 7
    %v89 = vsub.s32 %v86, %v88
    %v90 = vrot.slane %v76, %v89
    %v125 = vunpack.c.l.b16 %v29
    %v126 = vunpack.c.l.b16 %v30
    %v127 = vunpack.c.l.b16 %v31
    %v128 = vunpack.c.l.b16 %v32
    %v129 = vunpack.c.l.b16 %v33
    %v130 = vunpack.c.l.b16 %v34
    %v131 = vunpack.c.l.b16 %v35
    %v132 = vunpack.c.l.b16 %v36
    %v133 = vunpack.c.l.b16 %v37
    %v134 = vunpack.c.l.b16 %v38
    %v135 = vunpack.c.l.b16 %v39
    %v136 = vunpack.c.l.b16 %v40
    %v137 = vunpack.c.l.b16 %v41
    %v138 = vunpack.c.l.b16 %v42
    %v139 = vunpack.c.l.b16 %v43
    %v140 = vunpack.c.l.b16 %v44
    %v141 = vunpack.c.l.b16 %v45
    %v142 = vunpack.c.l.b16 %v46
    %v143 = vunpack.c.l.b16 %v47
    %v144 = vunpack.c.l.b16 %v48
    %v145 = vunpack.c.l.b16 %v49
    %v146 = vunpack.c.l.b16 %v50
    %v147 = vunpack.c.l.b16 %v51
    %v148 = vunpack.c.l.b16 %v52
    %v149 = vunpack.c.l.b16 %v53
    %v150 = vunpack.c.l.b16 %v54
    %v151 = vunpack.c.l.b16 %v55
    %v152 = vunpack.c.l.b16 %v56
    %v153 = vunpack.c.l.b16 %v57
    %v154 = vunpack.c.l.b16 %v58
    %v155 = vunpack.c.l.b16 %v59
    %v156 = vunpack.c.l.b16 %v60
    %v157 = vpack.c.b16 %v126, %v125
    %v158 = vpack.c.b16 %v128, %v127
    %v159 = vpack.c.b16 %v130, %v129
    %v160 = vpack.c.b16 %v132, %v131
    %v161 = vpack.c.b16 %v134, %v133
    %v162 = vpack.c.b16 %v136, %v135
    %v163 = vpack.c.b16 %v138, %v137
    %v164 = vpack.c.b16 %v140, %v139
    %v165 = vpack.c.b16 %v142, %v141
    %v166 = vpack.c.b16 %v144, %v143
    %v167 = vpack.c.b16 %v146, %v145
    %v168 = vpack.c.b16 %v148, %v147
    %v169 = vpack.c.b16 %v150, %v149
    %v170 = vpack.c.b16 %v152, %v151
    %v171 = vpack.c.b16 %v154, %v153
    %v172 = vpack.c.b16 %v156, %v155
    %189 = vmatprep.subr.bf16.mxu0 0
    %190 = vmatpush1.bf16.msra.mxu0 %v157
    %191 = vmatprep.subr.bf16.mxu0 0
    %192 = vmatpush1.bf16.msra.mxu0 %v158
    %193 = vmatprep.subr.bf16.mxu0 0
    %194 = vmatpush1.bf16.msra.mxu0 %v159
    %195 = vmatprep.subr.bf16.mxu0 0
    %196 = vmatpush1.bf16.msra.mxu0 %v160
    %197 = vmatprep.subr.bf16.mxu0 0
    %198 = vmatpush1.bf16.msra.mxu0 %v161
    %199 = vmatprep.subr.bf16.mxu0 0
    %200 = vmatpush1.bf16.msra.mxu0 %v162
    %201 = vmatprep.subr.bf16.mxu0 0
    %202 = vmatpush1.bf16.msra.mxu0 %v163
    %203 = vmatprep.subr.bf16.mxu0 0
    %204 = vmatpush1.bf16.msra.mxu0 %v164
    %205 = vmatprep.subr.bf16.mxu0 0
    %206 = vmatpush1.bf16.msra.mxu0 %v165
    %207 = vmatprep.subr.bf16.mxu0 0
    %208 = vmatpush1.bf16.msra.mxu0 %v166
    %209 = vmatprep.subr.bf16.mxu0 0
    %210 = vmatpush1.bf16.msra.mxu0 %v167
    %211 = vmatprep.subr.bf16.mxu0 0
    %212 = vmatpush1.bf16.msra.mxu0 %v168
    %213 = vmatprep.subr.bf16.mxu0 0
    %214 = vmatpush1.bf16.msra.mxu0 %v169
    %215 = vmatprep.subr.bf16.mxu0 0
    %216 = vmatpush1.bf16.msra.mxu0 %v170
    %217 = vmatprep.subr.bf16.mxu0 0
    %218 = vmatpush1.bf16.msra.mxu0 %v171
    %219 = vmatprep.subr.bf16.mxu0 0
    %220 = vmatpush1.bf16.msra.mxu0 %v172
    %221 = vmatprep.mubr.bf16.mxu0 %v90
    %222 = vmatmul.mubr.bf16.gmra.mrb[0].mxu0 %v83
    %v223 = vpop.f32.mrb[0].mxu0
    %v224 = vadd.f32 %v66, %v223
    %v225 = vpop.f32.mrb[0].mxu0
    %v226 = vpop.f32.mrb[0].mxu0
    %v227 = vpop.f32.mrb[0].mxu0
    %228 = vdwg.mxu0
    %v229 = vmax.f32 %v224, 0.0
    %v230 = vpack.c.bf16 %v229, %v229
    %v231 = vld [vmem:[%s3] sm:$0xf]
    %v232 = vld [vmem:[%s3 + $0x4] sm:$0xf]
    %v233 = vld [vmem:[%s3 + $0x8] sm:$0xf]
    %v234 = vld [vmem:[%s3 + $0xc] sm:$0xf]
    %v235 = vld [vmem:[%s3 + $0x10] sm:$0xf]
    %v236 = vld [vmem:[%s3 + $0x14] sm:$0xf]
    %v237 = vld [vmem:[%s3 + $0x18] sm:$0xf]
    %v238 = vld [vmem:[%s3 + $0x1c] sm:$0xf]
    %v239 = vld [vmem:[%s3 + $0x20] sm:$0xf]
    %v240 = vld [vmem:[%s3 + $0x24] sm:$0xf]
    %v241 = vld [vmem:[%s3 + $0x28] sm:$0xf]
    %v242 = vld [vmem:[%s3 + $0x2c] sm:$0xf]
    %v243 = vld [vmem:[%s3 + $0x30] sm:$0xf]
    %v244 = vld [vmem:[%s3 + $0x34] sm:$0xf]
    %v245 = vld [vmem:[%s3 + $0x38] sm:$0xf]
    %v246 = vld [vmem:[%s3 + $0x3c] sm:$0xf]
    %v247 = vld [vmem:[%s4] sm:$0x1]
    %v249 = vlaneseq
    %v250 = vshrl.u32 %v249, 7
    %v251 = vsub.s32 0, %v250
    %v252 = vrot.slane %v247, %v251
    %v270 = vunpack.c.l.b16 %v231
    %v271 = vunpack.c.l.b16 %v232
    %v272 = vunpack.c.l.b16 %v233
    %v273 = vunpack.c.l.b16 %v234
    %v274 = vunpack.c.l.b16 %v235
    %v275 = vunpack.c.l.b16 %v236
    %v276 = vunpack.c.l.b16 %v237
    %v277 = vunpack.c.l.b16 %v238
    %v278 = vunpack.c.l.b16 %v239
    %v279 = vunpack.c.l.b16 %v240
    %v280 = vunpack.c.l.b16 %v241
    %v281 = vunpack.c.l.b16 %v242
    %v282 = vunpack.c.l.b16 %v243
    %v283 = vunpack.c.l.b16 %v244
    %v284 = vunpack.c.l.b16 %v245
    %v285 = vunpack.c.l.b16 %v246
    %v286 = vpack.c.b16 %v271, %v270
    %v287 = vpack.c.b16 %v273, %v272
    %v288 = vpack.c.b16 %v275, %v274
    %v289 = vpack.c.b16 %v277, %v276
    %v290 = vpack.c.b16 %v279, %v278
    %v291 = vpack.c.b16 %v281, %v280
    %v292 = vpack.c.b16 %v283, %v282
    %v293 = vpack.c.b16 %v285, %v284
    %302 = vmatprep.subr.bf16.mxu0 0
    %303 = vmatpush1.bf16.msra.mxu0 %v286
    %304 = vmatprep.subr.bf16.mxu0 0
    %305 = vmatpush1.bf16.msra.mxu0 %v287
    %306 = vmatprep.subr.bf16.mxu0 0
    %307 = vmatpush1.bf16.msra.mxu0 %v288
    %308 = vmatprep.subr.bf16.mxu0 0
    %309 = vmatpush1.bf16.msra.mxu0 %v289
    %310 = vmatprep.subr.bf16.mxu0 0
    %311 = vmatpush1.bf16.msra.mxu0 %v290
    %312 = vmatprep.subr.bf16.mxu0 0
    %313 = vmatpush1.bf16.msra.mxu0 %v291
    %314 = vmatprep.subr.bf16.mxu0 0
    %315 = vmatpush1.bf16.msra.mxu0 %v292
    %316 = vmatprep.subr.bf16.mxu0 0
    %317 = vmatpush1.bf16.msra.mxu0 %v293
    %318 = vmatprep.subr.bf16.mxu0 0
    %319 = vmatpush1.bf16.msra.mxu0 0
    %320 = vmatprep.subr.bf16.mxu0 0
    %321 = vmatpush1.bf16.msra.mxu0 0
    %322 = vmatprep.subr.bf16.mxu0 0
    %323 = vmatpush1.bf16.msra.mxu0 0
    %324 = vmatprep.subr.bf16.mxu0 0
    %325 = vmatpush1.bf16.msra.mxu0 0
    %326 = vmatprep.subr.bf16.mxu0 0
    %327 = vmatpush1.bf16.msra.mxu0 0
    %328 = vmatprep.subr.bf16.mxu0 0
    %329 = vmatpush1.bf16.msra.mxu0 0
    %330 = vmatprep.subr.bf16.mxu0 0
    %331 = vmatpush1.bf16.msra.mxu0 0
    %332 = vmatprep.subr.bf16.mxu0 0
    %333 = vmatpush1.bf16.msra.mxu0 0
    %334 = vmatprep.mubr.bf16.mxu0 0
    %335 = vmatmul.mubr.bf16.gmra.mrb[0].mxu0 %v230
    %v336 = vpop.f32.mrb[0].mxu0
    %v337 = vadd.f32 %v252, %v336
    %v338 = vpop.f32.mrb[0].mxu0
    %v339 = vpop.f32.mrb[0].mxu0
    %v340 = vpop.f32.mrb[0].mxu0
    %341 = vdwg.mxu0
    %v342 = vmax.f32 %v337, 0.0
    %v343 = vpack.c.bf16 %v342, %v342
    %v344 = vld [vmem:[%s5] sm:$0xf]
    %v345 = vld [vmem:[%s5 + $0x4] sm:$0xf]
    %v346 = vld [vmem:[%s5 + $0x8] sm:$0xf]
    %v347 = vld [vmem:[%s5 + $0xc] sm:$0xf]
    %v348 = vld [vmem:[%s5 + $0x10] sm:$0xf]
    %v349 = vld [vmem:[%s5 + $0x14] sm:$0xf]
    %v350 = vld [vmem:[%s5 + $0x18] sm:$0xf]
    %v351 = vld [vmem:[%s5 + $0x1c] sm:$0xf]
    %v352 = vld [vmem:[%s6] sm:$0x1]
    %v354 = vlaneseq
    %v355 = vshrl.u32 %v354, 7
    %v356 = vsub.s32 0, %v355
    %v357 = vrot.slane %v352, %v356
    %v367 = vunpack.c.l.b16 %v344
    %v368 = vunpack.c.l.b16 %v345
    %v369 = vunpack.c.l.b16 %v346
    %v370 = vunpack.c.l.b16 %v347
    %v371 = vunpack.c.l.b16 %v348
    %v372 = vunpack.c.l.b16 %v349
    %v373 = vunpack.c.l.b16 %v350
    %v374 = vunpack.c.l.b16 %v351
    %v375 = vpack.c.b16 %v368, %v367
    %v376 = vpack.c.b16 %v370, %v369
    %v377 = vpack.c.b16 %v372, %v371
    %v378 = vpack.c.b16 %v374, %v373
    %vm383 = vcmask 523264
    %v385 = vsel %vm383, %v343, 0
    %387 = vmatprep.subr.bf16.mxu0 0
    %388 = vmatpush1.bf16.msra.mxu0 %v375
    %389 = vmatprep.subr.bf16.mxu0 0
    %390 = vmatpush1.bf16.msra.mxu0 %v376
    %391 = vmatprep.subr.bf16.mxu0 0
    %392 = vmatpush1.bf16.msra.mxu0 %v377
    %393 = vmatprep.subr.bf16.mxu0 0
    %394 = vmatpush1.bf16.msra.mxu0 %v378
    %395 = vmatprep.subr.bf16.mxu0 0
    %396 = vmatpush1.bf16.msra.mxu0 0
    %397 = vmatprep.subr.bf16.mxu0 0
    %398 = vmatpush1.bf16.msra.mxu0 0
    %399 = vmatprep.subr.bf16.mxu0 0
    %400 = vmatpush1.bf16.msra.mxu0 0
    %401 = vmatprep.subr.bf16.mxu0 0
    %402 = vmatpush1.bf16.msra.mxu0 0
    %403 = vmatprep.subr.bf16.mxu0 0
    %404 = vmatpush1.bf16.msra.mxu0 0
    %405 = vmatprep.subr.bf16.mxu0 0
    %406 = vmatpush1.bf16.msra.mxu0 0
    %407 = vmatprep.subr.bf16.mxu0 0
    %408 = vmatpush1.bf16.msra.mxu0 0
    %409 = vmatprep.subr.bf16.mxu0 0
    %410 = vmatpush1.bf16.msra.mxu0 0
    %411 = vmatprep.subr.bf16.mxu0 0
    %412 = vmatpush1.bf16.msra.mxu0 0
    %413 = vmatprep.subr.bf16.mxu0 0
    %414 = vmatpush1.bf16.msra.mxu0 0
    %415 = vmatprep.subr.bf16.mxu0 0
    %416 = vmatpush1.bf16.msra.mxu0 0
    %417 = vmatprep.subr.bf16.mxu0 0
    %418 = vmatpush1.bf16.msra.mxu0 0
    %419 = vmatprep.mubr.bf16.mxu0 0
    %420 = vmatmul.mubr.bf16.gmra.mrb[0].mxu0 %v385
    %v421 = vpop.f32.mrb[0].mxu0
    %v422 = vadd.f32 %v357, %v421
    %v423 = vpop.f32.mrb[0].mxu0
    %v424 = vpop.f32.mrb[0].mxu0
    %v425 = vpop.f32.mrb[0].mxu0
    %426 = vdwg.mxu0
    %vm427 = vcmask 41984
    %428 = vst.msk [vmem:[#allocation2] sm:$0x3] %vm427, %v422
    // Predicated region
    $region30: #{simple_model_forward.3} parent=1 // pred_check
      _
    $region31: #{simple_model_forward.3} parent=1 // pred_check_branch
      %430 = sbr.rel (0) target = $region33
    $region32: #{simple_model_forward.3} parent=1 // pred_region
      %s432 = ssub.s32 32, 32
      %433 = vsyncadd [#allocation3], %s432
      %s435 = sshll.u32 [#allocation2], 4
      %s436 = int_to_ptr.vmem [resolvable:$true] %s435
      %438 = dma.vmem_to_hbm [thread:$0]  %s436, 32, %s7, [#allocation3]
    $region33: #{simple_model_forward.3} parent=1 // pred_fallthru
      _
    // Predicated region
    $region34: #{simple_model_forward.3} parent=1 // pred_check
      _
    $region35: #{simple_model_forward.3} parent=1 // pred_check_branch
      %440 = sbr.rel (0) target = $region37
    $region36: #{simple_model_forward.3} parent=1 // pred_region
      %441 = dma.done [#allocation3], 32
    $region37: #{simple_model_forward.3} parent=1 // pred_fallthru
      _
    %442 = vsyncpa [#allocation3], 1

// kernel: simple_model_forward.2
$region0: #{simple_model_forward.2}
  #allocation0 [shape = 'u32[]', space=smem, size = 0x4, offset = 0x4, fixed_abs, tag = 'smem constant byte address 0x4 - core index']
  #allocation1 [shape = 'u32[144,128]{1,0:T(1,128)}', space=vmem, size = 0x12000, scoped, tag = 'internal scratch']
  #allocation2 [shape = 'f32[2,128]{1,0:T(2,128)}', space=vmem, size = 0x400, scoped, tag = 'scratch operand']
  %s0 = inlined_call_operand.vmem [shape: f32[2,4096], index: 0, kind: input, shape index: {}]
  %s1 = inlined_call_operand.hbm [shape: bf16[4096,256], index: 1, kind: input, shape index: {}]
  %s2 = inlined_call_operand.hbm [shape: f32[1,256], index: 2, kind: input, shape index: {}]
  %s3 = inlined_call_operand.vmem [shape: bf16[2,256], index: 3, kind: output, shape index: {}]
  %s4 = sld [smem:[#allocation0]]
  $region61: #{simple_model_forward.2} parent=0
    _
  %s6 = ssub.s32 1, %s4
  %s7 = scalar_select 0, %s6, %s4
  $region1: #{simple_model_forward.2} parent=0
    #allocation3 [shape = 'u8[2097152]{0}', space=vmem, size = 0x200000, scoped, tag = 'input window, operand 1']
    #allocation4 [shape = 's32[2]{0}', space=sflag, size = 0x8, scoped, tag = 'scoped memory for simple_model_forward.2']
    #allocation5 [shape = 'u8[1024]{0}', space=vmem, size = 0x400, scoped, tag = 'input window, operand 2']
    #allocation6 [shape = 's32[2]{0}', space=sflag, size = 0x8, scoped, tag = 'scoped memory for simple_model_forward.2']
    %8 = vsyncpa [#allocation4], 0
    %s9 = scalar_lea.sflag [#allocation4], 1
    %10 = vsyncpa %s9, 0
    %11 = vsyncpa [#allocation6], 0
    %s12 = scalar_lea.sflag [#allocation6], 1
    %13 = vsyncpa %s12, 0
    loop: start=0, step=1, limit=4
    $region2: #{simple_model_forward.2} parent=1 // loop_pre_header
      _
    $region3: #{simple_model_forward.2} parent=1 // loop_header
      %s15 = sphi 0, %s19
      %p16 = scmp.ge.s32.totalorder %s15, 4
      %s22 = sphi 0, %s34
      %s23 = sphi 0, %s30
      %s24 = sphi 0, %s22
      %s25 = sphi 0, %s23
      %s26 = sphi 0, %s24
      %s27 = sphi 0, %s25
      %s35 = sphi 0, %s35
      %s37 = sphi 0, %s35
      %s38 = sphi 0, %s37
      %s52 = sphi 0, %s38
      %s60 = sphi 0, %s62
      %s63 = sphi 0, %s60
      %s64 = sphi 0, %s63
      %s80 = sphi 0, %s64
      %s86 = sphi 0, %s88
      %s89 = sphi 0, %s86
      %s90 = sphi 0, %s89
      %s106 = sphi 0, %s90
      %s112 = sphi 0, %s114
      %s115 = sphi 0, %s112
      %s116 = sphi 0, %s115
      %s132 = sphi 0, %s116
    $region4: #{simple_model_forward.2} parent=1 // loop_header_branch
      %18 = sbr.rel (%p16) target = $region8
    $region5: #{simple_model_forward.2} parent=1 // loop_body
      %s20 = ssub.s32 %s15, 1
      %s21 = ssub.s32 %s15, 2
      %s28 = sadd.s32 1, %s23
      %p29 = scmp.ge.s32.totalorder %s28, 1
      %s30 = scalar_select %p29, 0, %s28
      %s31 = sadd.s32 1, %s22
      %s32 = scalar_select %p29, %s31, %s22
      %p33 = scmp.ge.s32.totalorder %s32, 2
      %s34 = scalar_select %p33, 0, %s32
      %s36 = sadd.s32 %s35, 1
      %p39 = scmp.eq.s32.totalorder %s15, 1
      %p40 = scmp.ne.s32.totalorder %s35, %s37
      %p41 = scmp.eq.s32.totalorder %s15, 0
      %p42 = por %p40, %p41
      %p43 = scmp.ne.s32.totalorder %s35, %s37
      %p44 = scmp.eq.s32.totalorder %s20, 1
      %p45 = por %p43, %p44
      %p46 = scmp.ne.s32.totalorder %s37, %s38
      %p47 = scmp.eq.s32.totalorder %s20, 0
      %p48 = por %p46, %p47
      %p49 = scmp.ne.s32.totalorder %s37, %s38
      %p50 = scmp.eq.s32.totalorder %s21, 1
      %p51 = por %p49, %p50
      %p53 = scmp.ne.s32.totalorder %s38, %s52
      %p54 = scmp.eq.s32.totalorder %s21, 0
      %p55 = por %p53, %p54
      %s56 = ssub.s32 %s23, %s30
      %s57 = ssub.s32 %s22, %s34
      %s58 = sor.u32 %s56, %s57
      %p59 = scmp.eq.s32.totalorder %s58, 0
      %s61 = sadd.s32 %s60, 1
      %s62 = scalar_select %p59, %s60, %s61
      %p65 = pneg %p59
      %p66 = scmp.eq.s32.totalorder %s15, 1
      %p67 = por %p65, %p66
      %p68 = scmp.ne.s32.totalorder %s60, %s63
      %p69 = scmp.eq.s32.totalorder %s15, 0
      %p70 = por %p68, %p69
      %p71 = scmp.ne.s32.totalorder %s60, %s63
      %p72 = scmp.eq.s32.totalorder %s20, 1
      %p73 = por %p71, %p72
      %p74 = scmp.ne.s32.totalorder %s63, %s64
      %p75 = scmp.eq.s32.totalorder %s20, 0
      %p76 = por %p74, %p75
      %p77 = scmp.ne.s32.totalorder %s63, %s64
      %p78 = scmp.eq.s32.totalorder %s21, 1
      %p79 = por %p77, %p78
      %p81 = scmp.ne.s32.totalorder %s64, %s80
      %p82 = scmp.eq.s32.totalorder %s21, 0
      %p83 = por %p81, %p82
      %s84 = ssub.s32 %s22, %s34
      %p85 = scmp.eq.s32.totalorder %s84, 0
      %s87 = sadd.s32 %s86, 1
      %s88 = scalar_select %p85, %s86, %s87
      %p91 = pneg %p85
      %p92 = scmp.eq.s32.totalorder %s15, 1
      %p93 = por %p91, %p92
      %p94 = scmp.ne.s32.totalorder %s86, %s89
      %p95 = scmp.eq.s32.totalorder %s15, 0
      %p96 = por %p94, %p95
      %p97 = scmp.ne.s32.totalorder %s86, %s89
      %p98 = scmp.eq.s32.totalorder %s20, 1
      %p99 = por %p97, %p98
      %p100 = scmp.ne.s32.totalorder %s89, %s90
      %p101 = scmp.eq.s32.totalorder %s20, 0
      %p102 = por %p100, %p101
      %p103 = scmp.ne.s32.totalorder %s89, %s90
      %p104 = scmp.eq.s32.totalorder %s21, 1
      %p105 = por %p103, %p104
      %p107 = scmp.ne.s32.totalorder %s90, %s106
      %p108 = scmp.eq.s32.totalorder %s21, 0
      %p109 = por %p107, %p108
      %s110 = ssub.s32 %s22, %s34
      %p111 = scmp.eq.s32.totalorder %s110, 0
      %s113 = sadd.s32 %s112, 1
      %s114 = scalar_select %p111, %s112, %s113
      %p117 = pneg %p111
      %p118 = scmp.eq.s32.totalorder %s15, 1
      %p119 = por %p117, %p118
      %p120 = scmp.ne.s32.totalorder %s112, %s115
      %p121 = scmp.eq.s32.totalorder %s15, 0
      %p122 = por %p120, %p121
      %p123 = scmp.ne.s32.totalorder %s112, %s115
      %p124 = scmp.eq.s32.totalorder %s20, 1
      %p125 = por %p123, %p124
      %p126 = scmp.ne.s32.totalorder %s115, %s116
      %p127 = scmp.eq.s32.totalorder %s20, 0
      %p128 = por %p126, %p127
      %p129 = scmp.ne.s32.totalorder %s115, %s116
      %p130 = scmp.eq.s32.totalorder %s21, 1
      %p131 = por %p129, %p130
      %p133 = scmp.ne.s32.totalorder %s116, %s132
      %p134 = scmp.eq.s32.totalorder %s21, 0
      %p135 = por %p133, %p134
      %p136 = scmp.le.s32.totalorder 1, %s15
      %p137 = scmp.lt.s32.totalorder %s15, 3
      %p138 = pnand %p136, %p137
      %p139 = pneg %p138
      // Predicated region
      $region9: #{simple_model_forward.2} parent=5 // pred_check
        _
      $region10: #{simple_model_forward.2} parent=5 // pred_check_branch
        %141 = sbr.rel (%p138) target = $region12
      $region11: #{simple_model_forward.2} parent=5 // pred_region
        %s142 = ssub.s32 %s15, 1
        // Predicated region
        $region13: #{simple_model_forward.2} parent=11 // pred_check
          %p143 = pneg %p48
        $region14: #{simple_model_forward.2} parent=11 // pred_check_branch
          %145 = sbr.rel (%p143) target = $region16
        $region15: #{simple_model_forward.2} parent=11 // pred_region
          _
        $region16: #{simple_model_forward.2} parent=11 // pred_fallthru
          _
      $region12: #{simple_model_forward.2} parent=5 // pred_fallthru
        _
      %p146 = scmp.lt.s32.totalorder %s15, 2
      // Predicated region
      $region17: #{simple_model_forward.2} parent=5 // pred_check
        %p147 = pneg %p146
      $region18: #{simple_model_forward.2} parent=5 // pred_check_branch
        %149 = sbr.rel (%p147) target = $region20
      $region19: #{simple_model_forward.2} parent=5 // pred_region
        // Predicated region
        $region21: #{simple_model_forward.2} parent=19 // pred_check
          %p150 = pneg %p70
        $region22: #{simple_model_forward.2} parent=19 // pred_check_branch
          %152 = sbr.rel (%p150) target = $region24
        $region23: #{simple_model_forward.2} parent=19 // pred_region
          %s153 = sand.u32 %s60, 1
          %s154 = scalar_lea.sflag [#allocation4], %s153
          %s155 = sand.u32 %s60, 1
          %s156 = smul.addr %s155, 2048
          %s157 = scalar_lea.vmem [#allocation3], %s156
          %s158 = smul.u32 512, %s23
          %s160 = ssub.s32 32768, 32768
          %161 = vsyncadd %s154, %s160
          %s162 = smul.addr %s158, 2
          %s163 = sadd.s32 %s22, %s162
          %s164 = smul.addr %s163, 64
          %s165 = scalar_lea.hbm %s1, %s164
          %s166 = sshll.u32 %s157, 4
          %s167 = int_to_ptr.vmem [resolvable:$true] %s166
          %172 = dma.hbm_to_vmem [thread:$0]  %s165, 32768, %s167, %s154, 128, 64, 4
        $region24: #{simple_model_forward.2} parent=19 // pred_fallthru
          _
        // Predicated region
        $region25: #{simple_model_forward.2} parent=19 // pred_check
          %p173 = pneg %p96
        $region26: #{simple_model_forward.2} parent=19 // pred_check_branch
          %175 = sbr.rel (%p173) target = $region28
        $region27: #{simple_model_forward.2} parent=19 // pred_region
          %s176 = sand.u32 %s86, 1
          %s177 = scalar_lea.sflag [#allocation6], %s176
          %s178 = sand.u32 %s86, 1
          %s179 = scalar_lea.vmem [#allocation5], %s178
          %s181 = ssub.s32 16, 16
          %182 = vsyncadd %s177, %s181
          %s183 = smul.addr %s22, 16
          %s184 = scalar_lea.hbm %s2, %s183
          %s186 = sshll.u32 %s179, 4
          %s187 = int_to_ptr.vmem [resolvable:$true] %s186
          %189 = dma.hbm_to_vmem [thread:$0]  %s184, 16, %s187, %s177
        $region28: #{simple_model_forward.2} parent=19 // pred_fallthru
          _
      $region20: #{simple_model_forward.2} parent=5 // pred_fallthru
        _
      %p190 = scmp.le.s32.totalorder 1, %s15
      %p191 = scmp.lt.s32.totalorder %s15, 3
      %p192 = pnand %p190, %p191
      %p193 = pneg %p192
      // Predicated region
      $region29: #{simple_model_forward.2} parent=5 // pred_check
        _
      $region30: #{simple_model_forward.2} parent=5 // pred_check_branch
        %195 = sbr.rel (%p192) target = $region32
      $region31: #{simple_model_forward.2} parent=5 // pred_region
        %s196 = ssub.s32 %s15, 1
        %s197 = sand.u32 %s63, 1
        %s198 = scalar_lea.sflag [#allocation4], %s197
        %s199 = sand.u32 %s63, 1
        %s200 = smul.addr %s199, 2048
        %s201 = scalar_lea.vmem [#allocation3], %s200
        // Predicated region
        $region33: #{simple_model_forward.2} parent=31 // pred_check
          %p202 = pneg %p76
        $region34: #{simple_model_forward.2} parent=31 // pred_check_branch
          %204 = sbr.rel (%p202) target = $region36
        $region35: #{simple_model_forward.2} parent=31 // pred_region
          %205 = dma.done %s198, 32768
        $region36: #{simple_model_forward.2} parent=31 // pred_fallthru
          _
        %s206 = sand.u32 %s89, 1
        %s207 = scalar_lea.sflag [#allocation6], %s206
        %s208 = sand.u32 %s89, 1
        %s209 = scalar_lea.vmem [#allocation5], %s208
        // Predicated region
        $region37: #{simple_model_forward.2} parent=31 // pred_check
          %p210 = pneg %p102
        $region38: #{simple_model_forward.2} parent=31 // pred_check_branch
          %212 = sbr.rel (%p210) target = $region40
        $region39: #{simple_model_forward.2} parent=31 // pred_region
          %213 = dma.done %s207, 16
        $region40: #{simple_model_forward.2} parent=31 // pred_fallthru
          _
        %p214 = pneg %p48
        %p215 = pneg %p45
        %s216 = sand.u32 %s63, 1
        %s217 = scalar_lea.sflag [#allocation4], %s216
        %s218 = sand.u32 %s63, 1
        %s219 = smul.addr %s218, 2048
        %s220 = scalar_lea.vmem [#allocation3], %s219
        %p221 = pneg %p76
        %p222 = pneg %p73
        %s223 = sand.u32 %s89, 1
        %s224 = scalar_lea.sflag [#allocation6], %s223
        %s225 = sand.u32 %s89, 1
        %s226 = scalar_lea.vmem [#allocation5], %s225
        %p227 = pneg %p102
        %p228 = pneg %p99
        %p229 = pneg %p128
        %p230 = pneg %p125
        %p231 = scmp.lt.s32.totalorder %s24, 1
        %s232 = scalar_select %p231, %s24, 1
        %s233 = scalar_lea.vmem %s3, %s232
        %s234 = smul.u32 512, %s25
        %p235 = scmp.lt.s32.totalorder %s24, 1
        %s236 = scalar_select %p235, %s24, 1
        %s237 = scalar_lea.vmem %s3, %s236
        %p239 = scmp.eq.s32.totalorder %s25, 0
        // Predicated region
        $region41: #{simple_model_forward.2} parent=31 // pred_check
          %p240 = pneg %p239
        $region42: #{simple_model_forward.2} parent=31 // pred_check_branch
          %242 = sbr.rel (%p240) target = $region44
        $region43: #{simple_model_forward.2} parent=31 // pred_region
          %243 = vst [vmem:[#allocation2] sm:$0x3] 0.0
        $region44: #{simple_model_forward.2} parent=31 // pred_fallthru
          _
        %s244 = smul.u32 %s25, 4096
        %s245 = sshra.s32 %s244, 7
        %s246 = sand.u32 %s244, 127
        %s247 = smul.addr %s245, 2
        %s248 = scalar_lea.vmem %s0, %s247
        %v249 = vld [vmem:[%s248] sm:$0xff]
        %v250 = vld [vmem:[%s248 + $0x8] sm:$0xff]
        %v251 = vld [vmem:[%s248 + $0x10] sm:$0xff]
        %v252 = vld [vmem:[%s248 + $0x18] sm:$0xff]
        %v253 = vld [vmem:[%s248 + $0x20] sm:$0xff]
        %v254 = vld [vmem:[%s248 + $0x28] sm:$0xff]
        %v255 = vld [vmem:[%s248 + $0x30] sm:$0xff]
        %v256 = vld [vmem:[%s248 + $0x38] sm:$0xff]
        %v257 = vld [vmem:[#allocation2] sm:$0x3]
        %v266 = vcombine.high %v249, %v249
        %v268 = vunpack.c.l.s4 1983009808
        %v269 = vunpack.c.0.s8 %v268
        %v270 = vlaneseq
        %v271 = vshrl.u32 %v270, 7
        %v272 = vsub.s32 %v269, %v271
        %v273 = vrot.slane %v249, %v272
        %v275 = vunpack.c.l.s4 1983009808
        %v276 = vunpack.c.0.s8 %v275
        %v277 = vlaneseq
        %v278 = vshrl.u32 %v277, 7
        %v279 = vsub.s32 %v276, %v278
        %v280 = vrot.slane %v266, %v279
        %v281 = vcombine.high %v273, %v273
        %v282 = vcombine.high %v280, %v280
        %v283 = vcombine.high %v250, %v250
        %v285 = vunpack.c.l.s4 1983009808
        %v286 = vunpack.c.0.s8 %v285
        %v287 = vlaneseq
        %v288 = vshrl.u32 %v287, 7
        %v289 = vsub.s32 %v286, %v288
        %v290 = vrot.slane %v250, %v289
        %v292 = vunpack.c.l.s4 1983009808
        %v293 = vunpack.c.0.s8 %v292
        %v294 = vlaneseq
        %v295 = vshrl.u32 %v294, 7
        %v296 = vsub.s32 %v293, %v295
        %v297 = vrot.slane %v283, %v296
        %v298 = vcombine.high %v290, %v290
        %v299 = vcombine.high %v297, %v297
        %v300 = vcombine.high %v251, %v251
        %v302 = vunpack.c.l.s4 1983009808
        %v303 = vunpack.c.0.s8 %v302
        %v304 = vlaneseq
        %v305 = vshrl.u32 %v304, 7
        %v306 = vsub.s32 %v303, %v305
        %v307 = vrot.slane %v251, %v306
        %v309 = vunpack.c.l.s4 1983009808
        %v310 = vunpack.c.0.s8 %v309
        %v311 = vlaneseq
        %v312 = vshrl.u32 %v311, 7
        %v313 = vsub.s32 %v310, %v312
        %v314 = vrot.slane %v300, %v313
        %v315 = vcombine.high %v307, %v307
        %v316 = vcombine.high %v314, %v314
        %v317 = vcombine.high %v252, %v252
        %v319 = vunpack.c.l.s4 1983009808
        %v320 = vunpack.c.0.s8 %v319
        %v321 = vlaneseq
        %v322 = vshrl.u32 %v321, 7
        %v323 = vsub.s32 %v320, %v322
        %v324 = vrot.slane %v252, %v323
        %v326 = vunpack.c.l.s4 1983009808
        %v327 = vunpack.c.0.s8 %v326
        %v328 = vlaneseq
        %v329 = vshrl.u32 %v328, 7
        %v330 = vsub.s32 %v327, %v329
        %v331 = vrot.slane %v317, %v330
        %v332 = vcombine.high %v324, %v324
        %v333 = vcombine.high %v331, %v331
        %v334 = vcombine.high %v253, %v253
        %v336 = vunpack.c.l.s4 1983009808
        %v337 = vunpack.c.0.s8 %v336
        %v338 = vlaneseq
        %v339 = vshrl.u32 %v338, 7
        %v340 = vsub.s32 %v337, %v339
        %v341 = vrot.slane %v253, %v340
        %v343 = vunpack.c.l.s4 1983009808
        %v344 = vunpack.c.0.s8 %v343
        %v345 = vlaneseq
        %v346 = vshrl.u32 %v345, 7
        %v347 = vsub.s32 %v344, %v346
        %v348 = vrot.slane %v334, %v347
        %v349 = vcombine.high %v341, %v341
        %v350 = vcombine.high %v348, %v348
        %v351 = vcombine.high %v254, %v254
        %v353 = vunpack.c.l.s4 1983009808
        %v354 = vunpack.c.0.s8 %v353
        %v355 = vlaneseq
        %v356 = vshrl.u32 %v355, 7
        %v357 = vsub.s32 %v354, %v356
        %v358 = vrot.slane %v254, %v357
        %v360 = vunpack.c.l.s4 1983009808
        %v361 = vunpack.c.0.s8 %v360
        %v362 = vlaneseq
        %v363 = vshrl.u32 %v362, 7
        %v364 = vsub.s32 %v361, %v363
        %v365 = vrot.slane %v351, %v364
        %v366 = vcombine.high %v358, %v358
        %v367 = vcombine.high %v365, %v365
        %v368 = vcombine.high %v255, %v255
        %v370 = vunpack.c.l.s4 1983009808
        %v371 = vunpack.c.0.s8 %v370
        %v372 = vlaneseq
        %v373 = vshrl.u32 %v372, 7
        %v374 = vsub.s32 %v371, %v373
        %v375 = vrot.slane %v255, %v374
        %v377 = vunpack.c.l.s4 1983009808
        %v378 = vunpack.c.0.s8 %v377
        %v379 = vlaneseq
        %v380 = vshrl.u32 %v379, 7
        %v381 = vsub.s32 %v378, %v380
        %v382 = vrot.slane %v368, %v381
        %v383 = vcombine.high %v375, %v375
        %v384 = vcombine.high %v382, %v382
        %v385 = vcombine.high %v256, %v256
        %v387 = vunpack.c.l.s4 1983009808
        %v388 = vunpack.c.0.s8 %v387
        %v389 = vlaneseq
        %v390 = vshrl.u32 %v389, 7
        %v391 = vsub.s32 %v388, %v390
        %v392 = vrot.slane %v256, %v391
        %v394 = vunpack.c.l.s4 1983009808
        %v395 = vunpack.c.0.s8 %v394
        %v396 = vlaneseq
        %v397 = vshrl.u32 %v396, 7
        %v398 = vsub.s32 %v395, %v397
        %v399 = vrot.slane %v385, %v398
        %v400 = vcombine.high %v392, %v392
        %v401 = vcombine.high %v399, %v399
        %v434 = vpack.c.bf16 %v273, %v273
        %v435 = vpack.c.bf16 %v281, %v281
        %v436 = vpack.c.bf16 %v280, %v280
        %v437 = vpack.c.bf16 %v282, %v282
        %v438 = vpack.c.bf16 %v290, %v290
        %v439 = vpack.c.bf16 %v298, %v298
        %v440 = vpack.c.bf16 %v297, %v297
        %v441 = vpack.c.bf16 %v299, %v299
        %v442 = vpack.c.bf16 %v307, %v307
        %v443 = vpack.c.bf16 %v315, %v315
        %v444 = vpack.c.bf16 %v314, %v314
        %v445 = vpack.c.bf16 %v316, %v316
        %v446 = vpack.c.bf16 %v324, %v324
        %v447 = vpack.c.bf16 %v332, %v332
        %v448 = vpack.c.bf16 %v331, %v331
        %v449 = vpack.c.bf16 %v333, %v333
        %v450 = vpack.c.bf16 %v341, %v341
        %v451 = vpack.c.bf16 %v349, %v349
        %v452 = vpack.c.bf16 %v348, %v348
        %v453 = vpack.c.bf16 %v350, %v350
        %v454 = vpack.c.bf16 %v358, %v358
        %v455 = vpack.c.bf16 %v366, %v366
        %v456 = vpack.c.bf16 %v365, %v365
        %v457 = vpack.c.bf16 %v367, %v367
        %v458 = vpack.c.bf16 %v375, %v375
        %v459 = vpack.c.bf16 %v383, %v383
        %v460 = vpack.c.bf16 %v382, %v382
        %v461 = vpack.c.bf16 %v384, %v384
        %v462 = vpack.c.bf16 %v392, %v392
        %v463 = vpack.c.bf16 %v400, %v400
        %v464 = vpack.c.bf16 %v399, %v399
        %v465 = vpack.c.bf16 %v401, %v401
        %v466 = vld [vmem:[%s201] sm:$0xf]
        %v467 = vld [vmem:[%s201 + $0x4] sm:$0xf]
        %v468 = vld [vmem:[%s201 + $0x8] sm:$0xf]
        %v469 = vld [vmem:[%s201 + $0xc] sm:$0xf]
        %v470 = vld [vmem:[%s201 + $0x10] sm:$0xf]
        %v471 = vld [vmem:[%s201 + $0x14] sm:$0xf]
        %v472 = vld [vmem:[%s201 + $0x18] sm:$0xf]
        %v473 = vld [vmem:[%s201 + $0x1c] sm:$0xf]
        %v474 = vld [vmem:[%s201 + $0x20] sm:$0xf]
        %v475 = vld [vmem:[%s201 + $0x24] sm:$0xf]
        %v476 = vld [vmem:[%s201 + $0x28] sm:$0xf]
        %v477 = vld [vmem:[%s201 + $0x2c] sm:$0xf]
        %v478 = vld [vmem:[%s201 + $0x30] sm:$0xf]
        %v479 = vld [vmem:[%s201 + $0x34] sm:$0xf]
        %v480 = vld [vmem:[%s201 + $0x38] sm:$0xf]
        %v481 = vld [vmem:[%s201 + $0x3c] sm:$0xf]
        %v482 = vld [vmem:[%s201 + $0x40] sm:$0xf]
        %v483 = vld [vmem:[%s201 + $0x44] sm:$0xf]
        %v484 = vld [vmem:[%s201 + $0x48] sm:$0xf]
        %v485 = vld [vmem:[%s201 + $0x4c] sm:$0xf]
        %v486 = vld [vmem:[%s201 + $0x50] sm:$0xf]
        %v487 = vld [vmem:[%s201 + $0x54] sm:$0xf]
        %v488 = vld [vmem:[%s201 + $0x58] sm:$0xf]
        %v489 = vld [vmem:[%s201 + $0x5c] sm:$0xf]
        %v490 = vld [vmem:[%s201 + $0x60] sm:$0xf]
        %v491 = vld [vmem:[%s201 + $0x64] sm:$0xf]
        %v492 = vld [vmem:[%s201 + $0x68] sm:$0xf]
        %v493 = vld [vmem:[%s201 + $0x6c] sm:$0xf]
        %v494 = vld [vmem:[%s201 + $0x70] sm:$0xf]
        %v495 = vld [vmem:[%s201 + $0x74] sm:$0xf]
        %v496 = vld [vmem:[%s201 + $0x78] sm:$0xf]
        %v497 = vld [vmem:[%s201 + $0x7c] sm:$0xf]
        %v498 = vld [vmem:[%s201 + $0x80] sm:$0xf]
        %v499 = vld [vmem:[%s201 + $0x84] sm:$0xf]
        %v500 = vld [vmem:[%s201 + $0x88] sm:$0xf]
        %v501 = vld [vmem:[%s201 + $0x8c] sm:$0xf]
        %v502 = vld [vmem:[%s201 + $0x90] sm:$0xf]
        %v503 = vld [vmem:[%s201 + $0x94] sm:$0xf]
        %v504 = vld [vmem:[%s201 + $0x98] sm:$0xf]
        %v505 = vld [vmem:[%s201 + $0x9c] sm:$0xf]
        %v506 = vld [vmem:[%s201 + $0xa0] sm:$0xf]
        %v507 = vld [vmem:[%s201 + $0xa4] sm:$0xf]
        %v508 = vld [vmem:[%s201 + $0xa8] sm:$0xf]
        %v509 = vld [vmem:[%s201 + $0xac] sm:$0xf]
        %v510 = vld [vmem:[%s201 + $0xb0] sm:$0xf]
        %v511 = vld [vmem:[%s201 + $0xb4] sm:$0xf]
        %v512 = vld [vmem:[%s201 + $0xb8] sm:$0xf]
        %v513 = vld [vmem:[%s201 + $0xbc] sm:$0xf]
        %v514 = vld [vmem:[%s201 + $0xc0] sm:$0xf]
        %v515 = vld [vmem:[%s201 + $0xc4] sm:$0xf]
        %v516 = vld [vmem:[%s201 + $0xc8] sm:$0xf]
        %v517 = vld [vmem:[%s201 + $0xcc] sm:$0xf]
        %v518 = vld [vmem:[%s201 + $0xd0] sm:$0xf]
        %v519 = vld [vmem:[%s201 + $0xd4] sm:$0xf]
        %v520 = vld [vmem:[%s201 + $0xd8] sm:$0xf]
        %v521 = vld [vmem:[%s201 + $0xdc] sm:$0xf]
        %v522 = vld [vmem:[%s201 + $0xe0] sm:$0xf]
        %v523 = vld [vmem:[%s201 + $0xe4] sm:$0xf]
        %v524 = vld [vmem:[%s201 + $0xe8] sm:$0xf]
        %v525 = vld [vmem:[%s201 + $0xec] sm:$0xf]
        %v526 = vld [vmem:[%s201 + $0xf0] sm:$0xf]
        %v527 = vld [vmem:[%s201 + $0xf4] sm:$0xf]
        %v528 = vld [vmem:[%s201 + $0xf8] sm:$0xf]
        %v529 = vld [vmem:[%s201 + $0xfc] sm:$0xf]
        %v530 = vld [vmem:[%s201 + $0x100] sm:$0xf]
        %v531 = vld [vmem:[%s201 + $0x104] sm:$0xf]
        %v532 = vld [vmem:[%s201 + $0x108] sm:$0xf]
        %v533 = vld [vmem:[%s201 + $0x10c] sm:$0xf]
        %v534 = vld [vmem:[%s201 + $0x110] sm:$0xf]
        %v535 = vld [vmem:[%s201 + $0x114] sm:$0xf]
        %v536 = vld [vmem:[%s201 + $0x118] sm:$0xf]
        %v537 = vld [vmem:[%s201 + $0x11c] sm:$0xf]
        %v538 = vld [vmem:[%s201 + $0x120] sm:$0xf]
        %v539 = vld [vmem:[%s201 + $0x124] sm:$0xf]
        %v540 = vld [vmem:[%s201 + $0x128] sm:$0xf]
        %v541 = vld [vmem:[%s201 + $0x12c] sm:$0xf]
        %v542 = vld [vmem:[%s201 + $0x130] sm:$0xf]
        %v543 = vld [vmem:[%s201 + $0x134] sm:$0xf]
        %v544 = vld [vmem:[%s201 + $0x138] sm:$0xf]
        %v545 = vld [vmem:[%s201 + $0x13c] sm:$0xf]
        %v546 = vld [vmem:[%s201 + $0x140] sm:$0xf]
        %v547 = vld [vmem:[%s201 + $0x144] sm:$0xf]
        %v548 = vld [vmem:[%s201 + $0x148] sm:$0xf]
        %v549 = vld [vmem:[%s201 + $0x14c] sm:$0xf]
        %v550 = vld [vmem:[%s201 + $0x150] sm:$0xf]
        %v551 = vld [vmem:[%s201 + $0x154] sm:$0xf]
        %v552 = vld [vmem:[%s201 + $0x158] sm:$0xf]
        %v553 = vld [vmem:[%s201 + $0x15c] sm:$0xf]
        %v554 = vld [vmem:[%s201 + $0x160] sm:$0xf]
        %v555 = vld [vmem:[%s201 + $0x164] sm:$0xf]
        %v556 = vld [vmem:[%s201 + $0x168] sm:$0xf]
        %v557 = vld [vmem:[%s201 + $0x16c] sm:$0xf]
        %v558 = vld [vmem:[%s201 + $0x170] sm:$0xf]
        %v559 = vld [vmem:[%s201 + $0x174] sm:$0xf]
        %v560 = vld [vmem:[%s201 + $0x178] sm:$0xf]
        %v561 = vld [vmem:[%s201 + $0x17c] sm:$0xf]
        %v562 = vld [vmem:[%s201 + $0x180] sm:$0xf]
        %v563 = vld [vmem:[%s201 + $0x184] sm:$0xf]
        %v564 = vld [vmem:[%s201 + $0x188] sm:$0xf]
        %v565 = vld [vmem:[%s201 + $0x18c] sm:$0xf]
        %v566 = vld [vmem:[%s201 + $0x190] sm:$0xf]
        %v567 = vld [vmem:[%s201 + $0x194] sm:$0xf]
        %v568 = vld [vmem:[%s201 + $0x198] sm:$0xf]
        %v569 = vld [vmem:[%s201 + $0x19c] sm:$0xf]
        %v570 = vld [vmem:[%s201 + $0x1a0] sm:$0xf]
        %v571 = vld [vmem:[%s201 + $0x1a4] sm:$0xf]
        %v572 = vld [vmem:[%s201 + $0x1a8] sm:$0xf]
        %v573 = vld [vmem:[%s201 + $0x1ac] sm:$0xf]
        %v574 = vld [vmem:[%s201 + $0x1b0] sm:$0xf]
        %v575 = vld [vmem:[%s201 + $0x1b4] sm:$0xf]
        %v576 = vld [vmem:[%s201 + $0x1b8] sm:$0xf]
        %v577 = vld [vmem:[%s201 + $0x1bc] sm:$0xf]
        %v578 = vld [vmem:[%s201 + $0x1c0] sm:$0xf]
        %v579 = vld [vmem:[%s201 + $0x1c4] sm:$0xf]
        %v580 = vld [vmem:[%s201 + $0x1c8] sm:$0xf]
        %v581 = vld [vmem:[%s201 + $0x1cc] sm:$0xf]
        %v582 = vld [vmem:[%s201 + $0x1d0] sm:$0xf]
        %v583 = vld [vmem:[%s201 + $0x1d4] sm:$0xf]
        %v584 = vld [vmem:[%s201 + $0x1d8] sm:$0xf]
        %v585 = vld [vmem:[%s201 + $0x1dc] sm:$0xf]
        %v586 = vld [vmem:[%s201 + $0x1e0] sm:$0xf]
        %v587 = vld [vmem:[%s201 + $0x1e4] sm:$0xf]
        %v588 = vld [vmem:[%s201 + $0x1e8] sm:$0xf]
        %v589 = vld [vmem:[%s201 + $0x1ec] sm:$0xf]
        %v590 = vld [vmem:[%s201 + $0x1f0] sm:$0xf]
        %v591 = vld [vmem:[%s201 + $0x1f4] sm:$0xf]
        %v592 = vld [vmem:[%s201 + $0x1f8] sm:$0xf]
        %v593 = vld [vmem:[%s201 + $0x1fc] sm:$0xf]
        %v594 = vld [vmem:[%s201 + $0x200] sm:$0xf]
        %v595 = vld [vmem:[%s201 + $0x204] sm:$0xf]
        %v596 = vld [vmem:[%s201 + $0x208] sm:$0xf]
        %v597 = vld [vmem:[%s201 + $0x20c] sm:$0xf]
        %v598 = vld [vmem:[%s201 + $0x210] sm:$0xf]
        %v599 = vld [vmem:[%s201 + $0x214] sm:$0xf]
        %v600 = vld [vmem:[%s201 + $0x218] sm:$0xf]
        %v601 = vld [vmem:[%s201 + $0x21c] sm:$0xf]
        %v602 = vld [vmem:[%s201 + $0x220] sm:$0xf]
        %v603 = vld [vmem:[%s201 + $0x224] sm:$0xf]
        %v604 = vld [vmem:[%s201 + $0x228] sm:$0xf]
        %v605 = vld [vmem:[%s201 + $0x22c] sm:$0xf]
        %v606 = vld [vmem:[%s201 + $0x230] sm:$0xf]
        %v607 = vld [vmem:[%s201 + $0x234] sm:$0xf]
        %v608 = vld [vmem:[%s201 + $0x238] sm:$0xf]
        %v609 = vld [vmem:[%s201 + $0x23c] sm:$0xf]
        %v610 = vld [vmem:[%s201 + $0x240] sm:$0xf]
        %v611 = vld [vmem:[%s201 + $0x244] sm:$0xf]
        %v612 = vld [vmem:[%s201 + $0x248] sm:$0xf]
        %v613 = vld [vmem:[%s201 + $0x24c] sm:$0xf]
        %v614 = vld [vmem:[%s201 + $0x250] sm:$0xf]
        %v615 = vld [vmem:[%s201 + $0x254] sm:$0xf]
        %v616 = vld [vmem:[%s201 + $0x258] sm:$0xf]
        %v617 = vld [vmem:[%s201 + $0x25c] sm:$0xf]
        %v618 = vld [vmem:[%s201 + $0x260] sm:$0xf]
        %v619 = vld [vmem:[%s201 + $0x264] sm:$0xf]
        %v620 = vld [vmem:[%s201 + $0x268] sm:$0xf]
        %v621 = vld [vmem:[%s201 + $0x26c] sm:$0xf]
        %v622 = vld [vmem:[%s201 + $0x270] sm:$0xf]
        %v623 = vld [vmem:[%s201 + $0x274] sm:$0xf]
        %v624 = vld [vmem:[%s201 + $0x278] sm:$0xf]
        %v625 = vld [vmem:[%s201 + $0x27c] sm:$0xf]
        %v626 = vld [vmem:[%s201 + $0x280] sm:$0xf]
        %v627 = vld [vmem:[%s201 + $0x284] sm:$0xf]
        %v628 = vld [vmem:[%s201 + $0x288] sm:$0xf]
        %v629 = vld [vmem:[%s201 + $0x28c] sm:$0xf]
        %v630 = vld [vmem:[%s201 + $0x290] sm:$0xf]
        %v631 = vld [vmem:[%s201 + $0x294] sm:$0xf]
        %v632 = vld [vmem:[%s201 + $0x298] sm:$0xf]
        %v633 = vld [vmem:[%s201 + $0x29c] sm:$0xf]
        %v634 = vld [vmem:[%s201 + $0x2a0] sm:$0xf]
        %v635 = vld [vmem:[%s201 + $0x2a4] sm:$0xf]
        %v636 = vld [vmem:[%s201 + $0x2a8] sm:$0xf]
        %v637 = vld [vmem:[%s201 + $0x2ac] sm:$0xf]
        %v638 = vld [vmem:[%s201 + $0x2b0] sm:$0xf]
        %v639 = vld [vmem:[%s201 + $0x2b4] sm:$0xf]
        %v640 = vld [vmem:[%s201 + $0x2b8] sm:$0xf]
        %v641 = vld [vmem:[%s201 + $0x2bc] sm:$0xf]
        %v642 = vld [vmem:[%s201 + $0x2c0] sm:$0xf]
        %v643 = vld [vmem:[%s201 + $0x2c4] sm:$0xf]
        %v644 = vld [vmem:[%s201 + $0x2c8] sm:$0xf]
        %v645 = vld [vmem:[%s201 + $0x2cc] sm:$0xf]
        %v646 = vld [vmem:[%s201 + $0x2d0] sm:$0xf]
        %v647 = vld [vmem:[%s201 + $0x2d4] sm:$0xf]
        %v648 = vld [vmem:[%s201 + $0x2d8] sm:$0xf]
        %v649 = vld [vmem:[%s201 + $0x2dc] sm:$0xf]
        %v650 = vld [vmem:[%s201 + $0x2e0] sm:$0xf]
        %v651 = vld [vmem:[%s201 + $0x2e4] sm:$0xf]
        %v652 = vld [vmem:[%s201 + $0x2e8] sm:$0xf]
        %v653 = vld [vmem:[%s201 + $0x2ec] sm:$0xf]
        %v654 = vld [vmem:[%s201 + $0x2f0] sm:$0xf]
        %v655 = vld [vmem:[%s201 + $0x2f4] sm:$0xf]
        %v656 = vld [vmem:[%s201 + $0x2f8] sm:$0xf]
        %v657 = vld [vmem:[%s201 + $0x2fc] sm:$0xf]
        %v658 = vld [vmem:[%s201 + $0x300] sm:$0xf]
        %v659 = vld [vmem:[%s201 + $0x304] sm:$0xf]
        %v660 = vld [vmem:[%s201 + $0x308] sm:$0xf]
        %v661 = vld [vmem:[%s201 + $0x30c] sm:$0xf]
        %v662 = vld [vmem:[%s201 + $0x310] sm:$0xf]
        %v663 = vld [vmem:[%s201 + $0x314] sm:$0xf]
        %v664 = vld [vmem:[%s201 + $0x318] sm:$0xf]
        %v665 = vld [vmem:[%s201 + $0x31c] sm:$0xf]
        %v666 = vld [vmem:[%s201 + $0x320] sm:$0xf]
        %v667 = vld [vmem:[%s201 + $0x324] sm:$0xf]
        %v668 = vld [vmem:[%s201 + $0x328] sm:$0xf]
        %v669 = vld [vmem:[%s201 + $0x32c] sm:$0xf]
        %v670 = vld [vmem:[%s201 + $0x330] sm:$0xf]
        %v671 = vld [vmem:[%s201 + $0x334] sm:$0xf]
        %v672 = vld [vmem:[%s201 + $0x338] sm:$0xf]
        %v673 = vld [vmem:[%s201 + $0x33c] sm:$0xf]
        %v674 = vld [vmem:[%s201 + $0x340] sm:$0xf]
        %v675 = vld [vmem:[%s201 + $0x344] sm:$0xf]
        %v676 = vld [vmem:[%s201 + $0x348] sm:$0xf]
        %v677 = vld [vmem:[%s201 + $0x34c] sm:$0xf]
        %v678 = vld [vmem:[%s201 + $0x350] sm:$0xf]
        %v679 = vld [vmem:[%s201 + $0x354] sm:$0xf]
        %v680 = vld [vmem:[%s201 + $0x358] sm:$0xf]
        %v681 = vld [vmem:[%s201 + $0x35c] sm:$0xf]
        %v682 = vld [vmem:[%s201 + $0x360] sm:$0xf]
        %v683 = vld [vmem:[%s201 + $0x364] sm:$0xf]
        %v684 = vld [vmem:[%s201 + $0x368] sm:$0xf]
        %v685 = vld [vmem:[%s201 + $0x36c] sm:$0xf]
        %v686 = vld [vmem:[%s201 + $0x370] sm:$0xf]
        %v687 = vld [vmem:[%s201 + $0x374] sm:$0xf]
        %v688 = vld [vmem:[%s201 + $0x378] sm:$0xf]
        %v689 = vld [vmem:[%s201 + $0x37c] sm:$0xf]
        %v690 = vld [vmem:[%s201 + $0x380] sm:$0xf]
        %v691 = vld [vmem:[%s201 + $0x384] sm:$0xf]
        %v692 = vld [vmem:[%s201 + $0x388] sm:$0xf]
        %v693 = vld [vmem:[%s201 + $0x38c] sm:$0xf]
        %v694 = vld [vmem:[%s201 + $0x390] sm:$0xf]
        %v695 = vld [vmem:[%s201 + $0x394] sm:$0xf]
        %v696 = vld [vmem:[%s201 + $0x398] sm:$0xf]
        %v697 = vld [vmem:[%s201 + $0x39c] sm:$0xf]
        %v698 = vld [vmem:[%s201 + $0x3a0] sm:$0xf]
        %v699 = vld [vmem:[%s201 + $0x3a4] sm:$0xf]
        %v700 = vld [vmem:[%s201 + $0x3a8] sm:$0xf]
        %v701 = vld [vmem:[%s201 + $0x3ac] sm:$0xf]
        %v702 = vld [vmem:[%s201 + $0x3b0] sm:$0xf]
        %v703 = vld [vmem:[%s201 + $0x3b4] sm:$0xf]
        %v704 = vld [vmem:[%s201 + $0x3b8] sm:$0xf]
        %v705 = vld [vmem:[%s201 + $0x3bc] sm:$0xf]
        %v706 = vld [vmem:[%s201 + $0x3c0] sm:$0xf]
        %v707 = vld [vmem:[%s201 + $0x3c4] sm:$0xf]
        %v708 = vld [vmem:[%s201 + $0x3c8] sm:$0xf]
        %v709 = vld [vmem:[%s201 + $0x3cc] sm:$0xf]
        %v710 = vld [vmem:[%s201 + $0x3d0] sm:$0xf]
        %v711 = vld [vmem:[%s201 + $0x3d4] sm:$0xf]
        %v712 = vld [vmem:[%s201 + $0x3d8] sm:$0xf]
        %v713 = vld [vmem:[%s201 + $0x3dc] sm:$0xf]
        %v714 = vld [vmem:[%s201 + $0x3e0] sm:$0xf]
        %v715 = vld [vmem:[%s201 + $0x3e4] sm:$0xf]
        %v716 = vld [vmem:[%s201 + $0x3e8] sm:$0xf]
        %v717 = vld [vmem:[%s201 + $0x3ec] sm:$0xf]
        %v718 = vld [vmem:[%s201 + $0x3f0] sm:$0xf]
        %v719 = vld [vmem:[%s201 + $0x3f4] sm:$0xf]
        %v720 = vld [vmem:[%s201 + $0x3f8] sm:$0xf]
        %v721 = vld [vmem:[%s201 + $0x3fc] sm:$0xf]
        %v722 = vld [vmem:[%s201 + $0x400] sm:$0xf]
        %v723 = vld [vmem:[%s201 + $0x404] sm:$0xf]
        %v724 = vld [vmem:[%s201 + $0x408] sm:$0xf]
        %v725 = vld [vmem:[%s201 + $0x40c] sm:$0xf]
        %v726 = vld [vmem:[%s201 + $0x410] sm:$0xf]
        %v727 = vld [vmem:[%s201 + $0x414] sm:$0xf]
        %v728 = vld [vmem:[%s201 + $0x418] sm:$0xf]
        %v729 = vld [vmem:[%s201 + $0x41c] sm:$0xf]
        %v730 = vld [vmem:[%s201 + $0x420] sm:$0xf]
        %v731 = vld [vmem:[%s201 + $0x424] sm:$0xf]
        %v732 = vld [vmem:[%s201 + $0x428] sm:$0xf]
        %v733 = vld [vmem:[%s201 + $0x42c] sm:$0xf]
        %v734 = vld [vmem:[%s201 + $0x430] sm:$0xf]
        %v735 = vld [vmem:[%s201 + $0x434] sm:$0xf]
        %v736 = vld [vmem:[%s201 + $0x438] sm:$0xf]
        %v737 = vld [vmem:[%s201 + $0x43c] sm:$0xf]
        %v738 = vld [vmem:[%s201 + $0x440] sm:$0xf]
        %v739 = vld [vmem:[%s201 + $0x444] sm:$0xf]
        %v740 = vld [vmem:[%s201 + $0x448] sm:$0xf]
        %v741 = vld [vmem:[%s201 + $0x44c] sm:$0xf]
        %v742 = vld [vmem:[%s201 + $0x450] sm:$0xf]
        %v743 = vld [vmem:[%s201 + $0x454] sm:$0xf]
        %v744 = vld [vmem:[%s201 + $0x458] sm:$0xf]
        %v745 = vld [vmem:[%s201 + $0x45c] sm:$0xf]
        %v746 = vld [vmem:[%s201 + $0x460] sm:$0xf]
        %v747 = vld [vmem:[%s201 + $0x464] sm:$0xf]
        %v748 = vld [vmem:[%s201 + $0x468] sm:$0xf]
        %v749 = vld [vmem:[%s201 + $0x46c] sm:$0xf]
        %v750 = vld [vmem:[%s201 + $0x470] sm:$0xf]
        %v751 = vld [vmem:[%s201 + $0x474] sm:$0xf]
        %v752 = vld [vmem:[%s201 + $0x478] sm:$0xf]
        %v753 = vld [vmem:[%s201 + $0x47c] sm:$0xf]
        %v754 = vld [vmem:[%s201 + $0x480] sm:$0xf]
        %v755 = vld [vmem:[%s201 + $0x484] sm:$0xf]
        %v756 = vld [vmem:[%s201 + $0x488] sm:$0xf]
        %v757 = vld [vmem:[%s201 + $0x48c] sm:$0xf]
        %v758 = vld [vmem:[%s201 + $0x490] sm:$0xf]
        %v759 = vld [vmem:[%s201 + $0x494] sm:$0xf]
        %v760 = vld [vmem:[%s201 + $0x498] sm:$0xf]
        %v761 = vld [vmem:[%s201 + $0x49c] sm:$0xf]
        %v762 = vld [vmem:[%s201 + $0x4a0] sm:$0xf]
        %v763 = vld [vmem:[%s201 + $0x4a4] sm:$0xf]
        %v764 = vld [vmem:[%s201 + $0x4a8] sm:$0xf]
        %v765 = vld [vmem:[%s201 + $0x4ac] sm:$0xf]
        %v766 = vld [vmem:[%s201 + $0x4b0] sm:$0xf]
        %v767 = vld [vmem:[%s201 + $0x4b4] sm:$0xf]
        %v768 = vld [vmem:[%s201 + $0x4b8] sm:$0xf]
        %v769 = vld [vmem:[%s201 + $0x4bc] sm:$0xf]
        %v770 = vld [vmem:[%s201 + $0x4c0] sm:$0xf]
        %v771 = vld [vmem:[%s201 + $0x4c4] sm:$0xf]
        %v772 = vld [vmem:[%s201 + $0x4c8] sm:$0xf]
        %v773 = vld [vmem:[%s201 + $0x4cc] sm:$0xf]
        %v774 = vld [vmem:[%s201 + $0x4d0] sm:$0xf]
        %v775 = vld [vmem:[%s201 + $0x4d4] sm:$0xf]
        %v776 = vld [vmem:[%s201 + $0x4d8] sm:$0xf]
        %v777 = vld [vmem:[%s201 + $0x4dc] sm:$0xf]
        %v778 = vld [vmem:[%s201 + $0x4e0] sm:$0xf]
        %v779 = vld [vmem:[%s201 + $0x4e4] sm:$0xf]
        %v780 = vld [vmem:[%s201 + $0x4e8] sm:$0xf]
        %v781 = vld [vmem:[%s201 + $0x4ec] sm:$0xf]
        %v782 = vld [vmem:[%s201 + $0x4f0] sm:$0xf]
        %v783 = vld [vmem:[%s201 + $0x4f4] sm:$0xf]
        %v784 = vld [vmem:[%s201 + $0x4f8] sm:$0xf]
        %v785 = vld [vmem:[%s201 + $0x4fc] sm:$0xf]
        %v786 = vld [vmem:[%s201 + $0x500] sm:$0xf]
        %v787 = vld [vmem:[%s201 + $0x504] sm:$0xf]
        %v788 = vld [vmem:[%s201 + $0x508] sm:$0xf]
        %v789 = vld [vmem:[%s201 + $0x50c] sm:$0xf]
        %v790 = vld [vmem:[%s201 + $0x510] sm:$0xf]
        %v791 = vld [vmem:[%s201 + $0x514] sm:$0xf]
        %v792 = vld [vmem:[%s201 + $0x518] sm:$0xf]
        %v793 = vld [vmem:[%s201 + $0x51c] sm:$0xf]
        %v794 = vld [vmem:[%s201 + $0x520] sm:$0xf]
        %v795 = vld [vmem:[%s201 + $0x524] sm:$0xf]
        %v796 = vld [vmem:[%s201 + $0x528] sm:$0xf]
        %v797 = vld [vmem:[%s201 + $0x52c] sm:$0xf]
        %v798 = vld [vmem:[%s201 + $0x530] sm:$0xf]
        %v799 = vld [vmem:[%s201 + $0x534] sm:$0xf]
        %v800 = vld [vmem:[%s201 + $0x538] sm:$0xf]
        %v801 = vld [vmem:[%s201 + $0x53c] sm:$0xf]
        %v802 = vld [vmem:[%s201 + $0x540] sm:$0xf]
        %v803 = vld [vmem:[%s201 + $0x544] sm:$0xf]
        %v804 = vld [vmem:[%s201 + $0x548] sm:$0xf]
        %v805 = vld [vmem:[%s201 + $0x54c] sm:$0xf]
        %v806 = vld [vmem:[%s201 + $0x550] sm:$0xf]
        %v807 = vld [vmem:[%s201 + $0x554] sm:$0xf]
        %v808 = vld [vmem:[%s201 + $0x558] sm:$0xf]
        %v809 = vld [vmem:[%s201 + $0x55c] sm:$0xf]
        %v810 = vld [vmem:[%s201 + $0x560] sm:$0xf]
        %v811 = vld [vmem:[%s201 + $0x564] sm:$0xf]
        %v812 = vld [vmem:[%s201 + $0x568] sm:$0xf]
        %v813 = vld [vmem:[%s201 + $0x56c] sm:$0xf]
        %v814 = vld [vmem:[%s201 + $0x570] sm:$0xf]
        %v815 = vld [vmem:[%s201 + $0x574] sm:$0xf]
        %v816 = vld [vmem:[%s201 + $0x578] sm:$0xf]
        %v817 = vld [vmem:[%s201 + $0x57c] sm:$0xf]
        %v818 = vld [vmem:[%s201 + $0x580] sm:$0xf]
        %v819 = vld [vmem:[%s201 + $0x584] sm:$0xf]
        %v820 = vld [vmem:[%s201 + $0x588] sm:$0xf]
        %v821 = vld [vmem:[%s201 + $0x58c] sm:$0xf]
        %v822 = vld [vmem:[%s201 + $0x590] sm:$0xf]
        %v823 = vld [vmem:[%s201 + $0x594] sm:$0xf]
        %v824 = vld [vmem:[%s201 + $0x598] sm:$0xf]
        %v825 = vld [vmem:[%s201 + $0x59c] sm:$0xf]
        %v826 = vld [vmem:[%s201 + $0x5a0] sm:$0xf]
        %v827 = vld [vmem:[%s201 + $0x5a4] sm:$0xf]
        %v828 = vld [vmem:[%s201 + $0x5a8] sm:$0xf]
        %v829 = vld [vmem:[%s201 + $0x5ac] sm:$0xf]
        %v830 = vld [vmem:[%s201 + $0x5b0] sm:$0xf]
        %v831 = vld [vmem:[%s201 + $0x5b4] sm:$0xf]
        %v832 = vld [vmem:[%s201 + $0x5b8] sm:$0xf]
        %v833 = vld [vmem:[%s201 + $0x5bc] sm:$0xf]
        %v834 = vld [vmem:[%s201 + $0x5c0] sm:$0xf]
        %v835 = vld [vmem:[%s201 + $0x5c4] sm:$0xf]
        %v836 = vld [vmem:[%s201 + $0x5c8] sm:$0xf]
        %v837 = vld [vmem:[%s201 + $0x5cc] sm:$0xf]
        %v838 = vld [vmem:[%s201 + $0x5d0] sm:$0xf]
        %v839 = vld [vmem:[%s201 + $0x5d4] sm:$0xf]
        %v840 = vld [vmem:[%s201 + $0x5d8] sm:$0xf]
        %v841 = vld [vmem:[%s201 + $0x5dc] sm:$0xf]
        %v842 = vld [vmem:[%s201 + $0x5e0] sm:$0xf]
        %v843 = vld [vmem:[%s201 + $0x5e4] sm:$0xf]
        %v844 = vld [vmem:[%s201 + $0x5e8] sm:$0xf]
        %v845 = vld [vmem:[%s201 + $0x5ec] sm:$0xf]
        %v846 = vld [vmem:[%s201 + $0x5f0] sm:$0xf]
        %v847 = vld [vmem:[%s201 + $0x5f4] sm:$0xf]
        %v848 = vld [vmem:[%s201 + $0x5f8] sm:$0xf]
        %v849 = vld [vmem:[%s201 + $0x5fc] sm:$0xf]
        %v850 = vld [vmem:[%s201 + $0x600] sm:$0xf]
        %v851 = vld [vmem:[%s201 + $0x604] sm:$0xf]
        %v852 = vld [vmem:[%s201 + $0x608] sm:$0xf]
        %v853 = vld [vmem:[%s201 + $0x60c] sm:$0xf]
        %v854 = vld [vmem:[%s201 + $0x610] sm:$0xf]
        %v855 = vld [vmem:[%s201 + $0x614] sm:$0xf]
        %v856 = vld [vmem:[%s201 + $0x618] sm:$0xf]
        %v857 = vld [vmem:[%s201 + $0x61c] sm:$0xf]
        %v858 = vld [vmem:[%s201 + $0x620] sm:$0xf]
        %v859 = vld [vmem:[%s201 + $0x624] sm:$0xf]
        %v860 = vld [vmem:[%s201 + $0x628] sm:$0xf]
        %v861 = vld [vmem:[%s201 + $0x62c] sm:$0xf]
        %v862 = vld [vmem:[%s201 + $0x630] sm:$0xf]
        %v863 = vld [vmem:[%s201 + $0x634] sm:$0xf]
        %v864 = vld [vmem:[%s201 + $0x638] sm:$0xf]
        %v865 = vld [vmem:[%s201 + $0x63c] sm:$0xf]
        %v866 = vld [vmem:[%s201 + $0x640] sm:$0xf]
        %v867 = vld [vmem:[%s201 + $0x644] sm:$0xf]
        %v868 = vld [vmem:[%s201 + $0x648] sm:$0xf]
        %v869 = vld [vmem:[%s201 + $0x64c] sm:$0xf]
        %v870 = vld [vmem:[%s201 + $0x650] sm:$0xf]
        %v871 = vld [vmem:[%s201 + $0x654] sm:$0xf]
        %v872 = vld [vmem:[%s201 + $0x658] sm:$0xf]
        %v873 = vld [vmem:[%s201 + $0x65c] sm:$0xf]
        %v874 = vld [vmem:[%s201 + $0x660] sm:$0xf]
        %v875 = vld [vmem:[%s201 + $0x664] sm:$0xf]
        %v876 = vld [vmem:[%s201 + $0x668] sm:$0xf]
        %v877 = vld [vmem:[%s201 + $0x66c] sm:$0xf]
        %v878 = vld [vmem:[%s201 + $0x670] sm:$0xf]
        %v879 = vld [vmem:[%s201 + $0x674] sm:$0xf]
        %v880 = vld [vmem:[%s201 + $0x678] sm:$0xf]
        %v881 = vld [vmem:[%s201 + $0x67c] sm:$0xf]
        %v882 = vld [vmem:[%s201 + $0x680] sm:$0xf]
        %v883 = vld [vmem:[%s201 + $0x684] sm:$0xf]
        %v884 = vld [vmem:[%s201 + $0x688] sm:$0xf]
        %v885 = vld [vmem:[%s201 + $0x68c] sm:$0xf]
        %v886 = vld [vmem:[%s201 + $0x690] sm:$0xf]
        %v887 = vld [vmem:[%s201 + $0x694] sm:$0xf]
        %v888 = vld [vmem:[%s201 + $0x698] sm:$0xf]
        %v889 = vld [vmem:[%s201 + $0x69c] sm:$0xf]
        %v890 = vld [vmem:[%s201 + $0x6a0] sm:$0xf]
        %v891 = vld [vmem:[%s201 + $0x6a4] sm:$0xf]
        %v892 = vld [vmem:[%s201 + $0x6a8] sm:$0xf]
        %v893 = vld [vmem:[%s201 + $0x6ac] sm:$0xf]
        %v894 = vld [vmem:[%s201 + $0x6b0] sm:$0xf]
        %v895 = vld [vmem:[%s201 + $0x6b4] sm:$0xf]
        %v896 = vld [vmem:[%s201 + $0x6b8] sm:$0xf]
        %v897 = vld [vmem:[%s201 + $0x6bc] sm:$0xf]
        %v898 = vld [vmem:[%s201 + $0x6c0] sm:$0xf]
        %v899 = vld [vmem:[%s201 + $0x6c4] sm:$0xf]
        %v900 = vld [vmem:[%s201 + $0x6c8] sm:$0xf]
        %v901 = vld [vmem:[%s201 + $0x6cc] sm:$0xf]
        %v902 = vld [vmem:[%s201 + $0x6d0] sm:$0xf]
        %v903 = vld [vmem:[%s201 + $0x6d4] sm:$0xf]
        %v904 = vld [vmem:[%s201 + $0x6d8] sm:$0xf]
        %v905 = vld [vmem:[%s201 + $0x6dc] sm:$0xf]
        %v906 = vld [vmem:[%s201 + $0x6e0] sm:$0xf]
        %v907 = vld [vmem:[%s201 + $0x6e4] sm:$0xf]
        %v908 = vld [vmem:[%s201 + $0x6e8] sm:$0xf]
        %v909 = vld [vmem:[%s201 + $0x6ec] sm:$0xf]
        %v910 = vld [vmem:[%s201 + $0x6f0] sm:$0xf]
        %v911 = vld [vmem:[%s201 + $0x6f4] sm:$0xf]
        %v912 = vld [vmem:[%s201 + $0x6f8] sm:$0xf]
        %v913 = vld [vmem:[%s201 + $0x6fc] sm:$0xf]
        %v914 = vld [vmem:[%s201 + $0x700] sm:$0xf]
        %v915 = vld [vmem:[%s201 + $0x704] sm:$0xf]
        %v916 = vld [vmem:[%s201 + $0x708] sm:$0xf]
        %v917 = vld [vmem:[%s201 + $0x70c] sm:$0xf]
        %v918 = vld [vmem:[%s201 + $0x710] sm:$0xf]
        %v919 = vld [vmem:[%s201 + $0x714] sm:$0xf]
        %v920 = vld [vmem:[%s201 + $0x718] sm:$0xf]
        %v921 = vld [vmem:[%s201 + $0x71c] sm:$0xf]
        %v922 = vld [vmem:[%s201 + $0x720] sm:$0xf]
        %v923 = vld [vmem:[%s201 + $0x724] sm:$0xf]
        %v924 = vld [vmem:[%s201 + $0x728] sm:$0xf]
        %v925 = vld [vmem:[%s201 + $0x72c] sm:$0xf]
        %v926 = vld [vmem:[%s201 + $0x730] sm:$0xf]
        %v927 = vld [vmem:[%s201 + $0x734] sm:$0xf]
        %v928 = vld [vmem:[%s201 + $0x738] sm:$0xf]
        %v929 = vld [vmem:[%s201 + $0x73c] sm:$0xf]
        %v930 = vld [vmem:[%s201 + $0x740] sm:$0xf]
        %v931 = vld [vmem:[%s201 + $0x744] sm:$0xf]
        %v932 = vld [vmem:[%s201 + $0x748] sm:$0xf]
        %v933 = vld [vmem:[%s201 + $0x74c] sm:$0xf]
        %v934 = vld [vmem:[%s201 + $0x750] sm:$0xf]
        %v935 = vld [vmem:[%s201 + $0x754] sm:$0xf]
        %v936 = vld [vmem:[%s201 + $0x758] sm:$0xf]
        %v937 = vld [vmem:[%s201 + $0x75c] sm:$0xf]
        %v938 = vld [vmem:[%s201 + $0x760] sm:$0xf]
        %v939 = vld [vmem:[%s201 + $0x764] sm:$0xf]
        %v940 = vld [vmem:[%s201 + $0x768] sm:$0xf]
        %v941 = vld [vmem:[%s201 + $0x76c] sm:$0xf]
        %v942 = vld [vmem:[%s201 + $0x770] sm:$0xf]
        %v943 = vld [vmem:[%s201 + $0x774] sm:$0xf]
        %v944 = vld [vmem:[%s201 + $0x778] sm:$0xf]
        %v945 = vld [vmem:[%s201 + $0x77c] sm:$0xf]
        %v946 = vld [vmem:[%s201 + $0x780] sm:$0xf]
        %v947 = vld [vmem:[%s201 + $0x784] sm:$0xf]
        %v948 = vld [vmem:[%s201 + $0x788] sm:$0xf]
        %v949 = vld [vmem:[%s201 + $0x78c] sm:$0xf]
        %v950 = vld [vmem:[%s201 + $0x790] sm:$0xf]
        %v951 = vld [vmem:[%s201 + $0x794] sm:$0xf]
        %v952 = vld [vmem:[%s201 + $0x798] sm:$0xf]
        %v953 = vld [vmem:[%s201 + $0x79c] sm:$0xf]
        %v954 = vld [vmem:[%s201 + $0x7a0] sm:$0xf]
        %v955 = vld [vmem:[%s201 + $0x7a4] sm:$0xf]
        %v956 = vld [vmem:[%s201 + $0x7a8] sm:$0xf]
        %v957 = vld [vmem:[%s201 + $0x7ac] sm:$0xf]
        %v958 = vld [vmem:[%s201 + $0x7b0] sm:$0xf]
        %v959 = vld [vmem:[%s201 + $0x7b4] sm:$0xf]
        %v960 = vld [vmem:[%s201 + $0x7b8] sm:$0xf]
        %v961 = vld [vmem:[%s201 + $0x7bc] sm:$0xf]
        %v962 = vld [vmem:[%s201 + $0x7c0] sm:$0xf]
        %v963 = vld [vmem:[%s201 + $0x7c4] sm:$0xf]
        %v964 = vld [vmem:[%s201 + $0x7c8] sm:$0xf]
        %v965 = vld [vmem:[%s201 + $0x7cc] sm:$0xf]
        %v966 = vld [vmem:[%s201 + $0x7d0] sm:$0xf]
        %v967 = vld [vmem:[%s201 + $0x7d4] sm:$0xf]
        %v968 = vld [vmem:[%s201 + $0x7d8] sm:$0xf]
        %v969 = vld [vmem:[%s201 + $0x7dc] sm:$0xf]
        %v970 = vld [vmem:[%s201 + $0x7e0] sm:$0xf]
        %v971 = vld [vmem:[%s201 + $0x7e4] sm:$0xf]
        %v972 = vld [vmem:[%s201 + $0x7e8] sm:$0xf]
        %v973 = vld [vmem:[%s201 + $0x7ec] sm:$0xf]
        %v974 = vld [vmem:[%s201 + $0x7f0] sm:$0xf]
        %v975 = vld [vmem:[%s201 + $0x7f4] sm:$0xf]
        %v976 = vld [vmem:[%s201 + $0x7f8] sm:$0xf]
        %v977 = vld [vmem:[%s201 + $0x7fc] sm:$0xf]
        %v1490 = vunpack.c.l.b16 %v466
        %v1491 = vunpack.c.l.b16 %v467
        %v1492 = vunpack.c.l.b16 %v468
        %v1493 = vunpack.c.l.b16 %v469
        %v1494 = vunpack.c.l.b16 %v470
        %v1495 = vunpack.c.l.b16 %v471
        %v1496 = vunpack.c.l.b16 %v472
        %v1497 = vunpack.c.l.b16 %v473
        %v1498 = vunpack.c.l.b16 %v474
        %v1499 = vunpack.c.l.b16 %v475
        %v1500 = vunpack.c.l.b16 %v476
        %v1501 = vunpack.c.l.b16 %v477
        %v1502 = vunpack.c.l.b16 %v478
        %v1503 = vunpack.c.l.b16 %v479
        %v1504 = vunpack.c.l.b16 %v480
        %v1505 = vunpack.c.l.b16 %v481
        %v1506 = vunpack.c.l.b16 %v482
        %v1507 = vunpack.c.l.b16 %v483
        %v1508 = vunpack.c.l.b16 %v484
        %v1509 = vunpack.c.l.b16 %v485
        %v1510 = vunpack.c.l.b16 %v486
        %v1511 = vunpack.c.l.b16 %v487
        %v1512 = vunpack.c.l.b16 %v488
        %v1513 = vunpack.c.l.b16 %v489
        %v1514 = vunpack.c.l.b16 %v490
        %v1515 = vunpack.c.l.b16 %v491
        %v1516 = vunpack.c.l.b16 %v492
        %v1517 = vunpack.c.l.b16 %v493
        %v1518 = vunpack.c.l.b16 %v494
        %v1519 = vunpack.c.l.b16 %v495
        %v1520 = vunpack.c.l.b16 %v496
        %v1521 = vunpack.c.l.b16 %v497
        %v1522 = vunpack.c.l.b16 %v498
        %v1523 = vunpack.c.l.b16 %v499
        %v1524 = vunpack.c.l.b16 %v500
        %v1525 = vunpack.c.l.b16 %v501
        %v1526 = vunpack.c.l.b16 %v502
        %v1527 = vunpack.c.l.b16 %v503
        %v1528 = vunpack.c.l.b16 %v504
        %v1529 = vunpack.c.l.b16 %v505
        %v1530 = vunpack.c.l.b16 %v506
        %v1531 = vunpack.c.l.b16 %v507
        %v1532 = vunpack.c.l.b16 %v508
        %v1533 = vunpack.c.l.b16 %v509
        %v1534 = vunpack.c.l.b16 %v510
        %v1535 = vunpack.c.l.b16 %v511
        %v1536 = vunpack.c.l.b16 %v512
        %v1537 = vunpack.c.l.b16 %v513
        %v1538 = vunpack.c.l.b16 %v514
        %v1539 = vunpack.c.l.b16 %v515
        %v1540 = vunpack.c.l.b16 %v516
        %v1541 = vunpack.c.l.b16 %v517
        %v1542 = vunpack.c.l.b16 %v518
        %v1543 = vunpack.c.l.b16 %v519
        %v1544 = vunpack.c.l.b16 %v520
        %v1545 = vunpack.c.l.b16 %v521
        %v1546 = vunpack.c.l.b16 %v522
        %v1547 = vunpack.c.l.b16 %v523
        %v1548 = vunpack.c.l.b16 %v524
        %v1549 = vunpack.c.l.b16 %v525
        %v1550 = vunpack.c.l.b16 %v526
        %v1551 = vunpack.c.l.b16 %v527
        %v1552 = vunpack.c.l.b16 %v528
        %v1553 = vunpack.c.l.b16 %v529
        %v1554 = vunpack.c.l.b16 %v530
        %v1555 = vunpack.c.l.b16 %v531
        %v1556 = vunpack.c.l.b16 %v532
        %v1557 = vunpack.c.l.b16 %v533
        %v1558 = vunpack.c.l.b16 %v534
        %v1559 = vunpack.c.l.b16 %v535
        %v1560 = vunpack.c.l.b16 %v536
        %v1561 = vunpack.c.l.b16 %v537
        %v1562 = vunpack.c.l.b16 %v538
        %v1563 = vunpack.c.l.b16 %v539
        %v1564 = vunpack.c.l.b16 %v540
        %v1565 = vunpack.c.l.b16 %v541
        %v1566 = vunpack.c.l.b16 %v542
        %v1567 = vunpack.c.l.b16 %v543
        %v1568 = vunpack.c.l.b16 %v544
        %v1569 = vunpack.c.l.b16 %v545
        %v1570 = vunpack.c.l.b16 %v546
        %v1571 = vunpack.c.l.b16 %v547
        %v1572 = vunpack.c.l.b16 %v548
        %v1573 = vunpack.c.l.b16 %v549
        %v1574 = vunpack.c.l.b16 %v550
        %v1575 = vunpack.c.l.b16 %v551
        %v1576 = vunpack.c.l.b16 %v552
        %v1577 = vunpack.c.l.b16 %v553
        %v1578 = vunpack.c.l.b16 %v554
        %v1579 = vunpack.c.l.b16 %v555
        %v1580 = vunpack.c.l.b16 %v556
        %v1581 = vunpack.c.l.b16 %v557
        %v1582 = vunpack.c.l.b16 %v558
        %v1583 = vunpack.c.l.b16 %v559
        %v1584 = vunpack.c.l.b16 %v560
        %v1585 = vunpack.c.l.b16 %v561
        %v1586 = vunpack.c.l.b16 %v562
        %v1587 = vunpack.c.l.b16 %v563
        %v1588 = vunpack.c.l.b16 %v564
        %v1589 = vunpack.c.l.b16 %v565
        %v1590 = vunpack.c.l.b16 %v566
        %v1591 = vunpack.c.l.b16 %v567
        %v1592 = vunpack.c.l.b16 %v568
        %v1593 = vunpack.c.l.b16 %v569
        %v1594 = vunpack.c.l.b16 %v570
        %v1595 = vunpack.c.l.b16 %v571
        %v1596 = vunpack.c.l.b16 %v572
        %v1597 = vunpack.c.l.b16 %v573
        %v1598 = vunpack.c.l.b16 %v574
        %v1599 = vunpack.c.l.b16 %v575
        %v1600 = vunpack.c.l.b16 %v576
        %v1601 = vunpack.c.l.b16 %v577
        %v1602 = vunpack.c.l.b16 %v578
        %v1603 = vunpack.c.l.b16 %v579
        %v1604 = vunpack.c.l.b16 %v580
        %v1605 = vunpack.c.l.b16 %v581
        %v1606 = vunpack.c.l.b16 %v582
        %v1607 = vunpack.c.l.b16 %v583
        %v1608 = vunpack.c.l.b16 %v584
        %v1609 = vunpack.c.l.b16 %v585
        %v1610 = vunpack.c.l.b16 %v586
        %v1611 = vunpack.c.l.b16 %v587
        %v1612 = vunpack.c.l.b16 %v588
        %v1613 = vunpack.c.l.b16 %v589
        %v1614 = vunpack.c.l.b16 %v590
        %v1615 = vunpack.c.l.b16 %v591
        %v1616 = vunpack.c.l.b16 %v592
        %v1617 = vunpack.c.l.b16 %v593
        %v1618 = vunpack.c.l.b16 %v594
        %v1619 = vunpack.c.l.b16 %v595
        %v1620 = vunpack.c.l.b16 %v596
        %v1621 = vunpack.c.l.b16 %v597
        %v1622 = vunpack.c.l.b16 %v598
        %v1623 = vunpack.c.l.b16 %v599
        %v1624 = vunpack.c.l.b16 %v600
        %v1625 = vunpack.c.l.b16 %v601
        %v1626 = vunpack.c.l.b16 %v602
        %v1627 = vunpack.c.l.b16 %v603
        %v1628 = vunpack.c.l.b16 %v604
        %v1629 = vunpack.c.l.b16 %v605
        %v1630 = vunpack.c.l.b16 %v606
        %v1631 = vunpack.c.l.b16 %v607
        %v1632 = vunpack.c.l.b16 %v608
        %v1633 = vunpack.c.l.b16 %v609
        %v1634 = vunpack.c.l.b16 %v610
        %v1635 = vunpack.c.l.b16 %v611
        %v1636 = vunpack.c.l.b16 %v612
        %v1637 = vunpack.c.l.b16 %v613
        %v1638 = vunpack.c.l.b16 %v614
        %v1639 = vunpack.c.l.b16 %v615
        %v1640 = vunpack.c.l.b16 %v616
        %v1641 = vunpack.c.l.b16 %v617
        %v1642 = vunpack.c.l.b16 %v618
        %v1643 = vunpack.c.l.b16 %v619
        %v1644 = vunpack.c.l.b16 %v620
        %v1645 = vunpack.c.l.b16 %v621
        %v1646 = vunpack.c.l.b16 %v622
        %v1647 = vunpack.c.l.b16 %v623
        %v1648 = vunpack.c.l.b16 %v624
        %v1649 = vunpack.c.l.b16 %v625
        %v1650 = vunpack.c.l.b16 %v626
        %v1651 = vunpack.c.l.b16 %v627
        %v1652 = vunpack.c.l.b16 %v628
        %v1653 = vunpack.c.l.b16 %v629
        %v1654 = vunpack.c.l.b16 %v630
        %v1655 = vunpack.c.l.b16 %v631
        %v1656 = vunpack.c.l.b16 %v632
        %v1657 = vunpack.c.l.b16 %v633
        %v1658 = vunpack.c.l.b16 %v634
        %v1659 = vunpack.c.l.b16 %v635
        %v1660 = vunpack.c.l.b16 %v636
        %v1661 = vunpack.c.l.b16 %v637
        %v1662 = vunpack.c.l.b16 %v638
        %v1663 = vunpack.c.l.b16 %v639
        %v1664 = vunpack.c.l.b16 %v640
        %v1665 = vunpack.c.l.b16 %v641
        %v1666 = vunpack.c.l.b16 %v642
        %v1667 = vunpack.c.l.b16 %v643
        %v1668 = vunpack.c.l.b16 %v644
        %v1669 = vunpack.c.l.b16 %v645
        %v1670 = vunpack.c.l.b16 %v646
        %v1671 = vunpack.c.l.b16 %v647
        %v1672 = vunpack.c.l.b16 %v648
        %v1673 = vunpack.c.l.b16 %v649
        %v1674 = vunpack.c.l.b16 %v650
        %v1675 = vunpack.c.l.b16 %v651
        %v1676 = vunpack.c.l.b16 %v652
        %v1677 = vunpack.c.l.b16 %v653
        %v1678 = vunpack.c.l.b16 %v654
        %v1679 = vunpack.c.l.b16 %v655
        %v1680 = vunpack.c.l.b16 %v656
        %v1681 = vunpack.c.l.b16 %v657
        %v1682 = vunpack.c.l.b16 %v658
        %v1683 = vunpack.c.l.b16 %v659
        %v1684 = vunpack.c.l.b16 %v660
        %v1685 = vunpack.c.l.b16 %v661
        %v1686 = vunpack.c.l.b16 %v662
        %v1687 = vunpack.c.l.b16 %v663
        %v1688 = vunpack.c.l.b16 %v664
        %v1689 = vunpack.c.l.b16 %v665
        %v1690 = vunpack.c.l.b16 %v666
        %v1691 = vunpack.c.l.b16 %v667
        %v1692 = vunpack.c.l.b16 %v668
        %v1693 = vunpack.c.l.b16 %v669
        %v1694 = vunpack.c.l.b16 %v670
        %v1695 = vunpack.c.l.b16 %v671
        %v1696 = vunpack.c.l.b16 %v672
        %v1697 = vunpack.c.l.b16 %v673
        %v1698 = vunpack.c.l.b16 %v674
        %v1699 = vunpack.c.l.b16 %v675
        %v1700 = vunpack.c.l.b16 %v676
        %v1701 = vunpack.c.l.b16 %v677
        %v1702 = vunpack.c.l.b16 %v678
        %v1703 = vunpack.c.l.b16 %v679
        %v1704 = vunpack.c.l.b16 %v680
        %v1705 = vunpack.c.l.b16 %v681
        %v1706 = vunpack.c.l.b16 %v682
        %v1707 = vunpack.c.l.b16 %v683
        %v1708 = vunpack.c.l.b16 %v684
        %v1709 = vunpack.c.l.b16 %v685
        %v1710 = vunpack.c.l.b16 %v686
        %v1711 = vunpack.c.l.b16 %v687
        %v1712 = vunpack.c.l.b16 %v688
        %v1713 = vunpack.c.l.b16 %v689
        %v1714 = vunpack.c.l.b16 %v690
        %v1715 = vunpack.c.l.b16 %v691
        %v1716 = vunpack.c.l.b16 %v692
        %v1717 = vunpack.c.l.b16 %v693
        %v1718 = vunpack.c.l.b16 %v694
        %v1719 = vunpack.c.l.b16 %v695
        %v1720 = vunpack.c.l.b16 %v696
        %v1721 = vunpack.c.l.b16 %v697
        %v1722 = vunpack.c.l.b16 %v698
        %v1723 = vunpack.c.l.b16 %v699
        %v1724 = vunpack.c.l.b16 %v700
        %v1725 = vunpack.c.l.b16 %v701
        %v1726 = vunpack.c.l.b16 %v702
        %v1727 = vunpack.c.l.b16 %v703
        %v1728 = vunpack.c.l.b16 %v704
        %v1729 = vunpack.c.l.b16 %v705
        %v1730 = vunpack.c.l.b16 %v706
        %v1731 = vunpack.c.l.b16 %v707
        %v1732 = vunpack.c.l.b16 %v708
        %v1733 = vunpack.c.l.b16 %v709
        %v1734 = vunpack.c.l.b16 %v710
        %v1735 = vunpack.c.l.b16 %v711
        %v1736 = vunpack.c.l.b16 %v712
        %v1737 = vunpack.c.l.b16 %v713
        %v1738 = vunpack.c.l.b16 %v714
        %v1739 = vunpack.c.l.b16 %v715
        %v1740 = vunpack.c.l.b16 %v716
        %v1741 = vunpack.c.l.b16 %v717
        %v1742 = vunpack.c.l.b16 %v718
        %v1743 = vunpack.c.l.b16 %v719
        %v1744 = vunpack.c.l.b16 %v720
        %v1745 = vunpack.c.l.b16 %v721
        %v1746 = vunpack.c.l.b16 %v722
        %v1747 = vunpack.c.l.b16 %v723
        %v1748 = vunpack.c.l.b16 %v724
        %v1749 = vunpack.c.l.b16 %v725
        %v1750 = vunpack.c.l.b16 %v726
        %v1751 = vunpack.c.l.b16 %v727
        %v1752 = vunpack.c.l.b16 %v728
        %v1753 = vunpack.c.l.b16 %v729
        %v1754 = vunpack.c.l.b16 %v730
        %v1755 = vunpack.c.l.b16 %v731
        %v1756 = vunpack.c.l.b16 %v732
        %v1757 = vunpack.c.l.b16 %v733
        %v1758 = vunpack.c.l.b16 %v734
        %v1759 = vunpack.c.l.b16 %v735
        %v1760 = vunpack.c.l.b16 %v736
        %v1761 = vunpack.c.l.b16 %v737
        %v1762 = vunpack.c.l.b16 %v738
        %v1763 = vunpack.c.l.b16 %v739
        %v1764 = vunpack.c.l.b16 %v740
        %v1765 = vunpack.c.l.b16 %v741
        %v1766 = vunpack.c.l.b16 %v742
        %v1767 = vunpack.c.l.b16 %v743
        %v1768 = vunpack.c.l.b16 %v744
        %v1769 = vunpack.c.l.b16 %v745
        %v1770 = vunpack.c.l.b16 %v746
        %v1771 = vunpack.c.l.b16 %v747
        %v1772 = vunpack.c.l.b16 %v748
        %v1773 = vunpack.c.l.b16 %v749
        %v1774 = vunpack.c.l.b16 %v750
        %v1775 = vunpack.c.l.b16 %v751
        %v1776 = vunpack.c.l.b16 %v752
        %v1777 = vunpack.c.l.b16 %v753
        %v1778 = vunpack.c.l.b16 %v754
        %v1779 = vunpack.c.l.b16 %v755
        %v1780 = vunpack.c.l.b16 %v756
        %v1781 = vunpack.c.l.b16 %v757
        %v1782 = vunpack.c.l.b16 %v758
        %v1783 = vunpack.c.l.b16 %v759
        %v1784 = vunpack.c.l.b16 %v760
        %v1785 = vunpack.c.l.b16 %v761
        %v1786 = vunpack.c.l.b16 %v762
        %v1787 = vunpack.c.l.b16 %v763
        %v1788 = vunpack.c.l.b16 %v764
        %v1789 = vunpack.c.l.b16 %v765
        %v1790 = vunpack.c.l.b16 %v766
        %v1791 = vunpack.c.l.b16 %v767
        %v1792 = vunpack.c.l.b16 %v768
        %v1793 = vunpack.c.l.b16 %v769
        %v1794 = vunpack.c.l.b16 %v770
        %v1795 = vunpack.c.l.b16 %v771
        %v1796 = vunpack.c.l.b16 %v772
        %v1797 = vunpack.c.l.b16 %v773
        %v1798 = vunpack.c.l.b16 %v774
        %v1799 = vunpack.c.l.b16 %v775
        %v1800 = vunpack.c.l.b16 %v776
        %v1801 = vunpack.c.l.b16 %v777
        %v1802 = vunpack.c.l.b16 %v778
        %v1803 = vunpack.c.l.b16 %v779
        %v1804 = vunpack.c.l.b16 %v780
        %v1805 = vunpack.c.l.b16 %v781
        %v1806 = vunpack.c.l.b16 %v782
        %v1807 = vunpack.c.l.b16 %v783
        %v1808 = vunpack.c.l.b16 %v784
        %v1809 = vunpack.c.l.b16 %v785
        %v1810 = vunpack.c.l.b16 %v786
        %v1811 = vunpack.c.l.b16 %v787
        %v1812 = vunpack.c.l.b16 %v788
        %v1813 = vunpack.c.l.b16 %v789
        %v1814 = vunpack.c.l.b16 %v790
        %v1815 = vunpack.c.l.b16 %v791
        %v1816 = vunpack.c.l.b16 %v792
        %v1817 = vunpack.c.l.b16 %v793
        %v1818 = vunpack.c.l.b16 %v794
        %v1819 = vunpack.c.l.b16 %v795
        %v1820 = vunpack.c.l.b16 %v796
        %v1821 = vunpack.c.l.b16 %v797
        %v1822 = vunpack.c.l.b16 %v798
        %v1823 = vunpack.c.l.b16 %v799
        %v1824 = vunpack.c.l.b16 %v800
        %v1825 = vunpack.c.l.b16 %v801
        %v1826 = vunpack.c.l.b16 %v802
        %v1827 = vunpack.c.l.b16 %v803
        %v1828 = vunpack.c.l.b16 %v804
        %v1829 = vunpack.c.l.b16 %v805
        %v1830 = vunpack.c.l.b16 %v806
        %v1831 = vunpack.c.l.b16 %v807
        %v1832 = vunpack.c.l.b16 %v808
        %v1833 = vunpack.c.l.b16 %v809
        %v1834 = vunpack.c.l.b16 %v810
        %v1835 = vunpack.c.l.b16 %v811
        %v1836 = vunpack.c.l.b16 %v812
        %v1837 = vunpack.c.l.b16 %v813
        %v1838 = vunpack.c.l.b16 %v814
        %v1839 = vunpack.c.l.b16 %v815
        %v1840 = vunpack.c.l.b16 %v816
        %v1841 = vunpack.c.l.b16 %v817
        %v1842 = vunpack.c.l.b16 %v818
        %v1843 = vunpack.c.l.b16 %v819
        %v1844 = vunpack.c.l.b16 %v820
        %v1845 = vunpack.c.l.b16 %v821
        %v1846 = vunpack.c.l.b16 %v822
        %v1847 = vunpack.c.l.b16 %v823
        %v1848 = vunpack.c.l.b16 %v824
        %v1849 = vunpack.c.l.b16 %v825
        %v1850 = vunpack.c.l.b16 %v826
        %v1851 = vunpack.c.l.b16 %v827
        %v1852 = vunpack.c.l.b16 %v828
        %v1853 = vunpack.c.l.b16 %v829
        %v1854 = vunpack.c.l.b16 %v830
        %v1855 = vunpack.c.l.b16 %v831
        %v1856 = vunpack.c.l.b16 %v832
        %v1857 = vunpack.c.l.b16 %v833
        %v1858 = vunpack.c.l.b16 %v834
        %v1859 = vunpack.c.l.b16 %v835
        %v1860 = vunpack.c.l.b16 %v836
        %v1861 = vunpack.c.l.b16 %v837
        %v1862 = vunpack.c.l.b16 %v838
        %v1863 = vunpack.c.l.b16 %v839
        %v1864 = vunpack.c.l.b16 %v840
        %v1865 = vunpack.c.l.b16 %v841
        %v1866 = vunpack.c.l.b16 %v842
        %v1867 = vunpack.c.l.b16 %v843
        %v1868 = vunpack.c.l.b16 %v844
        %v1869 = vunpack.c.l.b16 %v845
        %v1870 = vunpack.c.l.b16 %v846
        %v1871 = vunpack.c.l.b16 %v847
        %v1872 = vunpack.c.l.b16 %v848
        %v1873 = vunpack.c.l.b16 %v849
        %v1874 = vunpack.c.l.b16 %v850
        %v1875 = vunpack.c.l.b16 %v851
        %v1876 = vunpack.c.l.b16 %v852
        %v1877 = vunpack.c.l.b16 %v853
        %v1878 = vunpack.c.l.b16 %v854
        %v1879 = vunpack.c.l.b16 %v855
        %v1880 = vunpack.c.l.b16 %v856
        %v1881 = vunpack.c.l.b16 %v857
        %v1882 = vunpack.c.l.b16 %v858
        %v1883 = vunpack.c.l.b16 %v859
        %v1884 = vunpack.c.l.b16 %v860
        %v1885 = vunpack.c.l.b16 %v861
        %v1886 = vunpack.c.l.b16 %v862
        %v1887 = vunpack.c.l.b16 %v863
        %v1888 = vunpack.c.l.b16 %v864
        %v1889 = vunpack.c.l.b16 %v865
        %v1890 = vunpack.c.l.b16 %v866
        %v1891 = vunpack.c.l.b16 %v867
        %v1892 = vunpack.c.l.b16 %v868
        %v1893 = vunpack.c.l.b16 %v869
        %v1894 = vunpack.c.l.b16 %v870
        %v1895 = vunpack.c.l.b16 %v871
        %v1896 = vunpack.c.l.b16 %v872
        %v1897 = vunpack.c.l.b16 %v873
        %v1898 = vunpack.c.l.b16 %v874
        %v1899 = vunpack.c.l.b16 %v875
        %v1900 = vunpack.c.l.b16 %v876
        %v1901 = vunpack.c.l.b16 %v877
        %v1902 = vunpack.c.l.b16 %v878
        %v1903 = vunpack.c.l.b16 %v879
        %v1904 = vunpack.c.l.b16 %v880
        %v1905 = vunpack.c.l.b16 %v881
        %v1906 = vunpack.c.l.b16 %v882
        %v1907 = vunpack.c.l.b16 %v883
        %v1908 = vunpack.c.l.b16 %v884
        %v1909 = vunpack.c.l.b16 %v885
        %v1910 = vunpack.c.l.b16 %v886
        %v1911 = vunpack.c.l.b16 %v887
        %v1912 = vunpack.c.l.b16 %v888
        %v1913 = vunpack.c.l.b16 %v889
        %v1914 = vunpack.c.l.b16 %v890
        %v1915 = vunpack.c.l.b16 %v891
        %v1916 = vunpack.c.l.b16 %v892
        %v1917 = vunpack.c.l.b16 %v893
        %v1918 = vunpack.c.l.b16 %v894
        %v1919 = vunpack.c.l.b16 %v895
        %v1920 = vunpack.c.l.b16 %v896
        %v1921 = vunpack.c.l.b16 %v897
        %v1922 = vunpack.c.l.b16 %v898
        %v1923 = vunpack.c.l.b16 %v899
        %v1924 = vunpack.c.l.b16 %v900
        %v1925 = vunpack.c.l.b16 %v901
        %v1926 = vunpack.c.l.b16 %v902
        %v1927 = vunpack.c.l.b16 %v903
        %v1928 = vunpack.c.l.b16 %v904
        %v1929 = vunpack.c.l.b16 %v905
        %v1930 = vunpack.c.l.b16 %v906
        %v1931 = vunpack.c.l.b16 %v907
        %v1932 = vunpack.c.l.b16 %v908
        %v1933 = vunpack.c.l.b16 %v909
        %v1934 = vunpack.c.l.b16 %v910
        %v1935 = vunpack.c.l.b16 %v911
        %v1936 = vunpack.c.l.b16 %v912
        %v1937 = vunpack.c.l.b16 %v913
        %v1938 = vunpack.c.l.b16 %v914
        %v1939 = vunpack.c.l.b16 %v915
        %v1940 = vunpack.c.l.b16 %v916
        %v1941 = vunpack.c.l.b16 %v917
        %v1942 = vunpack.c.l.b16 %v918
        %v1943 = vunpack.c.l.b16 %v919
        %v1944 = vunpack.c.l.b16 %v920
        %v1945 = vunpack.c.l.b16 %v921
        %v1946 = vunpack.c.l.b16 %v922
        %v1947 = vunpack.c.l.b16 %v923
        %v1948 = vunpack.c.l.b16 %v924
        %v1949 = vunpack.c.l.b16 %v925
        %v1950 = vunpack.c.l.b16 %v926
        %v1951 = vunpack.c.l.b16 %v927
        %v1952 = vunpack.c.l.b16 %v928
        %v1953 = vunpack.c.l.b16 %v929
        %v1954 = vunpack.c.l.b16 %v930
        %v1955 = vunpack.c.l.b16 %v931
        %v1956 = vunpack.c.l.b16 %v932
        %v1957 = vunpack.c.l.b16 %v933
        %v1958 = vunpack.c.l.b16 %v934
        %v1959 = vunpack.c.l.b16 %v935
        %v1960 = vunpack.c.l.b16 %v936
        %v1961 = vunpack.c.l.b16 %v937
        %v1962 = vunpack.c.l.b16 %v938
        %v1963 = vunpack.c.l.b16 %v939
        %v1964 = vunpack.c.l.b16 %v940
        %v1965 = vunpack.c.l.b16 %v941
        %v1966 = vunpack.c.l.b16 %v942
        %v1967 = vunpack.c.l.b16 %v943
        %v1968 = vunpack.c.l.b16 %v944
        %v1969 = vunpack.c.l.b16 %v945
        %v1970 = vunpack.c.l.b16 %v946
        %v1971 = vunpack.c.l.b16 %v947
        %v1972 = vunpack.c.l.b16 %v948
        %v1973 = vunpack.c.l.b16 %v949
        %v1974 = vunpack.c.l.b16 %v950
        %v1975 = vunpack.c.l.b16 %v951
        %v1976 = vunpack.c.l.b16 %v952
        %v1977 = vunpack.c.l.b16 %v953
        %v1978 = vunpack.c.l.b16 %v954
        %v1979 = vunpack.c.l.b16 %v955
        %v1980 = vunpack.c.l.b16 %v956
        %v1981 = vunpack.c.l.b16 %v957
        %v1982 = vunpack.c.l.b16 %v958
        %v1983 = vunpack.c.l.b16 %v959
        %v1984 = vunpack.c.l.b16 %v960
        %v1985 = vunpack.c.l.b16 %v961
        %v1986 = vunpack.c.l.b16 %v962
        %v1987 = vunpack.c.l.b16 %v963
        %v1988 = vunpack.c.l.b16 %v964
        %v1989 = vunpack.c.l.b16 %v965
        %v1990 = vunpack.c.l.b16 %v966
        %v1991 = vunpack.c.l.b16 %v967
        %v1992 = vunpack.c.l.b16 %v968
        %v1993 = vunpack.c.l.b16 %v969
        %v1994 = vunpack.c.l.b16 %v970
        %v1995 = vunpack.c.l.b16 %v971
        %v1996 = vunpack.c.l.b16 %v972
        %v1997 = vunpack.c.l.b16 %v973
        %v1998 = vunpack.c.l.b16 %v974
        %v1999 = vunpack.c.l.b16 %v975
        %v2000 = vunpack.c.l.b16 %v976
        %v2001 = vunpack.c.l.b16 %v977
        %v2002 = vpack.c.b16 %v1491, %v1490
        %v2003 = vpack.c.b16 %v1493, %v1492
        %v2004 = vpack.c.b16 %v1495, %v1494
        %v2005 = vpack.c.b16 %v1497, %v1496
        %v2006 = vpack.c.b16 %v1499, %v1498
        %v2007 = vpack.c.b16 %v1501, %v1500
        %v2008 = vpack.c.b16 %v1503, %v1502
        %v2009 = vpack.c.b16 %v1505, %v1504
        %v2010 = vpack.c.b16 %v1507, %v1506
        %v2011 = vpack.c.b16 %v1509, %v1508
        %v2012 = vpack.c.b16 %v1511, %v1510
        %v2013 = vpack.c.b16 %v1513, %v1512
        %v2014 = vpack.c.b16 %v1515, %v1514
        %v2015 = vpack.c.b16 %v1517, %v1516
        %v2016 = vpack.c.b16 %v1519, %v1518
        %v2017 = vpack.c.b16 %v1521, %v1520
        %v2018 = vpack.c.b16 %v1523, %v1522
        %v2019 = vpack.c.b16 %v1525, %v1524
        %v2020 = vpack.c.b16 %v1527, %v1526
        %v2021 = vpack.c.b16 %v1529, %v1528
        %v2022 = vpack.c.b16 %v1531, %v1530
        %v2023 = vpack.c.b16 %v1533, %v1532
        %v2024 = vpack.c.b16 %v1535, %v1534
        %v2025 = vpack.c.b16 %v1537, %v1536
        %v2026 = vpack.c.b16 %v1539, %v1538
        %v2027 = vpack.c.b16 %v1541, %v1540
        %v2028 = vpack.c.b16 %v1543, %v1542
        %v2029 = vpack.c.b16 %v1545, %v1544
        %v2030 = vpack.c.b16 %v1547, %v1546
        %v2031 = vpack.c.b16 %v1549, %v1548
        %v2032 = vpack.c.b16 %v1551, %v1550
        %v2033 = vpack.c.b16 %v1553, %v1552
        %v2034 = vpack.c.b16 %v1555, %v1554
        %v2035 = vpack.c.b16 %v1557, %v1556
        %v2036 = vpack.c.b16 %v1559, %v1558
        %v2037 = vpack.c.b16 %v1561, %v1560
        %v2038 = vpack.c.b16 %v1563, %v1562
        %v2039 = vpack.c.b16 %v1565, %v1564
        %v2040 = vpack.c.b16 %v1567, %v1566
        %v2041 = vpack.c.b16 %v1569, %v1568
        %v2042 = vpack.c.b16 %v1571, %v1570
        %v2043 = vpack.c.b16 %v1573, %v1572
        %v2044 = vpack.c.b16 %v1575, %v1574
        %v2045 = vpack.c.b16 %v1577, %v1576
        %v2046 = vpack.c.b16 %v1579, %v1578
        %v2047 = vpack.c.b16 %v1581, %v1580
        %v2048 = vpack.c.b16 %v1583, %v1582
        %v2049 = vpack.c.b16 %v1585, %v1584
        %v2050 = vpack.c.b16 %v1587, %v1586
        %v2051 = vpack.c.b16 %v1589, %v1588
        %v2052 = vpack.c.b16 %v1591, %v1590
        %v2053 = vpack.c.b16 %v1593, %v1592
        %v2054 = vpack.c.b16 %v1595, %v1594
        %v2055 = vpack.c.b16 %v1597, %v1596
        %v2056 = vpack.c.b16 %v1599, %v1598
        %v2057 = vpack.c.b16 %v1601, %v1600
        %v2058 = vpack.c.b16 %v1603, %v1602
        %v2059 = vpack.c.b16 %v1605, %v1604
        %v2060 = vpack.c.b16 %v1607, %v1606
        %v2061 = vpack.c.b16 %v1609, %v1608
        %v2062 = vpack.c.b16 %v1611, %v1610
        %v2063 = vpack.c.b16 %v1613, %v1612
        %v2064 = vpack.c.b16 %v1615, %v1614
        %v2065 = vpack.c.b16 %v1617, %v1616
        %v2066 = vpack.c.b16 %v1619, %v1618
        %v2067 = vpack.c.b16 %v1621, %v1620
        %v2068 = vpack.c.b16 %v1623, %v1622
        %v2069 = vpack.c.b16 %v1625, %v1624
        %v2070 = vpack.c.b16 %v1627, %v1626
        %v2071 = vpack.c.b16 %v1629, %v1628
        %v2072 = vpack.c.b16 %v1631, %v1630
        %v2073 = vpack.c.b16 %v1633, %v1632
        %v2074 = vpack.c.b16 %v1635, %v1634
        %v2075 = vpack.c.b16 %v1637, %v1636
        %v2076 = vpack.c.b16 %v1639, %v1638
        %v2077 = vpack.c.b16 %v1641, %v1640
        %v2078 = vpack.c.b16 %v1643, %v1642
        %v2079 = vpack.c.b16 %v1645, %v1644
        %v2080 = vpack.c.b16 %v1647, %v1646
        %v2081 = vpack.c.b16 %v1649, %v1648
        %v2082 = vpack.c.b16 %v1651, %v1650
        %v2083 = vpack.c.b16 %v1653, %v1652
        %v2084 = vpack.c.b16 %v1655, %v1654
        %v2085 = vpack.c.b16 %v1657, %v1656
        %v2086 = vpack.c.b16 %v1659, %v1658
        %v2087 = vpack.c.b16 %v1661, %v1660
        %v2088 = vpack.c.b16 %v1663, %v1662
        %v2089 = vpack.c.b16 %v1665, %v1664
        %v2090 = vpack.c.b16 %v1667, %v1666
        %v2091 = vpack.c.b16 %v1669, %v1668
        %v2092 = vpack.c.b16 %v1671, %v1670
        %v2093 = vpack.c.b16 %v1673, %v1672
        %v2094 = vpack.c.b16 %v1675, %v1674
        %v2095 = vpack.c.b16 %v1677, %v1676
        %v2096 = vpack.c.b16 %v1679, %v1678
        %v2097 = vpack.c.b16 %v1681, %v1680
        %v2098 = vpack.c.b16 %v1683, %v1682
        %v2099 = vpack.c.b16 %v1685, %v1684
        %v2100 = vpack.c.b16 %v1687, %v1686
        %v2101 = vpack.c.b16 %v1689, %v1688
        %v2102 = vpack.c.b16 %v1691, %v1690
        %v2103 = vpack.c.b16 %v1693, %v1692
        %v2104 = vpack.c.b16 %v1695, %v1694
        %v2105 = vpack.c.b16 %v1697, %v1696
        %v2106 = vpack.c.b16 %v1699, %v1698
        %v2107 = vpack.c.b16 %v1701, %v1700
        %v2108 = vpack.c.b16 %v1703, %v1702
        %v2109 = vpack.c.b16 %v1705, %v1704
        %v2110 = vpack.c.b16 %v1707, %v1706
        %v2111 = vpack.c.b16 %v1709, %v1708
        %v2112 = vpack.c.b16 %v1711, %v1710
        %v2113 = vpack.c.b16 %v1713, %v1712
        %v2114 = vpack.c.b16 %v1715, %v1714
        %v2115 = vpack.c.b16 %v1717, %v1716
        %v2116 = vpack.c.b16 %v1719, %v1718
        %v2117 = vpack.c.b16 %v1721, %v1720
        %v2118 = vpack.c.b16 %v1723, %v1722
        %v2119 = vpack.c.b16 %v1725, %v1724
        %v2120 = vpack.c.b16 %v1727, %v1726
        %v2121 = vpack.c.b16 %v1729, %v1728
        %v2122 = vpack.c.b16 %v1731, %v1730
        %v2123 = vpack.c.b16 %v1733, %v1732
        %v2124 = vpack.c.b16 %v1735, %v1734
        %v2125 = vpack.c.b16 %v1737, %v1736
        %v2126 = vpack.c.b16 %v1739, %v1738
        %v2127 = vpack.c.b16 %v1741, %v1740
        %v2128 = vpack.c.b16 %v1743, %v1742
        %v2129 = vpack.c.b16 %v1745, %v1744
        %v2130 = vpack.c.b16 %v1747, %v1746
        %v2131 = vpack.c.b16 %v1749, %v1748
        %v2132 = vpack.c.b16 %v1751, %v1750
        %v2133 = vpack.c.b16 %v1753, %v1752
        %v2134 = vpack.c.b16 %v1755, %v1754
        %v2135 = vpack.c.b16 %v1757, %v1756
        %v2136 = vpack.c.b16 %v1759, %v1758
        %v2137 = vpack.c.b16 %v1761, %v1760
        %v2138 = vpack.c.b16 %v1763, %v1762
        %v2139 = vpack.c.b16 %v1765, %v1764
        %v2140 = vpack.c.b16 %v1767, %v1766
        %v2141 = vpack.c.b16 %v1769, %v1768
        %v2142 = vpack.c.b16 %v1771, %v1770
        %v2143 = vpack.c.b16 %v1773, %v1772
        %v2144 = vpack.c.b16 %v1775, %v1774
        %v2145 = vpack.c.b16 %v1777, %v1776
        %v2146 = vpack.c.b16 %v1779, %v1778
        %v2147 = vpack.c.b16 %v1781, %v1780
        %v2148 = vpack.c.b16 %v1783, %v1782
        %v2149 = vpack.c.b16 %v1785, %v1784
        %v2150 = vpack.c.b16 %v1787, %v1786
        %v2151 = vpack.c.b16 %v1789, %v1788
        %v2152 = vpack.c.b16 %v1791, %v1790
        %v2153 = vpack.c.b16 %v1793, %v1792
        %v2154 = vpack.c.b16 %v1795, %v1794
        %v2155 = vpack.c.b16 %v1797, %v1796
        %v2156 = vpack.c.b16 %v1799, %v1798
        %v2157 = vpack.c.b16 %v1801, %v1800
        %v2158 = vpack.c.b16 %v1803, %v1802
        %v2159 = vpack.c.b16 %v1805, %v1804
        %v2160 = vpack.c.b16 %v1807, %v1806
        %v2161 = vpack.c.b16 %v1809, %v1808
        %v2162 = vpack.c.b16 %v1811, %v1810
        %v2163 = vpack.c.b16 %v1813, %v1812
        %v2164 = vpack.c.b16 %v1815, %v1814
        %v2165 = vpack.c.b16 %v1817, %v1816
        %v2166 = vpack.c.b16 %v1819, %v1818
        %v2167 = vpack.c.b16 %v1821, %v1820
        %v2168 = vpack.c.b16 %v1823, %v1822
        %v2169 = vpack.c.b16 %v1825, %v1824
        %v2170 = vpack.c.b16 %v1827, %v1826
        %v2171 = vpack.c.b16 %v1829, %v1828
        %v2172 = vpack.c.b16 %v1831, %v1830
        %v2173 = vpack.c.b16 %v1833, %v1832
        %v2174 = vpack.c.b16 %v1835, %v1834
        %v2175 = vpack.c.b16 %v1837, %v1836
        %v2176 = vpack.c.b16 %v1839, %v1838
        %v2177 = vpack.c.b16 %v1841, %v1840
        %v2178 = vpack.c.b16 %v1843, %v1842
        %v2179 = vpack.c.b16 %v1845, %v1844
        %v2180 = vpack.c.b16 %v1847, %v1846
        %v2181 = vpack.c.b16 %v1849, %v1848
        %v2182 = vpack.c.b16 %v1851, %v1850
        %v2183 = vpack.c.b16 %v1853, %v1852
        %v2184 = vpack.c.b16 %v1855, %v1854
        %v2185 = vpack.c.b16 %v1857, %v1856
        %v2186 = vpack.c.b16 %v1859, %v1858
        %v2187 = vpack.c.b16 %v1861, %v1860
        %v2188 = vpack.c.b16 %v1863, %v1862
        %v2189 = vpack.c.b16 %v1865, %v1864
        %v2190 = vpack.c.b16 %v1867, %v1866
        %v2191 = vpack.c.b16 %v1869, %v1868
        %v2192 = vpack.c.b16 %v1871, %v1870
        %v2193 = vpack.c.b16 %v1873, %v1872
        %v2194 = vpack.c.b16 %v1875, %v1874
        %v2195 = vpack.c.b16 %v1877, %v1876
        %v2196 = vpack.c.b16 %v1879, %v1878
        %v2197 = vpack.c.b16 %v1881, %v1880
        %v2198 = vpack.c.b16 %v1883, %v1882
        %v2199 = vpack.c.b16 %v1885, %v1884
        %v2200 = vpack.c.b16 %v1887, %v1886
        %v2201 = vpack.c.b16 %v1889, %v1888
        %v2202 = vpack.c.b16 %v1891, %v1890
        %v2203 = vpack.c.b16 %v1893, %v1892
        %v2204 = vpack.c.b16 %v1895, %v1894
        %v2205 = vpack.c.b16 %v1897, %v1896
        %v2206 = vpack.c.b16 %v1899, %v1898
        %v2207 = vpack.c.b16 %v1901, %v1900
        %v2208 = vpack.c.b16 %v1903, %v1902
        %v2209 = vpack.c.b16 %v1905, %v1904
        %v2210 = vpack.c.b16 %v1907, %v1906
        %v2211 = vpack.c.b16 %v1909, %v1908
        %v2212 = vpack.c.b16 %v1911, %v1910
        %v2213 = vpack.c.b16 %v1913, %v1912
        %v2214 = vpack.c.b16 %v1915, %v1914
        %v2215 = vpack.c.b16 %v1917, %v1916
        %v2216 = vpack.c.b16 %v1919, %v1918
        %v2217 = vpack.c.b16 %v1921, %v1920
        %v2218 = vpack.c.b16 %v1923, %v1922
        %v2219 = vpack.c.b16 %v1925, %v1924
        %v2220 = vpack.c.b16 %v1927, %v1926
        %v2221 = vpack.c.b16 %v1929, %v1928
        %v2222 = vpack.c.b16 %v1931, %v1930
        %v2223 = vpack.c.b16 %v1933, %v1932
        %v2224 = vpack.c.b16 %v1935, %v1934
        %v2225 = vpack.c.b16 %v1937, %v1936
        %v2226 = vpack.c.b16 %v1939, %v1938
        %v2227 = vpack.c.b16 %v1941, %v1940
        %v2228 = vpack.c.b16 %v1943, %v1942
        %v2229 = vpack.c.b16 %v1945, %v1944
        %v2230 = vpack.c.b16 %v1947, %v1946
        %v2231 = vpack.c.b16 %v1949, %v1948
        %v2232 = vpack.c.b16 %v1951, %v1950
        %v2233 = vpack.c.b16 %v1953, %v1952
        %v2234 = vpack.c.b16 %v1955, %v1954
        %v2235 = vpack.c.b16 %v1957, %v1956
        %v2236 = vpack.c.b16 %v1959, %v1958
        %v2237 = vpack.c.b16 %v1961, %v1960
        %v2238 = vpack.c.b16 %v1963, %v1962
        %v2239 = vpack.c.b16 %v1965, %v1964
        %v2240 = vpack.c.b16 %v1967, %v1966
        %v2241 = vpack.c.b16 %v1969, %v1968
        %v2242 = vpack.c.b16 %v1971, %v1970
        %v2243 = vpack.c.b16 %v1973, %v1972
        %v2244 = vpack.c.b16 %v1975, %v1974
        %v2245 = vpack.c.b16 %v1977, %v1976
        %v2246 = vpack.c.b16 %v1979, %v1978
        %v2247 = vpack.c.b16 %v1981, %v1980
        %v2248 = vpack.c.b16 %v1983, %v1982
        %v2249 = vpack.c.b16 %v1985, %v1984
        %v2250 = vpack.c.b16 %v1987, %v1986
        %v2251 = vpack.c.b16 %v1989, %v1988
        %v2252 = vpack.c.b16 %v1991, %v1990
        %v2253 = vpack.c.b16 %v1993, %v1992
        %v2254 = vpack.c.b16 %v1995, %v1994
        %v2255 = vpack.c.b16 %v1997, %v1996
        %v2256 = vpack.c.b16 %v1999, %v1998
        %v2257 = vpack.c.b16 %v2001, %v2000
        %2514 = vmatprep.subr.bf16.mxu0 0
        %2515 = vmatpush1.bf16.msra.mxu0 %v2002
        %2516 = vmatprep.subr.bf16.mxu0 0
        %2517 = vmatpush1.bf16.msra.mxu0 %v2003
        %2518 = vmatprep.subr.bf16.mxu0 0
        %2519 = vmatpush1.bf16.msra.mxu0 %v2004
        %2520 = vmatprep.subr.bf16.mxu0 0
        %2521 = vmatpush1.bf16.msra.mxu0 %v2005
        %2522 = vmatprep.subr.bf16.mxu0 0
        %2523 = vmatpush1.bf16.msra.mxu0 %v2006
        %2524 = vmatprep.subr.bf16.mxu0 0
        %2525 = vmatpush1.bf16.msra.mxu0 %v2007
        %2526 = vmatprep.subr.bf16.mxu0 0
        %2527 = vmatpush1.bf16.msra.mxu0 %v2008
        %2528 = vmatprep.subr.bf16.mxu0 0
        %2529 = vmatpush1.bf16.msra.mxu0 %v2009
        %2530 = vmatprep.subr.bf16.mxu0 0
        %2531 = vmatpush1.bf16.msra.mxu0 %v2010
        %2532 = vmatprep.subr.bf16.mxu0 0
        %2533 = vmatpush1.bf16.msra.mxu0 %v2011
        %2534 = vmatprep.subr.bf16.mxu0 0
        %2535 = vmatpush1.bf16.msra.mxu0 %v2012
        %2536 = vmatprep.subr.bf16.mxu0 0
        %2537 = vmatpush1.bf16.msra.mxu0 %v2013
        %2538 = vmatprep.subr.bf16.mxu0 0
        %2539 = vmatpush1.bf16.msra.mxu0 %v2014
        %2540 = vmatprep.subr.bf16.mxu0 0
        %2541 = vmatpush1.bf16.msra.mxu0 %v2015
        %2542 = vmatprep.subr.bf16.mxu0 0
        %2543 = vmatpush1.bf16.msra.mxu0 %v2016
        %2544 = vmatprep.subr.bf16.mxu0 0
        %2545 = vmatpush1.bf16.msra.mxu0 %v2017
        %2546 = vmatprep.mubr.bf16.mxu0 %v435
        %2547 = vmatmul.mubr.bf16.gmra.mrb[0].mxu0 %v434
        %v2548 = vpop.f32.mrb[0].mxu0
        %v2549 = vadd.f32 0.0, %v2548
        %v2550 = vpop.f32.mrb[0].mxu0
        %v2551 = vpop.f32.mrb[0].mxu0
        %v2552 = vpop.f32.mrb[0].mxu0
        %2553 = vdwg.mxu0
        %2554 = vmatprep.subr.bf16.mxu0 0
        %2555 = vmatpush1.bf16.msra.mxu0 %v2018
        %2556 = vmatprep.subr.bf16.mxu0 0
        %2557 = vmatpush1.bf16.msra.mxu0 %v2019
        %2558 = vmatprep.subr.bf16.mxu0 0
        %2559 = vmatpush1.bf16.msra.mxu0 %v2020
        %2560 = vmatprep.subr.bf16.mxu0 0
        %2561 = vmatpush1.bf16.msra.mxu0 %v2021
        %2562 = vmatprep.subr.bf16.mxu0 0
        %2563 = vmatpush1.bf16.msra.mxu0 %v2022
        %2564 = vmatprep.subr.bf16.mxu0 0
        %2565 = vmatpush1.bf16.msra.mxu0 %v2023
        %2566 = vmatprep.subr.bf16.mxu0 0
        %2567 = vmatpush1.bf16.msra.mxu0 %v2024
        %2568 = vmatprep.subr.bf16.mxu0 0
        %2569 = vmatpush1.bf16.msra.mxu0 %v2025
        %2570 = vmatprep.subr.bf16.mxu0 0
        %2571 = vmatpush1.bf16.msra.mxu0 %v2026
        %2572 = vmatprep.subr.bf16.mxu0 0
        %2573 = vmatpush1.bf16.msra.mxu0 %v2027
        %2574 = vmatprep.subr.bf16.mxu0 0
        %2575 = vmatpush1.bf16.msra.mxu0 %v2028
        %2576 = vmatprep.subr.bf16.mxu0 0
        %2577 = vmatpush1.bf16.msra.mxu0 %v2029
        %2578 = vmatprep.subr.bf16.mxu0 0
        %2579 = vmatpush1.bf16.msra.mxu0 %v2030
        %2580 = vmatprep.subr.bf16.mxu0 0
        %2581 = vmatpush1.bf16.msra.mxu0 %v2031
        %2582 = vmatprep.subr.bf16.mxu0 0
        %2583 = vmatpush1.bf16.msra.mxu0 %v2032
        %2584 = vmatprep.subr.bf16.mxu0 0
        %2585 = vmatpush1.bf16.msra.mxu0 %v2033
        %2586 = vmatprep.mubr.bf16.mxu0 %v437
        %2587 = vmatmul.mubr.bf16.gmra.mrb[0].mxu0 %v436
        %v2588 = vpop.f32.mrb[0].mxu0
        %v2589 = vadd.f32 %v2549, %v2588
        %v2590 = vpop.f32.mrb[0].mxu0
        %v2591 = vpop.f32.mrb[0].mxu0
        %v2592 = vpop.f32.mrb[0].mxu0
        %2593 = vdwg.mxu0
        %2594 = vmatprep.subr.bf16.mxu0 0
        %2595 = vmatpush1.bf16.msra.mxu0 %v2034
        %2596 = vmatprep.subr.bf16.mxu0 0
        %2597 = vmatpush1.bf16.msra.mxu0 %v2035
        %2598 = vmatprep.subr.bf16.mxu0 0
        %2599 = vmatpush1.bf16.msra.mxu0 %v2036
        %2600 = vmatprep.subr.bf16.mxu0 0
        %2601 = vmatpush1.bf16.msra.mxu0 %v2037
        %2602 = vmatprep.subr.bf16.mxu0 0
        %2603 = vmatpush1.bf16.msra.mxu0 %v2038
        %2604 = vmatprep.subr.bf16.mxu0 0
        %2605 = vmatpush1.bf16.msra.mxu0 %v2039
        %2606 = vmatprep.subr.bf16.mxu0 0
        %2607 = vmatpush1.bf16.msra.mxu0 %v2040
        %2608 = vmatprep.subr.bf16.mxu0 0
        %2609 = vmatpush1.bf16.msra.mxu0 %v2041
        %2610 = vmatprep.subr.bf16.mxu0 0
        %2611 = vmatpush1.bf16.msra.mxu0 %v2042
        %2612 = vmatprep.subr.bf16.mxu0 0
        %2613 = vmatpush1.bf16.msra.mxu0 %v2043
        %2614 = vmatprep.subr.bf16.mxu0 0
        %2615 = vmatpush1.bf16.msra.mxu0 %v2044
        %2616 = vmatprep.subr.bf16.mxu0 0
        %2617 = vmatpush1.bf16.msra.mxu0 %v2045
        %2618 = vmatprep.subr.bf16.mxu0 0
        %2619 = vmatpush1.bf16.msra.mxu0 %v2046
        %2620 = vmatprep.subr.bf16.mxu0 0
        %2621 = vmatpush1.bf16.msra.mxu0 %v2047
        %2622 = vmatprep.subr.bf16.mxu0 0
        %2623 = vmatpush1.bf16.msra.mxu0 %v2048
        %2624 = vmatprep.subr.bf16.mxu0 0
        %2625 = vmatpush1.bf16.msra.mxu0 %v2049
        %2626 = vmatprep.mubr.bf16.mxu0 %v439
        %2627 = vmatmul.mubr.bf16.gmra.mrb[0].mxu0 %v438
        %v2628 = vpop.f32.mrb[0].mxu0
        %v2629 = vadd.f32 %v2589, %v2628
        %v2630 = vpop.f32.mrb[0].mxu0
        %v2631 = vpop.f32.mrb[0].mxu0
        %v2632 = vpop.f32.mrb[0].mxu0
        %2633 = vdwg.mxu0
        %2634 = vmatprep.subr.bf16.mxu0 0
        %2635 = vmatpush1.bf16.msra.mxu0 %v2050
        %2636 = vmatprep.subr.bf16.mxu0 0
        %2637 = vmatpush1.bf16.msra.mxu0 %v2051
        %2638 = vmatprep.subr.bf16.mxu0 0
        %2639 = vmatpush1.bf16.msra.mxu0 %v2052
        %2640 = vmatprep.subr.bf16.mxu0 0
        %2641 = vmatpush1.bf16.msra.mxu0 %v2053
        %2642 = vmatprep.subr.bf16.mxu0 0
        %2643 = vmatpush1.bf16.msra.mxu0 %v2054
        %2644 = vmatprep.subr.bf16.mxu0 0
        %2645 = vmatpush1.bf16.msra.mxu0 %v2055
        %2646 = vmatprep.subr.bf16.mxu0 0
        %2647 = vmatpush1.bf16.msra.mxu0 %v2056
        %2648 = vmatprep.subr.bf16.mxu0 0
        %2649 = vmatpush1.bf16.msra.mxu0 %v2057
        %2650 = vmatprep.subr.bf16.mxu0 0
        %2651 = vmatpush1.bf16.msra.mxu0 %v2058
        %2652 = vmatprep.subr.bf16.mxu0 0
        %2653 = vmatpush1.bf16.msra.mxu0 %v2059
        %2654 = vmatprep.subr.bf16.mxu0 0
        %2655 = vmatpush1.bf16.msra.mxu0 %v2060
        %2656 = vmatprep.subr.bf16.mxu0 0
        %2657 = vmatpush1.bf16.msra.mxu0 %v2061
        %2658 = vmatprep.subr.bf16.mxu0 0
        %2659 = vmatpush1.bf16.msra.mxu0 %v2062
        %2660 = vmatprep.subr.bf16.mxu0 0
        %2661 = vmatpush1.bf16.msra.mxu0 %v2063
        %2662 = vmatprep.subr.bf16.mxu0 0
        %2663 = vmatpush1.bf16.msra.mxu0 %v2064
        %2664 = vmatprep.subr.bf16.mxu0 0
        %2665 = vmatpush1.bf16.msra.mxu0 %v2065
        %2666 = vmatprep.mubr.bf16.mxu0 %v441
        %2667 = vmatmul.mubr.bf16.gmra.mrb[0].mxu0 %v440
        %v2668 = vpop.f32.mrb[0].mxu0
        %v2669 = vadd.f32 %v2629, %v2668
        %v2670 = vpop.f32.mrb[0].mxu0
        %v2671 = vpop.f32.mrb[0].mxu0
        %v2672 = vpop.f32.mrb[0].mxu0
        %2673 = vdwg.mxu0
        %2674 = vmatprep.subr.bf16.mxu0 0
        %2675 = vmatpush1.bf16.msra.mxu0 %v2066
        %2676 = vmatprep.subr.bf16.mxu0 0
        %2677 = vmatpush1.bf16.msra.mxu0 %v2067
        %2678 = vmatprep.subr.bf16.mxu0 0
        %2679 = vmatpush1.bf16.msra.mxu0 %v2068
        %2680 = vmatprep.subr.bf16.mxu0 0
        %2681 = vmatpush1.bf16.msra.mxu0 %v2069
        %2682 = vmatprep.subr.bf16.mxu0 0
        %2683 = vmatpush1.bf16.msra.mxu0 %v2070
        %2684 = vmatprep.subr.bf16.mxu0 0
        %2685 = vmatpush1.bf16.msra.mxu0 %v2071
        %2686 = vmatprep.subr.bf16.mxu0 0
        %2687 = vmatpush1.bf16.msra.mxu0 %v2072
        %2688 = vmatprep.subr.bf16.mxu0 0
        %2689 = vmatpush1.bf16.msra.mxu0 %v2073
        %2690 = vmatprep.subr.bf16.mxu0 0
        %2691 = vmatpush1.bf16.msra.mxu0 %v2074
        %2692 = vmatprep.subr.bf16.mxu0 0
        %2693 = vmatpush1.bf16.msra.mxu0 %v2075
        %2694 = vmatprep.subr.bf16.mxu0 0
        %2695 = vmatpush1.bf16.msra.mxu0 %v2076
        %2696 = vmatprep.subr.bf16.mxu0 0
        %2697 = vmatpush1.bf16.msra.mxu0 %v2077
        %2698 = vmatprep.subr.bf16.mxu0 0
        %2699 = vmatpush1.bf16.msra.mxu0 %v2078
        %2700 = vmatprep.subr.bf16.mxu0 0
        %2701 = vmatpush1.bf16.msra.mxu0 %v2079
        %2702 = vmatprep.subr.bf16.mxu0 0
        %2703 = vmatpush1.bf16.msra.mxu0 %v2080
        %2704 = vmatprep.subr.bf16.mxu0 0
        %2705 = vmatpush1.bf16.msra.mxu0 %v2081
        %2706 = vmatprep.mubr.bf16.mxu0 %v443
        %2707 = vmatmul.mubr.bf16.gmra.mrb[0].mxu0 %v442
        %v2708 = vpop.f32.mrb[0].mxu0
        %v2709 = vadd.f32 %v2669, %v2708
        %v2710 = vpop.f32.mrb[0].mxu0
        %v2711 = vpop.f32.mrb[0].mxu0
        %v2712 = vpop.f32.mrb[0].mxu0
        %2713 = vdwg.mxu0
        %2714 = vmatprep.subr.bf16.mxu0 0
        %2715 = vmatpush1.bf16.msra.mxu0 %v2082
        %2716 = vmatprep.subr.bf16.mxu0 0
        %2717 = vmatpush1.bf16.msra.mxu0 %v2083
        %2718 = vmatprep.subr.bf16.mxu0 0
        %2719 = vmatpush1.bf16.msra.mxu0 %v2084
        %2720 = vmatprep.subr.bf16.mxu0 0
        %2721 = vmatpush1.bf16.msra.mxu0 %v2085
        %2722 = vmatprep.subr.bf16.mxu0 0
        %2723 = vmatpush1.bf16.msra.mxu0 %v2086
        %2724 = vmatprep.subr.bf16.mxu0 0
        %2725 = vmatpush1.bf16.msra.mxu0 %v2087
        %2726 = vmatprep.subr.bf16.mxu0 0
        %2727 = vmatpush1.bf16.msra.mxu0 %v2088
        %2728 = vmatprep.subr.bf16.mxu0 0
        %2729 = vmatpush1.bf16.msra.mxu0 %v2089
        %2730 = vmatprep.subr.bf16.mxu0 0
        %2731 = vmatpush1.bf16.msra.mxu0 %v2090
        %2732 = vmatprep.subr.bf16.mxu0 0
        %2733 = vmatpush1.bf16.msra.mxu0 %v2091
        %2734 = vmatprep.subr.bf16.mxu0 0
        %2735 = vmatpush1.bf16.msra.mxu0 %v2092
        %2736 = vmatprep.subr.bf16.mxu0 0
        %2737 = vmatpush1.bf16.msra.mxu0 %v2093
        %2738 = vmatprep.subr.bf16.mxu0 0
        %2739 = vmatpush1.bf16.msra.mxu0 %v2094
        %2740 = vmatprep.subr.bf16.mxu0 0
        %2741 = vmatpush1.bf16.msra.mxu0 %v2095
        %2742 = vmatprep.subr.bf16.mxu0 0
        %2743 = vmatpush1.bf16.msra.mxu0 %v2096
        %2744 = vmatprep.subr.bf16.mxu0 0
        %2745 = vmatpush1.bf16.msra.mxu0 %v2097
        %2746 = vmatprep.mubr.bf16.mxu0 %v445
        %2747 = vmatmul.mubr.bf16.gmra.mrb[0].mxu0 %v444
        %v2748 = vpop.f32.mrb[0].mxu0
        %v2749 = vadd.f32 %v2709, %v2748
        %v2750 = vpop.f32.mrb[0].mxu0
        %v2751 = vpop.f32.mrb[0].mxu0
        %v2752 = vpop.f32.mrb[0].mxu0
        %2753 = vdwg.mxu0
        %2754 = vmatprep.subr.bf16.mxu0 0
        %2755 = vmatpush1.bf16.msra.mxu0 %v2098
        %2756 = vmatprep.subr.bf16.mxu0 0
        %2757 = vmatpush1.bf16.msra.mxu0 %v2099
        %2758 = vmatprep.subr.bf16.mxu0 0
        %2759 = vmatpush1.bf16.msra.mxu0 %v2100
        %2760 = vmatprep.subr.bf16.mxu0 0
        %2761 = vmatpush1.bf16.msra.mxu0 %v2101
        %2762 = vmatprep.subr.bf16.mxu0 0
        %2763 = vmatpush1.bf16.msra.mxu0 %v2102
        %2764 = vmatprep.subr.bf16.mxu0 0
        %2765 = vmatpush1.bf16.msra.mxu0 %v2103
        %2766 = vmatprep.subr.bf16.mxu0 0
        %2767 = vmatpush1.bf16.msra.mxu0 %v2104
        %2768 = vmatprep.subr.bf16.mxu0 0
        %2769 = vmatpush1.bf16.msra.mxu0 %v2105
        %2770 = vmatprep.subr.bf16.mxu0 0
        %2771 = vmatpush1.bf16.msra.mxu0 %v2106
        %2772 = vmatprep.subr.bf16.mxu0 0
        %2773 = vmatpush1.bf16.msra.mxu0 %v2107
        %2774 = vmatprep.subr.bf16.mxu0 0
        %2775 = vmatpush1.bf16.msra.mxu0 %v2108
        %2776 = vmatprep.subr.bf16.mxu0 0
        %2777 = vmatpush1.bf16.msra.mxu0 %v2109
        %2778 = vmatprep.subr.bf16.mxu0 0
        %2779 = vmatpush1.bf16.msra.mxu0 %v2110
        %2780 = vmatprep.subr.bf16.mxu0 0
        %2781 = vmatpush1.bf16.msra.mxu0 %v2111
        %2782 = vmatprep.subr.bf16.mxu0 0
        %2783 = vmatpush1.bf16.msra.mxu0 %v2112
        %2784 = vmatprep.subr.bf16.mxu0 0
        %2785 = vmatpush1.bf16.msra.mxu0 %v2113
        %2786 = vmatprep.mubr.bf16.mxu0 %v447
        %2787 = vmatmul.mubr.bf16.gmra.mrb[0].mxu0 %v446
        %v2788 = vpop.f32.mrb[0].mxu0
        %v2789 = vadd.f32 %v2749, %v2788
        %v2790 = vpop.f32.mrb[0].mxu0
        %v2791 = vpop.f32.mrb[0].mxu0
        %v2792 = vpop.f32.mrb[0].mxu0
        %2793 = vdwg.mxu0
        %2794 = vmatprep.subr.bf16.mxu0 0
        %2795 = vmatpush1.bf16.msra.mxu0 %v2114
        %2796 = vmatprep.subr.bf16.mxu0 0
        %2797 = vmatpush1.bf16.msra.mxu0 %v2115
        %2798 = vmatprep.subr.bf16.mxu0 0
        %2799 = vmatpush1.bf16.msra.mxu0 %v2116
        %2800 = vmatprep.subr.bf16.mxu0 0
        %2801 = vmatpush1.bf16.msra.mxu0 %v2117
        %2802 = vmatprep.subr.bf16.mxu0 0
        %2803 = vmatpush1.bf16.msra.mxu0 %v2118
        %2804 = vmatprep.subr.bf16.mxu0 0
        %2805 = vmatpush1.bf16.msra.mxu0 %v2119
        %2806 = vmatprep.subr.bf16.mxu0 0
        %2807 = vmatpush1.bf16.msra.mxu0 %v2120
        %2808 = vmatprep.subr.bf16.mxu0 0
        %2809 = vmatpush1.bf16.msra.mxu0 %v2121
        %2810 = vmatprep.subr.bf16.mxu0 0
        %2811 = vmatpush1.bf16.msra.mxu0 %v2122
        %2812 = vmatprep.subr.bf16.mxu0 0
        %2813 = vmatpush1.bf16.msra.mxu0 %v2123
        %2814 = vmatprep.subr.bf16.mxu0 0
        %2815 = vmatpush1.bf16.msra.mxu0 %v2124
        %2816 = vmatprep.subr.bf16.mxu0 0
        %2817 = vmatpush1.bf16.msra.mxu0 %v2125
        %2818 = vmatprep.subr.bf16.mxu0 0
        %2819 = vmatpush1.bf16.msra.mxu0 %v2126
        %2820 = vmatprep.subr.bf16.mxu0 0
        %2821 = vmatpush1.bf16.msra.mxu0 %v2127
        %2822 = vmatprep.subr.bf16.mxu0 0
        %2823 = vmatpush1.bf16.msra.mxu0 %v2128
        %2824 = vmatprep.subr.bf16.mxu0 0
        %2825 = vmatpush1.bf16.msra.mxu0 %v2129
        %2826 = vmatprep.mubr.bf16.mxu0 %v449
        %2827 = vmatmul.mubr.bf16.gmra.mrb[0].mxu0 %v448
        %v2828 = vpop.f32.mrb[0].mxu0
        %v2829 = vadd.f32 %v2789, %v2828
        %v2830 = vpop.f32.mrb[0].mxu0
        %v2831 = vpop.f32.mrb[0].mxu0
        %v2832 = vpop.f32.mrb[0].mxu0
        %2833 = vdwg.mxu0
        %2834 = vmatprep.subr.bf16.mxu0 0
        %2835 = vmatpush1.bf16.msra.mxu0 %v2130
        %2836 = vmatprep.subr.bf16.mxu0 0
        %2837 = vmatpush1.bf16.msra.mxu0 %v2131
        %2838 = vmatprep.subr.bf16.mxu0 0
        %2839 = vmatpush1.bf16.msra.mxu0 %v2132
        %2840 = vmatprep.subr.bf16.mxu0 0
        %2841 = vmatpush1.bf16.msra.mxu0 %v2133
        %2842 = vmatprep.subr.bf16.mxu0 0
        %2843 = vmatpush1.bf16.msra.mxu0 %v2134
        %2844 = vmatprep.subr.bf16.mxu0 0
        %2845 = vmatpush1.bf16.msra.mxu0 %v2135
        %2846 = vmatprep.subr.bf16.mxu0 0
        %2847 = vmatpush1.bf16.msra.mxu0 %v2136
        %2848 = vmatprep.subr.bf16.mxu0 0
        %2849 = vmatpush1.bf16.msra.mxu0 %v2137
        %2850 = vmatprep.subr.bf16.mxu0 0
        %2851 = vmatpush1.bf16.msra.mxu0 %v2138
        %2852 = vmatprep.subr.bf16.mxu0 0
        %2853 = vmatpush1.bf16.msra.mxu0 %v2139
        %2854 = vmatprep.subr.bf16.mxu0 0
        %2855 = vmatpush1.bf16.msra.mxu0 %v2140
        %2856 = vmatprep.subr.bf16.mxu0 0
        %2857 = vmatpush1.bf16.msra.mxu0 %v2141
        %2858 = vmatprep.subr.bf16.mxu0 0
        %2859 = vmatpush1.bf16.msra.mxu0 %v2142
        %2860 = vmatprep.subr.bf16.mxu0 0
        %2861 = vmatpush1.bf16.msra.mxu0 %v2143
        %2862 = vmatprep.subr.bf16.mxu0 0
        %2863 = vmatpush1.bf16.msra.mxu0 %v2144
        %2864 = vmatprep.subr.bf16.mxu0 0
        %2865 = vmatpush1.bf16.msra.mxu0 %v2145
        %2866 = vmatprep.mubr.bf16.mxu0 %v451
        %2867 = vmatmul.mubr.bf16.gmra.mrb[0].mxu0 %v450
        %v2868 = vpop.f32.mrb[0].mxu0
        %v2869 = vadd.f32 %v2829, %v2868
        %v2870 = vpop.f32.mrb[0].mxu0
        %v2871 = vpop.f32.mrb[0].mxu0
        %v2872 = vpop.f32.mrb[0].mxu0
        %2873 = vdwg.mxu0
        %2874 = vmatprep.subr.bf16.mxu0 0
        %2875 = vmatpush1.bf16.msra.mxu0 %v2146
        %2876 = vmatprep.subr.bf16.mxu0 0
        %2877 = vmatpush1.bf16.msra.mxu0 %v2147
        %2878 = vmatprep.subr.bf16.mxu0 0
        %2879 = vmatpush1.bf16.msra.mxu0 %v2148
        %2880 = vmatprep.subr.bf16.mxu0 0
        %2881 = vmatpush1.bf16.msra.mxu0 %v2149
        %2882 = vmatprep.subr.bf16.mxu0 0
        %2883 = vmatpush1.bf16.msra.mxu0 %v2150
        %2884 = vmatprep.subr.bf16.mxu0 0
        %2885 = vmatpush1.bf16.msra.mxu0 %v2151
        %2886 = vmatprep.subr.bf16.mxu0 0
        %2887 = vmatpush1.bf16.msra.mxu0 %v2152
        %2888 = vmatprep.subr.bf16.mxu0 0
        %2889 = vmatpush1.bf16.msra.mxu0 %v2153
        %2890 = vmatprep.subr.bf16.mxu0 0
        %2891 = vmatpush1.bf16.msra.mxu0 %v2154
        %2892 = vmatprep.subr.bf16.mxu0 0
        %2893 = vmatpush1.bf16.msra.mxu0 %v2155
        %2894 = vmatprep.subr.bf16.mxu0 0
        %2895 = vmatpush1.bf16.msra.mxu0 %v2156
        %2896 = vmatprep.subr.bf16.mxu0 0
        %2897 = vmatpush1.bf16.msra.mxu0 %v2157
        %2898 = vmatprep.subr.bf16.mxu0 0
        %2899 = vmatpush1.bf16.msra.mxu0 %v2158
        %2900 = vmatprep.subr.bf16.mxu0 0
        %2901 = vmatpush1.bf16.msra.mxu0 %v2159
        %2902 = vmatprep.subr.bf16.mxu0 0
        %2903 = vmatpush1.bf16.msra.mxu0 %v2160
        %2904 = vmatprep.subr.bf16.mxu0 0
        %2905 = vmatpush1.bf16.msra.mxu0 %v2161
        %2906 = vmatprep.mubr.bf16.mxu0 %v453
        %2907 = vmatmul.mubr.bf16.gmra.mrb[0].mxu0 %v452
        %v2908 = vpop.f32.mrb[0].mxu0
        %v2909 = vadd.f32 %v2869, %v2908
        %v2910 = vpop.f32.mrb[0].mxu0
        %v2911 = vpop.f32.mrb[0].mxu0
        %v2912 = vpop.f32.mrb[0].mxu0
        %2913 = vdwg.mxu0
        %2914 = vmatprep.subr.bf16.mxu0 0
        %2915 = vmatpush1.bf16.msra.mxu0 %v2162
        %2916 = vmatprep.subr.bf16.mxu0 0
        %2917 = vmatpush1.bf16.msra.mxu0 %v2163
        %2918 = vmatprep.subr.bf16.mxu0 0
        %2919 = vmatpush1.bf16.msra.mxu0 %v2164
        %2920 = vmatprep.subr.bf16.mxu0 0
        %2921 = vmatpush1.bf16.msra.mxu0 %v2165
        %2922 = vmatprep.subr.bf16.mxu0 0
        %2923 = vmatpush1.bf16.msra.mxu0 %v2166
        %2924 = vmatprep.subr.bf16.mxu0 0
        %2925 = vmatpush1.bf16.msra.mxu0 %v2167
        %2926 = vmatprep.subr.bf16.mxu0 0
        %2927 = vmatpush1.bf16.msra.mxu0 %v2168
        %2928 = vmatprep.subr.bf16.mxu0 0
        %2929 = vmatpush1.bf16.msra.mxu0 %v2169
        %2930 = vmatprep.subr.bf16.mxu0 0
        %2931 = vmatpush1.bf16.msra.mxu0 %v2170
        %2932 = vmatprep.subr.bf16.mxu0 0
        %2933 = vmatpush1.bf16.msra.mxu0 %v2171
        %2934 = vmatprep.subr.bf16.mxu0 0
        %2935 = vmatpush1.bf16.msra.mxu0 %v2172
        %2936 = vmatprep.subr.bf16.mxu0 0
        %2937 = vmatpush1.bf16.msra.mxu0 %v2173
        %2938 = vmatprep.subr.bf16.mxu0 0
        %2939 = vmatpush1.bf16.msra.mxu0 %v2174
        %2940 = vmatprep.subr.bf16.mxu0 0
        %2941 = vmatpush1.bf16.msra.mxu0 %v2175
        %2942 = vmatprep.subr.bf16.mxu0 0
        %2943 = vmatpush1.bf16.msra.mxu0 %v2176
        %2944 = vmatprep.subr.bf16.mxu0 0
        %2945 = vmatpush1.bf16.msra.mxu0 %v2177
        %2946 = vmatprep.mubr.bf16.mxu0 %v455
        %2947 = vmatmul.mubr.bf16.gmra.mrb[0].mxu0 %v454
        %v2948 = vpop.f32.mrb[0].mxu0
        %v2949 = vadd.f32 %v2909, %v2948
        %v2950 = vpop.f32.mrb[0].mxu0
        %v2951 = vpop.f32.mrb[0].mxu0
        %v2952 = vpop.f32.mrb[0].mxu0
        %2953 = vdwg.mxu0
        %2954 = vmatprep.subr.bf16.mxu0 0
        %2955 = vmatpush1.bf16.msra.mxu0 %v2178
        %2956 = vmatprep.subr.bf16.mxu0 0
        %2957 = vmatpush1.bf16.msra.mxu0 %v2179
        %2958 = vmatprep.subr.bf16.mxu0 0
        %2959 = vmatpush1.bf16.msra.mxu0 %v2180
        %2960 = vmatprep.subr.bf16.mxu0 0
        %2961 = vmatpush1.bf16.msra.mxu0 %v2181
        %2962 = vmatprep.subr.bf16.mxu0 0
        %2963 = vmatpush1.bf16.msra.mxu0 %v2182
        %2964 = vmatprep.subr.bf16.mxu0 0
        %2965 = vmatpush1.bf16.msra.mxu0 %v2183
        %2966 = vmatprep.subr.bf16.mxu0 0
        %2967 = vmatpush1.bf16.msra.mxu0 %v2184
        %2968 = vmatprep.subr.bf16.mxu0 0
        %2969 = vmatpush1.bf16.msra.mxu0 %v2185
        %2970 = vmatprep.subr.bf16.mxu0 0
        %2971 = vmatpush1.bf16.msra.mxu0 %v2186
        %2972 = vmatprep.subr.bf16.mxu0 0
        %2973 = vmatpush1.bf16.msra.mxu0 %v2187
        %2974 = vmatprep.subr.bf16.mxu0 0
        %2975 = vmatpush1.bf16.msra.mxu0 %v2188
        %2976 = vmatprep.subr.bf16.mxu0 0
        %2977 = vmatpush1.bf16.msra.mxu0 %v2189
        %2978 = vmatprep.subr.bf16.mxu0 0
        %2979 = vmatpush1.bf16.msra.mxu0 %v2190
        %2980 = vmatprep.subr.bf16.mxu0 0
        %2981 = vmatpush1.bf16.msra.mxu0 %v2191
        %2982 = vmatprep.subr.bf16.mxu0 0
        %2983 = vmatpush1.bf16.msra.mxu0 %v2192
        %2984 = vmatprep.subr.bf16.mxu0 0
        %2985 = vmatpush1.bf16.msra.mxu0 %v2193
        %2986 = vmatprep.mubr.bf16.mxu0 %v457
        %2987 = vmatmul.mubr.bf16.gmra.mrb[0].mxu0 %v456
        %v2988 = vpop.f32.mrb[0].mxu0
        %v2989 = vadd.f32 %v2949, %v2988
        %v2990 = vpop.f32.mrb[0].mxu0
        %v2991 = vpop.f32.mrb[0].mxu0
        %v2992 = vpop.f32.mrb[0].mxu0
        %2993 = vdwg.mxu0
        %2994 = vmatprep.subr.bf16.mxu0 0
        %2995 = vmatpush1.bf16.msra.mxu0 %v2194
        %2996 = vmatprep.subr.bf16.mxu0 0
        %2997 = vmatpush1.bf16.msra.mxu0 %v2195
        %2998 = vmatprep.subr.bf16.mxu0 0
        %2999 = vmatpush1.bf16.msra.mxu0 %v2196
        %3000 = vmatprep.subr.bf16.mxu0 0
        %3001 = vmatpush1.bf16.msra.mxu0 %v2197
        %3002 = vmatprep.subr.bf16.mxu0 0
        %3003 = vmatpush1.bf16.msra.mxu0 %v2198
        %3004 = vmatprep.subr.bf16.mxu0 0
        %3005 = vmatpush1.bf16.msra.mxu0 %v2199
        %3006 = vmatprep.subr.bf16.mxu0 0
        %3007 = vmatpush1.bf16.msra.mxu0 %v2200
        %3008 = vmatprep.subr.bf16.mxu0 0
        %3009 = vmatpush1.bf16.msra.mxu0 %v2201
        %3010 = vmatprep.subr.bf16.mxu0 0
        %3011 = vmatpush1.bf16.msra.mxu0 %v2202
        %3012 = vmatprep.subr.bf16.mxu0 0
        %3013 = vmatpush1.bf16.msra.mxu0 %v2203
        %3014 = vmatprep.subr.bf16.mxu0 0
        %3015 = vmatpush1.bf16.msra.mxu0 %v2204
        %3016 = vmatprep.subr.bf16.mxu0 0
        %3017 = vmatpush1.bf16.msra.mxu0 %v2205
        %3018 = vmatprep.subr.bf16.mxu0 0
        %3019 = vmatpush1.bf16.msra.mxu0 %v2206
        %3020 = vmatprep.subr.bf16.mxu0 0
        %3021 = vmatpush1.bf16.msra.mxu0 %v2207
        %3022 = vmatprep.subr.bf16.mxu0 0
        %3023 = vmatpush1.bf16.msra.mxu0 %v2208
        %3024 = vmatprep.subr.bf16.mxu0 0
        %3025 = vmatpush1.bf16.msra.mxu0 %v2209
        %3026 = vmatprep.mubr.bf16.mxu0 %v459
        %3027 = vmatmul.mubr.bf16.gmra.mrb[0].mxu0 %v458
        %v3028 = vpop.f32.mrb[0].mxu0
        %v3029 = vadd.f32 %v2989, %v3028
        %v3030 = vpop.f32.mrb[0].mxu0
        %v3031 = vpop.f32.mrb[0].mxu0
        %v3032 = vpop.f32.mrb[0].mxu0
        %3033 = vdwg.mxu0
        %3034 = vmatprep.subr.bf16.mxu0 0
        %3035 = vmatpush1.bf16.msra.mxu0 %v2210
        %3036 = vmatprep.subr.bf16.mxu0 0
        %3037 = vmatpush1.bf16.msra.mxu0 %v2211
        %3038 = vmatprep.subr.bf16.mxu0 0
        %3039 = vmatpush1.bf16.msra.mxu0 %v2212
        %3040 = vmatprep.subr.bf16.mxu0 0
        %3041 = vmatpush1.bf16.msra.mxu0 %v2213
        %3042 = vmatprep.subr.bf16.mxu0 0
        %3043 = vmatpush1.bf16.msra.mxu0 %v2214
        %3044 = vmatprep.subr.bf16.mxu0 0
        %3045 = vmatpush1.bf16.msra.mxu0 %v2215
        %3046 = vmatprep.subr.bf16.mxu0 0
        %3047 = vmatpush1.bf16.msra.mxu0 %v2216
        %3048 = vmatprep.subr.bf16.mxu0 0
        %3049 = vmatpush1.bf16.msra.mxu0 %v2217
        %3050 = vmatprep.subr.bf16.mxu0 0
        %3051 = vmatpush1.bf16.msra.mxu0 %v2218
        %3052 = vmatprep.subr.bf16.mxu0 0
        %3053 = vmatpush1.bf16.msra.mxu0 %v2219
        %3054 = vmatprep.subr.bf16.mxu0 0
        %3055 = vmatpush1.bf16.msra.mxu0 %v2220
        %3056 = vmatprep.subr.bf16.mxu0 0
        %3057 = vmatpush1.bf16.msra.mxu0 %v2221
        %3058 = vmatprep.subr.bf16.mxu0 0
        %3059 = vmatpush1.bf16.msra.mxu0 %v2222
        %3060 = vmatprep.subr.bf16.mxu0 0
        %3061 = vmatpush1.bf16.msra.mxu0 %v2223
        %3062 = vmatprep.subr.bf16.mxu0 0
        %3063 = vmatpush1.bf16.msra.mxu0 %v2224
        %3064 = vmatprep.subr.bf16.mxu0 0
        %3065 = vmatpush1.bf16.msra.mxu0 %v2225
        %3066 = vmatprep.mubr.bf16.mxu0 %v461
        %3067 = vmatmul.mubr.bf16.gmra.mrb[0].mxu0 %v460
        %v3068 = vpop.f32.mrb[0].mxu0
        %v3069 = vadd.f32 %v3029, %v3068
        %v3070 = vpop.f32.mrb[0].mxu0
        %v3071 = vpop.f32.mrb[0].mxu0
        %v3072 = vpop.f32.mrb[0].mxu0
        %3073 = vdwg.mxu0
        %3074 = vmatprep.subr.bf16.mxu0 0
        %3075 = vmatpush1.bf16.msra.mxu0 %v2226
        %3076 = vmatprep.subr.bf16.mxu0 0
        %3077 = vmatpush1.bf16.msra.mxu0 %v2227
        %3078 = vmatprep.subr.bf16.mxu0 0
        %3079 = vmatpush1.bf16.msra.mxu0 %v2228
        %3080 = vmatprep.subr.bf16.mxu0 0
        %3081 = vmatpush1.bf16.msra.mxu0 %v2229
        %3082 = vmatprep.subr.bf16.mxu0 0
        %3083 = vmatpush1.bf16.msra.mxu0 %v2230
        %3084 = vmatprep.subr.bf16.mxu0 0
        %3085 = vmatpush1.bf16.msra.mxu0 %v2231
        %3086 = vmatprep.subr.bf16.mxu0 0
        %3087 = vmatpush1.bf16.msra.mxu0 %v2232
        %3088 = vmatprep.subr.bf16.mxu0 0
        %3089 = vmatpush1.bf16.msra.mxu0 %v2233
        %3090 = vmatprep.subr.bf16.mxu0 0
        %3091 = vmatpush1.bf16.msra.mxu0 %v2234
        %3092 = vmatprep.subr.bf16.mxu0 0
        %3093 = vmatpush1.bf16.msra.mxu0 %v2235
        %3094 = vmatprep.subr.bf16.mxu0 0
        %3095 = vmatpush1.bf16.msra.mxu0 %v2236
        %3096 = vmatprep.subr.bf16.mxu0 0
        %3097 = vmatpush1.bf16.msra.mxu0 %v2237
        %3098 = vmatprep.subr.bf16.mxu0 0
        %3099 = vmatpush1.bf16.msra.mxu0 %v2238
        %3100 = vmatprep.subr.bf16.mxu0 0
        %3101 = vmatpush1.bf16.msra.mxu0 %v2239
        %3102 = vmatprep.subr.bf16.mxu0 0
        %3103 = vmatpush1.bf16.msra.mxu0 %v2240
        %3104 = vmatprep.subr.bf16.mxu0 0
        %3105 = vmatpush1.bf16.msra.mxu0 %v2241
        %3106 = vmatprep.mubr.bf16.mxu0 %v463
        %3107 = vmatmul.mubr.bf16.gmra.mrb[0].mxu0 %v462
        %v3108 = vpop.f32.mrb[0].mxu0
        %v3109 = vadd.f32 %v3069, %v3108
        %v3110 = vpop.f32.mrb[0].mxu0
        %v3111 = vpop.f32.mrb[0].mxu0
        %v3112 = vpop.f32.mrb[0].mxu0
        %3113 = vdwg.mxu0
        %3114 = vmatprep.subr.bf16.mxu0 0
        %3115 = vmatpush1.bf16.msra.mxu0 %v2242
        %3116 = vmatprep.subr.bf16.mxu0 0
        %3117 = vmatpush1.bf16.msra.mxu0 %v2243
        %3118 = vmatprep.subr.bf16.mxu0 0
        %3119 = vmatpush1.bf16.msra.mxu0 %v2244
        %3120 = vmatprep.subr.bf16.mxu0 0
        %3121 = vmatpush1.bf16.msra.mxu0 %v2245
        %3122 = vmatprep.subr.bf16.mxu0 0
        %3123 = vmatpush1.bf16.msra.mxu0 %v2246
        %3124 = vmatprep.subr.bf16.mxu0 0
        %3125 = vmatpush1.bf16.msra.mxu0 %v2247
        %3126 = vmatprep.subr.bf16.mxu0 0
        %3127 = vmatpush1.bf16.msra.mxu0 %v2248
        %3128 = vmatprep.subr.bf16.mxu0 0
        %3129 = vmatpush1.bf16.msra.mxu0 %v2249
        %3130 = vmatprep.subr.bf16.mxu0 0
        %3131 = vmatpush1.bf16.msra.mxu0 %v2250
        %3132 = vmatprep.subr.bf16.mxu0 0
        %3133 = vmatpush1.bf16.msra.mxu0 %v2251
        %3134 = vmatprep.subr.bf16.mxu0 0
        %3135 = vmatpush1.bf16.msra.mxu0 %v2252
        %3136 = vmatprep.subr.bf16.mxu0 0
        %3137 = vmatpush1.bf16.msra.mxu0 %v2253
        %3138 = vmatprep.subr.bf16.mxu0 0
        %3139 = vmatpush1.bf16.msra.mxu0 %v2254
        %3140 = vmatprep.subr.bf16.mxu0 0
        %3141 = vmatpush1.bf16.msra.mxu0 %v2255
        %3142 = vmatprep.subr.bf16.mxu0 0
        %3143 = vmatpush1.bf16.msra.mxu0 %v2256
        %3144 = vmatprep.subr.bf16.mxu0 0
        %3145 = vmatpush1.bf16.msra.mxu0 %v2257
        %3146 = vmatprep.mubr.bf16.mxu0 %v465
        %3147 = vmatmul.mubr.bf16.gmra.mrb[0].mxu0 %v464
        %v3148 = vpop.f32.mrb[0].mxu0
        %v3149 = vadd.f32 %v3109, %v3148
        %v3150 = vpop.f32.mrb[0].mxu0
        %v3151 = vpop.f32.mrb[0].mxu0
        %v3152 = vpop.f32.mrb[0].mxu0
        %3153 = vdwg.mxu0
        %v3154 = vadd.f32 %v257, %v3149
        %3155 = vst [vmem:[#allocation2] sm:$0x3] %v3154
        // Predicated region
        $region45: #{simple_model_forward.2} parent=31 // pred_check
          %p3156 = pneg %p239
        $region46: #{simple_model_forward.2} parent=31 // pred_check_branch
          %3158 = sbr.rel (%p3156) target = $region48
        $region47: #{simple_model_forward.2} parent=31 // pred_region
          %v3159 = vld [vmem:[#allocation2] sm:$0x3]
          %v3160 = vld [vmem:[%s209] sm:$0x1]
          %v3162 = vlaneseq
          %v3163 = vshrl.u32 %v3162, 7
          %v3164 = vsub.s32 0, %v3163
          %v3165 = vrot.slane %v3160, %v3164
          %v3167 = vadd.f32 %v3159, %v3165
          %v3168 = vmax.f32 %v3167, 0.0
          %v3169 = vpack.c.bf16 %v3168, %v3168
          %3170 = vst [vmem:[%s237] sm:$0x1] %v3169
        $region48: #{simple_model_forward.2} parent=31 // pred_fallthru
          _
        %p3171 = scmp.lt.s32.totalorder %s24, 1
        %s3172 = scalar_select %p3171, %s24, 1
        %s3173 = scalar_lea.vmem %s3, %s3172
        // Predicated region
        $region49: #{simple_model_forward.2} parent=31 // pred_check
          %p3174 = pneg %p125
        $region50: #{simple_model_forward.2} parent=31 // pred_check_branch
          %3176 = sbr.rel (%p3174) target = $region52
        $region51: #{simple_model_forward.2} parent=31 // pred_region
          _
        $region52: #{simple_model_forward.2} parent=31 // pred_fallthru
          _
      $region32: #{simple_model_forward.2} parent=5 // pred_fallthru
        _
      %p3177 = scmp.le.s32.totalorder 2, %s15
      // Predicated region
      $region53: #{simple_model_forward.2} parent=5 // pred_check
        %p3178 = pneg %p3177
      $region54: #{simple_model_forward.2} parent=5 // pred_check_branch
        %3180 = sbr.rel (%p3178) target = $region56
      $region55: #{simple_model_forward.2} parent=5 // pred_region
        %s3181 = ssub.s32 %s15, 2
        // Predicated region
        $region57: #{simple_model_forward.2} parent=55 // pred_check
          %p3182 = pneg %p131
        $region58: #{simple_model_forward.2} parent=55 // pred_check_branch
          %3184 = sbr.rel (%p3182) target = $region60
        $region59: #{simple_model_forward.2} parent=55 // pred_region
          %p3185 = scmp.lt.s32.totalorder %s26, 1
          %s3186 = scalar_select %p3185, %s26, 1
          %s3187 = scalar_lea.vmem %s3, %s3186
        $region60: #{simple_model_forward.2} parent=55 // pred_fallthru
          _
      $region56: #{simple_model_forward.2} parent=5 // pred_fallthru
        _
    $region6: #{simple_model_forward.2} parent=1 // loop_footer
      %s19 = sadd.s32 1, %s15
    $region7: #{simple_model_forward.2} parent=1 // loop_footer_branch
      %14 = sbr.rel target = $region3
    $region8: #{simple_model_forward.2} parent=1 // loop_exit
      _
    %3188 = vsyncpa [#allocation4], 1
    %s3189 = scalar_lea.sflag [#allocation4], 1
    %3190 = vsyncpa %s3189, 1
    %3191 = vsyncpa [#allocation6], 1
    %s3192 = scalar_lea.sflag [#allocation6], 1
    %3193 = vsyncpa %s3192, 1

// kernel: simple_model_forward.3
$region0: #{simple_model_forward.3}
  #allocation0 [shape = 'u32[]', space=smem, size = 0x4, offset = 0x4, fixed_abs, tag = 'smem constant byte address 0x4 - core index']
  #allocation1 [shape = 'u32[144,128]{1,0:T(1,128)}', space=vmem, size = 0x12000, scoped, tag = 'internal scratch']
  %s0 = inlined_call_operand.vmem [shape: bf16[2,256], index: 0, kind: input, shape index: {}]
  %s1 = inlined_call_operand.vmem [shape: bf16[256,128], index: 1, kind: input, shape index: {}]
  %s2 = inlined_call_operand.vmem [shape: f32[1,128], index: 2, kind: input, shape index: {}]
  %s3 = inlined_call_operand.vmem [shape: bf16[128,64], index: 3, kind: input, shape index: {}]
  %s4 = inlined_call_operand.vmem [shape: f32[1,64], index: 4, kind: input, shape index: {}]
  %s5 = inlined_call_operand.vmem [shape: bf16[64,6], index: 5, kind: input, shape index: {}]
  %s6 = inlined_call_operand.vmem [shape: f32[1,6], index: 6, kind: input, shape index: {}]
  %s7 = inlined_call_operand.hbm [shape: f32[2,6], index: 7, kind: output, shape index: {}]
  %s8 = sld [smem:[#allocation0]]
  $region38: #{simple_model_forward.3} parent=0
    _
  %s10 = ssub.s32 1, %s8
  %s11 = scalar_select 0, %s10, %s8
  $region1: #{simple_model_forward.3} parent=0
    #allocation2 [shape = 'u8[1024]{0}', space=vmem, size = 0x400, scoped, tag = 'output window, operand 0, single buffered']
    #allocation3 [shape = 's32[1]{0}', space=sflag, size = 0x4, scoped, tag = 'scoped memory for simple_model_forward.3']
    %12 = vsyncpa [#allocation3], 0
    // Predicated region
    $region2: #{simple_model_forward.3} parent=1 // pred_check
      _
    $region3: #{simple_model_forward.3} parent=1 // pred_check_branch
      %14 = sbr.rel (0) target = $region5
    $region4: #{simple_model_forward.3} parent=1 // pred_region
      _
    $region5: #{simple_model_forward.3} parent=1 // pred_fallthru
      _
    // Predicated region
    $region6: #{simple_model_forward.3} parent=1 // pred_check
      _
    $region7: #{simple_model_forward.3} parent=1 // pred_check_branch
      %16 = sbr.rel (0) target = $region9
    $region8: #{simple_model_forward.3} parent=1 // pred_region
      _
    $region9: #{simple_model_forward.3} parent=1 // pred_fallthru
      _
    // Predicated region
    $region10: #{simple_model_forward.3} parent=1 // pred_check
      _
    $region11: #{simple_model_forward.3} parent=1 // pred_check_branch
      %18 = sbr.rel (0) target = $region13
    $region12: #{simple_model_forward.3} parent=1 // pred_region
      _
    $region13: #{simple_model_forward.3} parent=1 // pred_fallthru
      _
    // Predicated region
    $region14: #{simple_model_forward.3} parent=1 // pred_check
      _
    $region15: #{simple_model_forward.3} parent=1 // pred_check_branch
      %20 = sbr.rel (0) target = $region17
    $region16: #{simple_model_forward.3} parent=1 // pred_region
      _
    $region17: #{simple_model_forward.3} parent=1 // pred_fallthru
      _
    // Predicated region
    $region18: #{simple_model_forward.3} parent=1 // pred_check
      _
    $region19: #{simple_model_forward.3} parent=1 // pred_check_branch
      %22 = sbr.rel (0) target = $region21
    $region20: #{simple_model_forward.3} parent=1 // pred_region
      _
    $region21: #{simple_model_forward.3} parent=1 // pred_fallthru
      _
    // Predicated region
    $region22: #{simple_model_forward.3} parent=1 // pred_check
      _
    $region23: #{simple_model_forward.3} parent=1 // pred_check_branch
      %24 = sbr.rel (0) target = $region25
    $region24: #{simple_model_forward.3} parent=1 // pred_region
      _
    $region25: #{simple_model_forward.3} parent=1 // pred_fallthru
      _
    // Predicated region
    $region26: #{simple_model_forward.3} parent=1 // pred_check
      _
    $region27: #{simple_model_forward.3} parent=1 // pred_check_branch
      %26 = sbr.rel (0) target = $region29
    $region28: #{simple_model_forward.3} parent=1 // pred_region
      _
    $region29: #{simple_model_forward.3} parent=1 // pred_fallthru
      _
    %v28 = vld [vmem:[%s0] sm:$0x3]
    %v29 = vld [vmem:[%s1] sm:$0xf]
    %v30 = vld [vmem:[%s1 + $0x4] sm:$0xf]
    %v31 = vld [vmem:[%s1 + $0x8] sm:$0xf]
    %v32 = vld [vmem:[%s1 + $0xc] sm:$0xf]
    %v33 = vld [vmem:[%s1 + $0x10] sm:$0xf]
    %v34 = vld [vmem:[%s1 + $0x14] sm:$0xf]
    %v35 = vld [vmem:[%s1 + $0x18] sm:$0xf]
    %v36 = vld [vmem:[%s1 + $0x1c] sm:$0xf]
    %v37 = vld [vmem:[%s1 + $0x20] sm:$0xf]
    %v38 = vld [vmem:[%s1 + $0x24] sm:$0xf]
    %v39 = vld [vmem:[%s1 + $0x28] sm:$0xf]
    %v40 = vld [vmem:[%s1 + $0x2c] sm:$0xf]
    %v41 = vld [vmem:[%s1 + $0x30] sm:$0xf]
    %v42 = vld [vmem:[%s1 + $0x34] sm:$0xf]
    %v43 = vld [vmem:[%s1 + $0x38] sm:$0xf]
    %v44 = vld [vmem:[%s1 + $0x3c] sm:$0xf]
    %v45 = vld [vmem:[%s1 + $0x40] sm:$0xf]
    %v46 = vld [vmem:[%s1 + $0x44] sm:$0xf]
    %v47 = vld [vmem:[%s1 + $0x48] sm:$0xf]
    %v48 = vld [vmem:[%s1 + $0x4c] sm:$0xf]
    %v49 = vld [vmem:[%s1 + $0x50] sm:$0xf]
    %v50 = vld [vmem:[%s1 + $0x54] sm:$0xf]
    %v51 = vld [vmem:[%s1 + $0x58] sm:$0xf]
    %v52 = vld [vmem:[%s1 + $0x5c] sm:$0xf]
    %v53 = vld [vmem:[%s1 + $0x60] sm:$0xf]
    %v54 = vld [vmem:[%s1 + $0x64] sm:$0xf]
    %v55 = vld [vmem:[%s1 + $0x68] sm:$0xf]
    %v56 = vld [vmem:[%s1 + $0x6c] sm:$0xf]
    %v57 = vld [vmem:[%s1 + $0x70] sm:$0xf]
    %v58 = vld [vmem:[%s1 + $0x74] sm:$0xf]
    %v59 = vld [vmem:[%s1 + $0x78] sm:$0xf]
    %v60 = vld [vmem:[%s1 + $0x7c] sm:$0xf]
    %v61 = vld [vmem:[%s2] sm:$0x1]
    %v63 = vlaneseq
    %v64 = vshrl.u32 %v63, 7
    %v65 = vsub.s32 0, %v64
    %v66 = vrot.slane %v61, %v65
    %v70 = vunpack.c.l.s4 1966171168
    %v71 = vunpack.c.0.s8 %v70
    %v72 = vlaneseq
    %v73 = vshrl.u32 %v72, 7
    %v74 = vsub.s32 %v71, %v73
    %v75 = vrot.slane %v28, %v74
    %v76 = vcombine.high %v75, %v75
    %v78 = vunpack.c.l.s4 1966171168
    %v79 = vunpack.c.0.s8 %v78
    %v80 = vlaneseq
    %v81 = vshrl.u32 %v80, 7
    %v82 = vsub.s32 %v79, %v81
    %v83 = vrot.slane %v75, %v82
    %v85 = vunpack.c.l.s4 1966171168
    %v86 = vunpack.c.0.s8 %v85
    %v87 = vlaneseq
    %v88 = vshrl.u32 %v87, 7
    %v89 = vsub.s32 %v86, %v88
    %v90 = vrot.slane %v76, %v89
    %v125 = vunpack.c.l.b16 %v29
    %v126 = vunpack.c.l.b16 %v30
    %v127 = vunpack.c.l.b16 %v31
    %v128 = vunpack.c.l.b16 %v32
    %v129 = vunpack.c.l.b16 %v33
    %v130 = vunpack.c.l.b16 %v34
    %v131 = vunpack.c.l.b16 %v35
    %v132 = vunpack.c.l.b16 %v36
    %v133 = vunpack.c.l.b16 %v37
    %v134 = vunpack.c.l.b16 %v38
    %v135 = vunpack.c.l.b16 %v39
    %v136 = vunpack.c.l.b16 %v40
    %v137 = vunpack.c.l.b16 %v41
    %v138 = vunpack.c.l.b16 %v42
    %v139 = vunpack.c.l.b16 %v43
    %v140 = vunpack.c.l.b16 %v44
    %v141 = vunpack.c.l.b16 %v45
    %v142 = vunpack.c.l.b16 %v46
    %v143 = vunpack.c.l.b16 %v47
    %v144 = vunpack.c.l.b16 %v48
    %v145 = vunpack.c.l.b16 %v49
    %v146 = vunpack.c.l.b16 %v50
    %v147 = vunpack.c.l.b16 %v51
    %v148 = vunpack.c.l.b16 %v52
    %v149 = vunpack.c.l.b16 %v53
    %v150 = vunpack.c.l.b16 %v54
    %v151 = vunpack.c.l.b16 %v55
    %v152 = vunpack.c.l.b16 %v56
    %v153 = vunpack.c.l.b16 %v57
    %v154 = vunpack.c.l.b16 %v58
    %v155 = vunpack.c.l.b16 %v59
    %v156 = vunpack.c.l.b16 %v60
    %v157 = vpack.c.b16 %v126, %v125
    %v158 = vpack.c.b16 %v128, %v127
    %v159 = vpack.c.b16 %v130, %v129
    %v160 = vpack.c.b16 %v132, %v131
    %v161 = vpack.c.b16 %v134, %v133
    %v162 = vpack.c.b16 %v136, %v135
    %v163 = vpack.c.b16 %v138, %v137
    %v164 = vpack.c.b16 %v140, %v139
    %v165 = vpack.c.b16 %v142, %v141
    %v166 = vpack.c.b16 %v144, %v143
    %v167 = vpack.c.b16 %v146, %v145
    %v168 = vpack.c.b16 %v148, %v147
    %v169 = vpack.c.b16 %v150, %v149
    %v170 = vpack.c.b16 %v152, %v151
    %v171 = vpack.c.b16 %v154, %v153
    %v172 = vpack.c.b16 %v156, %v155
    %189 = vmatprep.subr.bf16.mxu0 0
    %190 = vmatpush1.bf16.msra.mxu0 %v157
    %191 = vmatprep.subr.bf16.mxu0 0
    %192 = vmatpush1.bf16.msra.mxu0 %v158
    %193 = vmatprep.subr.bf16.mxu0 0
    %194 = vmatpush1.bf16.msra.mxu0 %v159
    %195 = vmatprep.subr.bf16.mxu0 0
    %196 = vmatpush1.bf16.msra.mxu0 %v160
    %197 = vmatprep.subr.bf16.mxu0 0
    %198 = vmatpush1.bf16.msra.mxu0 %v161
    %199 = vmatprep.subr.bf16.mxu0 0
    %200 = vmatpush1.bf16.msra.mxu0 %v162
    %201 = vmatprep.subr.bf16.mxu0 0
    %202 = vmatpush1.bf16.msra.mxu0 %v163
    %203 = vmatprep.subr.bf16.mxu0 0
    %204 = vmatpush1.bf16.msra.mxu0 %v164
    %205 = vmatprep.subr.bf16.mxu0 0
    %206 = vmatpush1.bf16.msra.mxu0 %v165
    %207 = vmatprep.subr.bf16.mxu0 0
    %208 = vmatpush1.bf16.msra.mxu0 %v166
    %209 = vmatprep.subr.bf16.mxu0 0
    %210 = vmatpush1.bf16.msra.mxu0 %v167
    %211 = vmatprep.subr.bf16.mxu0 0
    %212 = vmatpush1.bf16.msra.mxu0 %v168
    %213 = vmatprep.subr.bf16.mxu0 0
    %214 = vmatpush1.bf16.msra.mxu0 %v169
    %215 = vmatprep.subr.bf16.mxu0 0
    %216 = vmatpush1.bf16.msra.mxu0 %v170
    %217 = vmatprep.subr.bf16.mxu0 0
    %218 = vmatpush1.bf16.msra.mxu0 %v171
    %219 = vmatprep.subr.bf16.mxu0 0
    %220 = vmatpush1.bf16.msra.mxu0 %v172
    %221 = vmatprep.mubr.bf16.mxu0 %v90
    %222 = vmatmul.mubr.bf16.gmra.mrb[0].mxu0 %v83
    %v223 = vpop.f32.mrb[0].mxu0
    %v224 = vadd.f32 %v66, %v223
    %v225 = vpop.f32.mrb[0].mxu0
    %v226 = vpop.f32.mrb[0].mxu0
    %v227 = vpop.f32.mrb[0].mxu0
    %228 = vdwg.mxu0
    %v229 = vmax.f32 %v224, 0.0
    %v230 = vpack.c.bf16 %v229, %v229
    %v231 = vld [vmem:[%s3] sm:$0xf]
    %v232 = vld [vmem:[%s3 + $0x4] sm:$0xf]
    %v233 = vld [vmem:[%s3 + $0x8] sm:$0xf]
    %v234 = vld [vmem:[%s3 + $0xc] sm:$0xf]
    %v235 = vld [vmem:[%s3 + $0x10] sm:$0xf]
    %v236 = vld [vmem:[%s3 + $0x14] sm:$0xf]
    %v237 = vld [vmem:[%s3 + $0x18] sm:$0xf]
    %v238 = vld [vmem:[%s3 + $0x1c] sm:$0xf]
    %v239 = vld [vmem:[%s3 + $0x20] sm:$0xf]
    %v240 = vld [vmem:[%s3 + $0x24] sm:$0xf]
    %v241 = vld [vmem:[%s3 + $0x28] sm:$0xf]
    %v242 = vld [vmem:[%s3 + $0x2c] sm:$0xf]
    %v243 = vld [vmem:[%s3 + $0x30] sm:$0xf]
    %v244 = vld [vmem:[%s3 + $0x34] sm:$0xf]
    %v245 = vld [vmem:[%s3 + $0x38] sm:$0xf]
    %v246 = vld [vmem:[%s3 + $0x3c] sm:$0xf]
    %v247 = vld [vmem:[%s4] sm:$0x1]
    %v249 = vlaneseq
    %v250 = vshrl.u32 %v249, 7
    %v251 = vsub.s32 0, %v250
    %v252 = vrot.slane %v247, %v251
    %v270 = vunpack.c.l.b16 %v231
    %v271 = vunpack.c.l.b16 %v232
    %v272 = vunpack.c.l.b16 %v233
    %v273 = vunpack.c.l.b16 %v234
    %v274 = vunpack.c.l.b16 %v235
    %v275 = vunpack.c.l.b16 %v236
    %v276 = vunpack.c.l.b16 %v237
    %v277 = vunpack.c.l.b16 %v238
    %v278 = vunpack.c.l.b16 %v239
    %v279 = vunpack.c.l.b16 %v240
    %v280 = vunpack.c.l.b16 %v241
    %v281 = vunpack.c.l.b16 %v242
    %v282 = vunpack.c.l.b16 %v243
    %v283 = vunpack.c.l.b16 %v244
    %v284 = vunpack.c.l.b16 %v245
    %v285 = vunpack.c.l.b16 %v246
    %v286 = vpack.c.b16 %v271, %v270
    %v287 = vpack.c.b16 %v273, %v272
    %v288 = vpack.c.b16 %v275, %v274
    %v289 = vpack.c.b16 %v277, %v276
    %v290 = vpack.c.b16 %v279, %v278
    %v291 = vpack.c.b16 %v281, %v280
    %v292 = vpack.c.b16 %v283, %v282
    %v293 = vpack.c.b16 %v285, %v284
    %302 = vmatprep.subr.bf16.mxu0 0
    %303 = vmatpush1.bf16.msra.mxu0 %v286
    %304 = vmatprep.subr.bf16.mxu0 0
    %305 = vmatpush1.bf16.msra.mxu0 %v287
    %306 = vmatprep.subr.bf16.mxu0 0
    %307 = vmatpush1.bf16.msra.mxu0 %v288
    %308 = vmatprep.subr.bf16.mxu0 0
    %309 = vmatpush1.bf16.msra.mxu0 %v289
    %310 = vmatprep.subr.bf16.mxu0 0
    %311 = vmatpush1.bf16.msra.mxu0 %v290
    %312 = vmatprep.subr.bf16.mxu0 0
    %313 = vmatpush1.bf16.msra.mxu0 %v291
    %314 = vmatprep.subr.bf16.mxu0 0
    %315 = vmatpush1.bf16.msra.mxu0 %v292
    %316 = vmatprep.subr.bf16.mxu0 0
    %317 = vmatpush1.bf16.msra.mxu0 %v293
    %318 = vmatprep.subr.bf16.mxu0 0
    %319 = vmatpush1.bf16.msra.mxu0 0
    %320 = vmatprep.subr.bf16.mxu0 0
    %321 = vmatpush1.bf16.msra.mxu0 0
    %322 = vmatprep.subr.bf16.mxu0 0
    %323 = vmatpush1.bf16.msra.mxu0 0
    %324 = vmatprep.subr.bf16.mxu0 0
    %325 = vmatpush1.bf16.msra.mxu0 0
    %326 = vmatprep.subr.bf16.mxu0 0
    %327 = vmatpush1.bf16.msra.mxu0 0
    %328 = vmatprep.subr.bf16.mxu0 0
    %329 = vmatpush1.bf16.msra.mxu0 0
    %330 = vmatprep.subr.bf16.mxu0 0
    %331 = vmatpush1.bf16.msra.mxu0 0
    %332 = vmatprep.subr.bf16.mxu0 0
    %333 = vmatpush1.bf16.msra.mxu0 0
    %334 = vmatprep.mubr.bf16.mxu0 0
    %335 = vmatmul.mubr.bf16.gmra.mrb[0].mxu0 %v230
    %v336 = vpop.f32.mrb[0].mxu0
    %v337 = vadd.f32 %v252, %v336
    %v338 = vpop.f32.mrb[0].mxu0
    %v339 = vpop.f32.mrb[0].mxu0
    %v340 = vpop.f32.mrb[0].mxu0
    %341 = vdwg.mxu0
    %v342 = vmax.f32 %v337, 0.0
    %v343 = vpack.c.bf16 %v342, %v342
    %v344 = vld [vmem:[%s5] sm:$0xf]
    %v345 = vld [vmem:[%s5 + $0x4] sm:$0xf]
    %v346 = vld [vmem:[%s5 + $0x8] sm:$0xf]
    %v347 = vld [vmem:[%s5 + $0xc] sm:$0xf]
    %v348 = vld [vmem:[%s5 + $0x10] sm:$0xf]
    %v349 = vld [vmem:[%s5 + $0x14] sm:$0xf]
    %v350 = vld [vmem:[%s5 + $0x18] sm:$0xf]
    %v351 = vld [vmem:[%s5 + $0x1c] sm:$0xf]
    %v352 = vld [vmem:[%s6] sm:$0x1]
    %v354 = vlaneseq
    %v355 = vshrl.u32 %v354, 7
    %v356 = vsub.s32 0, %v355
    %v357 = vrot.slane %v352, %v356
    %v367 = vunpack.c.l.b16 %v344
    %v368 = vunpack.c.l.b16 %v345
    %v369 = vunpack.c.l.b16 %v346
    %v370 = vunpack.c.l.b16 %v347
    %v371 = vunpack.c.l.b16 %v348
    %v372 = vunpack.c.l.b16 %v349
    %v373 = vunpack.c.l.b16 %v350
    %v374 = vunpack.c.l.b16 %v351
    %v375 = vpack.c.b16 %v368, %v367
    %v376 = vpack.c.b16 %v370, %v369
    %v377 = vpack.c.b16 %v372, %v371
    %v378 = vpack.c.b16 %v374, %v373
    %vm383 = vcmask 523264
    %v385 = vsel %vm383, %v343, 0
    %387 = vmatprep.subr.bf16.mxu0 0
    %388 = vmatpush1.bf16.msra.mxu0 %v375
    %389 = vmatprep.subr.bf16.mxu0 0
    %390 = vmatpush1.bf16.msra.mxu0 %v376
    %391 = vmatprep.subr.bf16.mxu0 0
    %392 = vmatpush1.bf16.msra.mxu0 %v377
    %393 = vmatprep.subr.bf16.mxu0 0
    %394 = vmatpush1.bf16.msra.mxu0 %v378
    %395 = vmatprep.subr.bf16.mxu0 0
    %396 = vmatpush1.bf16.msra.mxu0 0
    %397 = vmatprep.subr.bf16.mxu0 0
    %398 = vmatpush1.bf16.msra.mxu0 0
    %399 = vmatprep.subr.bf16.mxu0 0
    %400 = vmatpush1.bf16.msra.mxu0 0
    %401 = vmatprep.subr.bf16.mxu0 0
    %402 = vmatpush1.bf16.msra.mxu0 0
    %403 = vmatprep.subr.bf16.mxu0 0
    %404 = vmatpush1.bf16.msra.mxu0 0
    %405 = vmatprep.subr.bf16.mxu0 0
    %406 = vmatpush1.bf16.msra.mxu0 0
    %407 = vmatprep.subr.bf16.mxu0 0
    %408 = vmatpush1.bf16.msra.mxu0 0
    %409 = vmatprep.subr.bf16.mxu0 0
    %410 = vmatpush1.bf16.msra.mxu0 0
    %411 = vmatprep.subr.bf16.mxu0 0
    %412 = vmatpush1.bf16.msra.mxu0 0
    %413 = vmatprep.subr.bf16.mxu0 0
    %414 = vmatpush1.bf16.msra.mxu0 0
    %415 = vmatprep.subr.bf16.mxu0 0
    %416 = vmatpush1.bf16.msra.mxu0 0
    %417 = vmatprep.subr.bf16.mxu0 0
    %418 = vmatpush1.bf16.msra.mxu0 0
    %419 = vmatprep.mubr.bf16.mxu0 0
    %420 = vmatmul.mubr.bf16.gmra.mrb[0].mxu0 %v385
    %v421 = vpop.f32.mrb[0].mxu0
    %v422 = vadd.f32 %v357, %v421
    %v423 = vpop.f32.mrb[0].mxu0
    %v424 = vpop.f32.mrb[0].mxu0
    %v425 = vpop.f32.mrb[0].mxu0
    %426 = vdwg.mxu0
    %vm427 = vcmask 41984
    %428 = vst.msk [vmem:[#allocation2] sm:$0x3] %vm427, %v422
    // Predicated region
    $region30: #{simple_model_forward.3} parent=1 // pred_check
      _
    $region31: #{simple_model_forward.3} parent=1 // pred_check_branch
      %430 = sbr.rel (0) target = $region33
    $region32: #{simple_model_forward.3} parent=1 // pred_region
      %s432 = ssub.s32 32, 32
      %433 = vsyncadd [#allocation3], %s432
      %s435 = sshll.u32 [#allocation2], 4
      %s436 = int_to_ptr.vmem [resolvable:$true] %s435
      %438 = dma.vmem_to_hbm [thread:$0]  %s436, 32, %s7, [#allocation3]
    $region33: #{simple_model_forward.3} parent=1 // pred_fallthru
      _
    // Predicated region
    $region34: #{simple_model_forward.3} parent=1 // pred_check
      _
    $region35: #{simple_model_forward.3} parent=1 // pred_check_branch
      %440 = sbr.rel (0) target = $region37
    $region36: #{simple_model_forward.3} parent=1 // pred_region
      %441 = dma.done [#allocation3], 32
    $region37: #{simple_model_forward.3} parent=1 // pred_fallthru
      _
    %442 = vsyncpa [#allocation3], 1

// kernel: simple_model_forward.2
$region0: #{simple_model_forward.2}
  #allocation0 [shape = 'u32[]', space=smem, size = 0x4, offset = 0x4, fixed_abs, tag = 'smem constant byte address 0x4 - core index']
  #allocation1 [shape = 'u32[144,128]{1,0:T(1,128)}', space=vmem, size = 0x12000, scoped, tag = 'internal scratch']
  #allocation2 [shape = 'f32[2,128]{1,0:T(2,128)}', space=vmem, size = 0x400, scoped, tag = 'scratch operand']
  %s0 = inlined_call_operand.vmem [shape: f32[2,4096], index: 0, kind: input, shape index: {}]
  %s1 = inlined_call_operand.hbm [shape: bf16[4096,256], index: 1, kind: input, shape index: {}]
  %s2 = inlined_call_operand.hbm [shape: f32[1,256], index: 2, kind: input, shape index: {}]
  %s3 = inlined_call_operand.vmem [shape: bf16[2,256], index: 3, kind: output, shape index: {}]
  %s4 = sld [smem:[#allocation0]]
  $region61: #{simple_model_forward.2} parent=0
    _
  %s6 = ssub.s32 1, %s4
  %s7 = scalar_select 0, %s6, %s4
  $region1: #{simple_model_forward.2} parent=0
    #allocation3 [shape = 'u8[2097152]{0}', space=vmem, size = 0x200000, scoped, tag = 'input window, operand 1']
    #allocation4 [shape = 's32[2]{0}', space=sflag, size = 0x8, scoped, tag = 'scoped memory for simple_model_forward.2']
    #allocation5 [shape = 'u8[1024]{0}', space=vmem, size = 0x400, scoped, tag = 'input window, operand 2']
    #allocation6 [shape = 's32[2]{0}', space=sflag, size = 0x8, scoped, tag = 'scoped memory for simple_model_forward.2']
    %8 = vsyncpa [#allocation4], 0
    %s9 = scalar_lea.sflag [#allocation4], 1
    %10 = vsyncpa %s9, 0
    %11 = vsyncpa [#allocation6], 0
    %s12 = scalar_lea.sflag [#allocation6], 1
    %13 = vsyncpa %s12, 0
    loop: start=0, step=1, limit=4
    $region2: #{simple_model_forward.2} parent=1 // loop_pre_header
      _
    $region3: #{simple_model_forward.2} parent=1 // loop_header
      %s15 = sphi 0, %s19
      %p16 = scmp.ge.s32.totalorder %s15, 4
      %s22 = sphi 0, %s34
      %s23 = sphi 0, %s30
      %s24 = sphi 0, %s22
      %s25 = sphi 0, %s23
      %s26 = sphi 0, %s24
      %s27 = sphi 0, %s25
      %s35 = sphi 0, %s35
      %s37 = sphi 0, %s35
      %s38 = sphi 0, %s37
      %s52 = sphi 0, %s38
      %s60 = sphi 0, %s62
      %s63 = sphi 0, %s60
      %s64 = sphi 0, %s63
      %s80 = sphi 0, %s64
      %s86 = sphi 0, %s88
      %s89 = sphi 0, %s86
      %s90 = sphi 0, %s89
      %s106 = sphi 0, %s90
      %s112 = sphi 0, %s114
      %s115 = sphi 0, %s112
      %s116 = sphi 0, %s115
      %s132 = sphi 0, %s116
    $region4: #{simple_model_forward.2} parent=1 // loop_header_branch
      %18 = sbr.rel (%p16) target = $region8
    $region5: #{simple_model_forward.2} parent=1 // loop_body
      %s20 = ssub.s32 %s15, 1
      %s21 = ssub.s32 %s15, 2
      %s28 = sadd.s32 1, %s23
      %p29 = scmp.ge.s32.totalorder %s28, 1
      %s30 = scalar_select %p29, 0, %s28
      %s31 = sadd.s32 1, %s22
      %s32 = scalar_select %p29, %s31, %s22
      %p33 = scmp.ge.s32.totalorder %s32, 2
      %s34 = scalar_select %p33, 0, %s32
      %s36 = sadd.s32 %s35, 1
      %p39 = scmp.eq.s32.totalorder %s15, 1
      %p40 = scmp.ne.s32.totalorder %s35, %s37
      %p41 = scmp.eq.s32.totalorder %s15, 0
      %p42 = por %p40, %p41
      %p43 = scmp.ne.s32.totalorder %s35, %s37
      %p44 = scmp.eq.s32.totalorder %s20, 1
      %p45 = por %p43, %p44
      %p46 = scmp.ne.s32.totalorder %s37, %s38
      %p47 = scmp.eq.s32.totalorder %s20, 0
      %p48 = por %p46, %p47
      %p49 = scmp.ne.s32.totalorder %s37, %s38
      %p50 = scmp.eq.s32.totalorder %s21, 1
      %p51 = por %p49, %p50
      %p53 = scmp.ne.s32.totalorder %s38, %s52
      %p54 = scmp.eq.s32.totalorder %s21, 0
      %p55 = por %p53, %p54
      %s56 = ssub.s32 %s23, %s30
      %s57 = ssub.s32 %s22, %s34
      %s58 = sor.u32 %s56, %s57
      %p59 = scmp.eq.s32.totalorder %s58, 0
      %s61 = sadd.s32 %s60, 1
      %s62 = scalar_select %p59, %s60, %s61
      %p65 = pneg %p59
      %p66 = scmp.eq.s32.totalorder %s15, 1
      %p67 = por %p65, %p66
      %p68 = scmp.ne.s32.totalorder %s60, %s63
      %p69 = scmp.eq.s32.totalorder %s15, 0
      %p70 = por %p68, %p69
      %p71 = scmp.ne.s32.totalorder %s60, %s63
      %p72 = scmp.eq.s32.totalorder %s20, 1
      %p73 = por %p71, %p72
      %p74 = scmp.ne.s32.totalorder %s63, %s64
      %p75 = scmp.eq.s32.totalorder %s20, 0
      %p76 = por %p74, %p75
      %p77 = scmp.ne.s32.totalorder %s63, %s64
      %p78 = scmp.eq.s32.totalorder %s21, 1
      %p79 = por %p77, %p78
      %p81 = scmp.ne.s32.totalorder %s64, %s80
      %p82 = scmp.eq.s32.totalorder %s21, 0
      %p83 = por %p81, %p82
      %s84 = ssub.s32 %s22, %s34
      %p85 = scmp.eq.s32.totalorder %s84, 0
      %s87 = sadd.s32 %s86, 1
      %s88 = scalar_select %p85, %s86, %s87
      %p91 = pneg %p85
      %p92 = scmp.eq.s32.totalorder %s15, 1
      %p93 = por %p91, %p92
      %p94 = scmp.ne.s32.totalorder %s86, %s89
      %p95 = scmp.eq.s32.totalorder %s15, 0
      %p96 = por %p94, %p95
      %p97 = scmp.ne.s32.totalorder %s86, %s89
      %p98 = scmp.eq.s32.totalorder %s20, 1
      %p99 = por %p97, %p98
      %p100 = scmp.ne.s32.totalorder %s89, %s90
      %p101 = scmp.eq.s32.totalorder %s20, 0
      %p102 = por %p100, %p101
      %p103 = scmp.ne.s32.totalorder %s89, %s90
      %p104 = scmp.eq.s32.totalorder %s21, 1
      %p105 = por %p103, %p104
      %p107 = scmp.ne.s32.totalorder %s90, %s106
      %p108 = scmp.eq.s32.totalorder %s21, 0
      %p109 = por %p107, %p108
      %s110 = ssub.s32 %s22, %s34
      %p111 = scmp.eq.s32.totalorder %s110, 0
      %s113 = sadd.s32 %s112, 1
      %s114 = scalar_select %p111, %s112, %s113
      %p117 = pneg %p111
      %p118 = scmp.eq.s32.totalorder %s15, 1
      %p119 = por %p117, %p118
      %p120 = scmp.ne.s32.totalorder %s112, %s115
      %p121 = scmp.eq.s32.totalorder %s15, 0
      %p122 = por %p120, %p121
      %p123 = scmp.ne.s32.totalorder %s112, %s115
      %p124 = scmp.eq.s32.totalorder %s20, 1
      %p125 = por %p123, %p124
      %p126 = scmp.ne.s32.totalorder %s115, %s116
      %p127 = scmp.eq.s32.totalorder %s20, 0
      %p128 = por %p126, %p127
      %p129 = scmp.ne.s32.totalorder %s115, %s116
      %p130 = scmp.eq.s32.totalorder %s21, 1
      %p131 = por %p129, %p130
      %p133 = scmp.ne.s32.totalorder %s116, %s132
      %p134 = scmp.eq.s32.totalorder %s21, 0
      %p135 = por %p133, %p134
      %p136 = scmp.le.s32.totalorder 1, %s15
      %p137 = scmp.lt.s32.totalorder %s15, 3
      %p138 = pnand %p136, %p137
      %p139 = pneg %p138
      // Predicated region
      $region9: #{simple_model_forward.2} parent=5 // pred_check
        _
      $region10: #{simple_model_forward.2} parent=5 // pred_check_branch
        %141 = sbr.rel (%p138) target = $region12
      $region11: #{simple_model_forward.2} parent=5 // pred_region
        %s142 = ssub.s32 %s15, 1
        // Predicated region
        $region13: #{simple_model_forward.2} parent=11 // pred_check
          %p143 = pneg %p48
        $region14: #{simple_model_forward.2} parent=11 // pred_check_branch
          %145 = sbr.rel (%p143) target = $region16
        $region15: #{simple_model_forward.2} parent=11 // pred_region
          _
        $region16: #{simple_model_forward.2} parent=11 // pred_fallthru
          _
      $region12: #{simple_model_forward.2} parent=5 // pred_fallthru
        _
      %p146 = scmp.lt.s32.totalorder %s15, 2
      // Predicated region
      $region17: #{simple_model_forward.2} parent=5 // pred_check
        %p147 = pneg %p146
      $region18: #{simple_model_forward.2} parent=5 // pred_check_branch
        %149 = sbr.rel (%p147) target = $region20
      $region19: #{simple_model_forward.2} parent=5 // pred_region
        // Predicated region
        $region21: #{simple_model_forward.2} parent=19 // pred_check
          %p150 = pneg %p70
        $region22: #{simple_model_forward.2} parent=19 // pred_check_branch
          %152 = sbr.rel (%p150) target = $region24
        $region23: #{simple_model_forward.2} parent=19 // pred_region
          %s153 = sand.u32 %s60, 1
          %s154 = scalar_lea.sflag [#allocation4], %s153
          %s155 = sand.u32 %s60, 1
          %s156 = smul.addr %s155, 2048
          %s157 = scalar_lea.vmem [#allocation3], %s156
          %s158 = smul.u32 512, %s23
          %s160 = ssub.s32 32768, 32768
          %161 = vsyncadd %s154, %s160
          %s162 = smul.addr %s158, 2
          %s163 = sadd.s32 %s22, %s162
          %s164 = smul.addr %s163, 64
          %s165 = scalar_lea.hbm %s1, %s164
          %s166 = sshll.u32 %s157, 4
          %s167 = int_to_ptr.vmem [resolvable:$true] %s166
          %172 = dma.hbm_to_vmem [thread:$0]  %s165, 32768, %s167, %s154, 128, 64, 4
        $region24: #{simple_model_forward.2} parent=19 // pred_fallthru
          _
        // Predicated region
        $region25: #{simple_model_forward.2} parent=19 // pred_check
          %p173 = pneg %p96
        $region26: #{simple_model_forward.2} parent=19 // pred_check_branch
          %175 = sbr.rel (%p173) target = $region28
        $region27: #{simple_model_forward.2} parent=19 // pred_region
          %s176 = sand.u32 %s86, 1
          %s177 = scalar_lea.sflag [#allocation6], %s176
          %s178 = sand.u32 %s86, 1
          %s179 = scalar_lea.vmem [#allocation5], %s178
          %s181 = ssub.s32 16, 16
          %182 = vsyncadd %s177, %s181
          %s183 = smul.addr %s22, 16
          %s184 = scalar_lea.hbm %s2, %s183
          %s186 = sshll.u32 %s179, 4
          %s187 = int_to_ptr.vmem [resolvable:$true] %s186
          %189 = dma.hbm_to_vmem [thread:$0]  %s184, 16, %s187, %s177
        $region28: #{simple_model_forward.2} parent=19 // pred_fallthru
          _
      $region20: #{simple_model_forward.2} parent=5 // pred_fallthru
        _
      %p190 = scmp.le.s32.totalorder 1, %s15
      %p191 = scmp.lt.s32.totalorder %s15, 3
      %p192 = pnand %p190, %p191
      %p193 = pneg %p192
      // Predicated region
      $region29: #{simple_model_forward.2} parent=5 // pred_check
        _
      $region30: #{simple_model_forward.2} parent=5 // pred_check_branch
        %195 = sbr.rel (%p192) target = $region32
      $region31: #{simple_model_forward.2} parent=5 // pred_region
        %s196 = ssub.s32 %s15, 1
        %s197 = sand.u32 %s63, 1
        %s198 = scalar_lea.sflag [#allocation4], %s197
        %s199 = sand.u32 %s63, 1
        %s200 = smul.addr %s199, 2048
        %s201 = scalar_lea.vmem [#allocation3], %s200
        // Predicated region
        $region33: #{simple_model_forward.2} parent=31 // pred_check
          %p202 = pneg %p76
        $region34: #{simple_model_forward.2} parent=31 // pred_check_branch
          %204 = sbr.rel (%p202) target = $region36
        $region35: #{simple_model_forward.2} parent=31 // pred_region
          %205 = dma.done %s198, 32768
        $region36: #{simple_model_forward.2} parent=31 // pred_fallthru
          _
        %s206 = sand.u32 %s89, 1
        %s207 = scalar_lea.sflag [#allocation6], %s206
        %s208 = sand.u32 %s89, 1
        %s209 = scalar_lea.vmem [#allocation5], %s208
        // Predicated region
        $region37: #{simple_model_forward.2} parent=31 // pred_check
          %p210 = pneg %p102
        $region38: #{simple_model_forward.2} parent=31 // pred_check_branch
          %212 = sbr.rel (%p210) target = $region40
        $region39: #{simple_model_forward.2} parent=31 // pred_region
          %213 = dma.done %s207, 16
        $region40: #{simple_model_forward.2} parent=31 // pred_fallthru
          _
        %p214 = pneg %p48
        %p215 = pneg %p45
        %s216 = sand.u32 %s63, 1
        %s217 = scalar_lea.sflag [#allocation4], %s216
        %s218 = sand.u32 %s63, 1
        %s219 = smul.addr %s218, 2048
        %s220 = scalar_lea.vmem [#allocation3], %s219
        %p221 = pneg %p76
        %p222 = pneg %p73
        %s223 = sand.u32 %s89, 1
        %s224 = scalar_lea.sflag [#allocation6], %s223
        %s225 = sand.u32 %s89, 1
        %s226 = scalar_lea.vmem [#allocation5], %s225
        %p227 = pneg %p102
        %p228 = pneg %p99
        %p229 = pneg %p128
        %p230 = pneg %p125
        %p231 = scmp.lt.s32.totalorder %s24, 1
        %s232 = scalar_select %p231, %s24, 1
        %s233 = scalar_lea.vmem %s3, %s232
        %s234 = smul.u32 512, %s25
        %p235 = scmp.lt.s32.totalorder %s24, 1
        %s236 = scalar_select %p235, %s24, 1
        %s237 = scalar_lea.vmem %s3, %s236
        %p239 = scmp.eq.s32.totalorder %s25, 0
        // Predicated region
        $region41: #{simple_model_forward.2} parent=31 // pred_check
          %p240 = pneg %p239
        $region42: #{simple_model_forward.2} parent=31 // pred_check_branch
          %242 = sbr.rel (%p240) target = $region44
        $region43: #{simple_model_forward.2} parent=31 // pred_region
          %243 = vst [vmem:[#allocation2] sm:$0x3] 0.0
        $region44: #{simple_model_forward.2} parent=31 // pred_fallthru
          _
        %s244 = smul.u32 %s25, 4096
        %s245 = sshra.s32 %s244, 7
        %s246 = sand.u32 %s244, 127
        %s247 = smul.addr %s245, 2
        %s248 = scalar_lea.vmem %s0, %s247
        %v249 = vld [vmem:[%s248] sm:$0xff]
        %v250 = vld [vmem:[%s248 + $0x8] sm:$0xff]
        %v251 = vld [vmem:[%s248 + $0x10] sm:$0xff]
        %v252 = vld [vmem:[%s248 + $0x18] sm:$0xff]
        %v253 = vld [vmem:[%s248 + $0x20] sm:$0xff]
        %v254 = vld [vmem:[%s248 + $0x28] sm:$0xff]
        %v255 = vld [vmem:[%s248 + $0x30] sm:$0xff]
        %v256 = vld [vmem:[%s248 + $0x38] sm:$0xff]
        %v257 = vld [vmem:[#allocation2] sm:$0x3]
        %v266 = vcombine.high %v249, %v249
        %v268 = vunpack.c.l.s4 1983009808
        %v269 = vunpack.c.0.s8 %v268
        %v270 = vlaneseq
        %v271 = vshrl.u32 %v270, 7
        %v272 = vsub.s32 %v269, %v271
        %v273 = vrot.slane %v249, %v272
        %v275 = vunpack.c.l.s4 1983009808
        %v276 = vunpack.c.0.s8 %v275
        %v277 = vlaneseq
        %v278 = vshrl.u32 %v277, 7
        %v279 = vsub.s32 %v276, %v278
        %v280 = vrot.slane %v266, %v279
        %v281 = vcombine.high %v273, %v273
        %v282 = vcombine.high %v280, %v280
        %v283 = vcombine.high %v250, %v250
        %v285 = vunpack.c.l.s4 1983009808
        %v286 = vunpack.c.0.s8 %v285
        %v287 = vlaneseq
        %v288 = vshrl.u32 %v287, 7
        %v289 = vsub.s32 %v286, %v288
        %v290 = vrot.slane %v250, %v289
        %v292 = vunpack.c.l.s4 1983009808
        %v293 = vunpack.c.0.s8 %v292
        %v294 = vlaneseq
        %v295 = vshrl.u32 %v294, 7
        %v296 = vsub.s32 %v293, %v295
        %v297 = vrot.slane %v283, %v296
        %v298 = vcombine.high %v290, %v290
        %v299 = vcombine.high %v297, %v297
        %v300 = vcombine.high %v251, %v251
        %v302 = vunpack.c.l.s4 1983009808
        %v303 = vunpack.c.0.s8 %v302
        %v304 = vlaneseq
        %v305 = vshrl.u32 %v304, 7
        %v306 = vsub.s32 %v303, %v305
        %v307 = vrot.slane %v251, %v306
        %v309 = vunpack.c.l.s4 1983009808
        %v310 = vunpack.c.0.s8 %v309
        %v311 = vlaneseq
        %v312 = vshrl.u32 %v311, 7
        %v313 = vsub.s32 %v310, %v312
        %v314 = vrot.slane %v300, %v313
        %v315 = vcombine.high %v307, %v307
        %v316 = vcombine.high %v314, %v314
        %v317 = vcombine.high %v252, %v252
        %v319 = vunpack.c.l.s4 1983009808
        %v320 = vunpack.c.0.s8 %v319
        %v321 = vlaneseq
        %v322 = vshrl.u32 %v321, 7
        %v323 = vsub.s32 %v320, %v322
        %v324 = vrot.slane %v252, %v323
        %v326 = vunpack.c.l.s4 1983009808
        %v327 = vunpack.c.0.s8 %v326
        %v328 = vlaneseq
        %v329 = vshrl.u32 %v328, 7
        %v330 = vsub.s32 %v327, %v329
        %v331 = vrot.slane %v317, %v330
        %v332 = vcombine.high %v324, %v324
        %v333 = vcombine.high %v331, %v331
        %v334 = vcombine.high %v253, %v253
        %v336 = vunpack.c.l.s4 1983009808
        %v337 = vunpack.c.0.s8 %v336
        %v338 = vlaneseq
        %v339 = vshrl.u32 %v338, 7
        %v340 = vsub.s32 %v337, %v339
        %v341 = vrot.slane %v253, %v340
        %v343 = vunpack.c.l.s4 1983009808
        %v344 = vunpack.c.0.s8 %v343
        %v345 = vlaneseq
        %v346 = vshrl.u32 %v345, 7
        %v347 = vsub.s32 %v344, %v346
        %v348 = vrot.slane %v334, %v347
        %v349 = vcombine.high %v341, %v341
        %v350 = vcombine.high %v348, %v348
        %v351 = vcombine.high %v254, %v254
        %v353 = vunpack.c.l.s4 1983009808
        %v354 = vunpack.c.0.s8 %v353
        %v355 = vlaneseq
        %v356 = vshrl.u32 %v355, 7
        %v357 = vsub.s32 %v354, %v356
        %v358 = vrot.slane %v254, %v357
        %v360 = vunpack.c.l.s4 1983009808
        %v361 = vunpack.c.0.s8 %v360
        %v362 = vlaneseq
        %v363 = vshrl.u32 %v362, 7
        %v364 = vsub.s32 %v361, %v363
        %v365 = vrot.slane %v351, %v364
        %v366 = vcombine.high %v358, %v358
        %v367 = vcombine.high %v365, %v365
        %v368 = vcombine.high %v255, %v255
        %v370 = vunpack.c.l.s4 1983009808
        %v371 = vunpack.c.0.s8 %v370
        %v372 = vlaneseq
        %v373 = vshrl.u32 %v372, 7
        %v374 = vsub.s32 %v371, %v373
        %v375 = vrot.slane %v255, %v374
        %v377 = vunpack.c.l.s4 1983009808
        %v378 = vunpack.c.0.s8 %v377
        %v379 = vlaneseq
        %v380 = vshrl.u32 %v379, 7
        %v381 = vsub.s32 %v378, %v380
        %v382 = vrot.slane %v368, %v381
        %v383 = vcombine.high %v375, %v375
        %v384 = vcombine.high %v382, %v382
        %v385 = vcombine.high %v256, %v256
        %v387 = vunpack.c.l.s4 1983009808
        %v388 = vunpack.c.0.s8 %v387
        %v389 = vlaneseq
        %v390 = vshrl.u32 %v389, 7
        %v391 = vsub.s32 %v388, %v390
        %v392 = vrot.slane %v256, %v391
        %v394 = vunpack.c.l.s4 1983009808
        %v395 = vunpack.c.0.s8 %v394
        %v396 = vlaneseq
        %v397 = vshrl.u32 %v396, 7
        %v398 = vsub.s32 %v395, %v397
        %v399 = vrot.slane %v385, %v398
        %v400 = vcombine.high %v392, %v392
        %v401 = vcombine.high %v399, %v399
        %v434 = vpack.c.bf16 %v273, %v273
        %v435 = vpack.c.bf16 %v281, %v281
        %v436 = vpack.c.bf16 %v280, %v280
        %v437 = vpack.c.bf16 %v282, %v282
        %v438 = vpack.c.bf16 %v290, %v290
        %v439 = vpack.c.bf16 %v298, %v298
        %v440 = vpack.c.bf16 %v297, %v297
        %v441 = vpack.c.bf16 %v299, %v299
        %v442 = vpack.c.bf16 %v307, %v307
        %v443 = vpack.c.bf16 %v315, %v315
        %v444 = vpack.c.bf16 %v314, %v314
        %v445 = vpack.c.bf16 %v316, %v316
        %v446 = vpack.c.bf16 %v324, %v324
        %v447 = vpack.c.bf16 %v332, %v332
        %v448 = vpack.c.bf16 %v331, %v331
        %v449 = vpack.c.bf16 %v333, %v333
        %v450 = vpack.c.bf16 %v341, %v341
        %v451 = vpack.c.bf16 %v349, %v349
        %v452 = vpack.c.bf16 %v348, %v348
        %v453 = vpack.c.bf16 %v350, %v350
        %v454 = vpack.c.bf16 %v358, %v358
        %v455 = vpack.c.bf16 %v366, %v366
        %v456 = vpack.c.bf16 %v365, %v365
        %v457 = vpack.c.bf16 %v367, %v367
        %v458 = vpack.c.bf16 %v375, %v375
        %v459 = vpack.c.bf16 %v383, %v383
        %v460 = vpack.c.bf16 %v382, %v382
        %v461 = vpack.c.bf16 %v384, %v384
        %v462 = vpack.c.bf16 %v392, %v392
        %v463 = vpack.c.bf16 %v400, %v400
        %v464 = vpack.c.bf16 %v399, %v399
        %v465 = vpack.c.bf16 %v401, %v401
        %v466 = vld [vmem:[%s201] sm:$0xf]
        %v467 = vld [vmem:[%s201 + $0x4] sm:$0xf]
        %v468 = vld [vmem:[%s201 + $0x8] sm:$0xf]
        %v469 = vld [vmem:[%s201 + $0xc] sm:$0xf]
        %v470 = vld [vmem:[%s201 + $0x10] sm:$0xf]
        %v471 = vld [vmem:[%s201 + $0x14] sm:$0xf]
        %v472 = vld [vmem:[%s201 + $0x18] sm:$0xf]
        %v473 = vld [vmem:[%s201 + $0x1c] sm:$0xf]
        %v474 = vld [vmem:[%s201 + $0x20] sm:$0xf]
        %v475 = vld [vmem:[%s201 + $0x24] sm:$0xf]
        %v476 = vld [vmem:[%s201 + $0x28] sm:$0xf]
        %v477 = vld [vmem:[%s201 + $0x2c] sm:$0xf]
        %v478 = vld [vmem:[%s201 + $0x30] sm:$0xf]
        %v479 = vld [vmem:[%s201 + $0x34] sm:$0xf]
        %v480 = vld [vmem:[%s201 + $0x38] sm:$0xf]
        %v481 = vld [vmem:[%s201 + $0x3c] sm:$0xf]
        %v482 = vld [vmem:[%s201 + $0x40] sm:$0xf]
        %v483 = vld [vmem:[%s201 + $0x44] sm:$0xf]
        %v484 = vld [vmem:[%s201 + $0x48] sm:$0xf]
        %v485 = vld [vmem:[%s201 + $0x4c] sm:$0xf]
        %v486 = vld [vmem:[%s201 + $0x50] sm:$0xf]
        %v487 = vld [vmem:[%s201 + $0x54] sm:$0xf]
        %v488 = vld [vmem:[%s201 + $0x58] sm:$0xf]
        %v489 = vld [vmem:[%s201 + $0x5c] sm:$0xf]
        %v490 = vld [vmem:[%s201 + $0x60] sm:$0xf]
        %v491 = vld [vmem:[%s201 + $0x64] sm:$0xf]
        %v492 = vld [vmem:[%s201 + $0x68] sm:$0xf]
        %v493 = vld [vmem:[%s201 + $0x6c] sm:$0xf]
        %v494 = vld [vmem:[%s201 + $0x70] sm:$0xf]
        %v495 = vld [vmem:[%s201 + $0x74] sm:$0xf]
        %v496 = vld [vmem:[%s201 + $0x78] sm:$0xf]
        %v497 = vld [vmem:[%s201 + $0x7c] sm:$0xf]
        %v498 = vld [vmem:[%s201 + $0x80] sm:$0xf]
        %v499 = vld [vmem:[%s201 + $0x84] sm:$0xf]
        %v500 = vld [vmem:[%s201 + $0x88] sm:$0xf]
        %v501 = vld [vmem:[%s201 + $0x8c] sm:$0xf]
        %v502 = vld [vmem:[%s201 + $0x90] sm:$0xf]
        %v503 = vld [vmem:[%s201 + $0x94] sm:$0xf]
        %v504 = vld [vmem:[%s201 + $0x98] sm:$0xf]
        %v505 = vld [vmem:[%s201 + $0x9c] sm:$0xf]
        %v506 = vld [vmem:[%s201 + $0xa0] sm:$0xf]
        %v507 = vld [vmem:[%s201 + $0xa4] sm:$0xf]
        %v508 = vld [vmem:[%s201 + $0xa8] sm:$0xf]
        %v509 = vld [vmem:[%s201 + $0xac] sm:$0xf]
        %v510 = vld [vmem:[%s201 + $0xb0] sm:$0xf]
        %v511 = vld [vmem:[%s201 + $0xb4] sm:$0xf]
        %v512 = vld [vmem:[%s201 + $0xb8] sm:$0xf]
        %v513 = vld [vmem:[%s201 + $0xbc] sm:$0xf]
        %v514 = vld [vmem:[%s201 + $0xc0] sm:$0xf]
        %v515 = vld [vmem:[%s201 + $0xc4] sm:$0xf]
        %v516 = vld [vmem:[%s201 + $0xc8] sm:$0xf]
        %v517 = vld [vmem:[%s201 + $0xcc] sm:$0xf]
        %v518 = vld [vmem:[%s201 + $0xd0] sm:$0xf]
        %v519 = vld [vmem:[%s201 + $0xd4] sm:$0xf]
        %v520 = vld [vmem:[%s201 + $0xd8] sm:$0xf]
        %v521 = vld [vmem:[%s201 + $0xdc] sm:$0xf]
        %v522 = vld [vmem:[%s201 + $0xe0] sm:$0xf]
        %v523 = vld [vmem:[%s201 + $0xe4] sm:$0xf]
        %v524 = vld [vmem:[%s201 + $0xe8] sm:$0xf]
        %v525 = vld [vmem:[%s201 + $0xec] sm:$0xf]
        %v526 = vld [vmem:[%s201 + $0xf0] sm:$0xf]
        %v527 = vld [vmem:[%s201 + $0xf4] sm:$0xf]
        %v528 = vld [vmem:[%s201 + $0xf8] sm:$0xf]
        %v529 = vld [vmem:[%s201 + $0xfc] sm:$0xf]
        %v530 = vld [vmem:[%s201 + $0x100] sm:$0xf]
        %v531 = vld [vmem:[%s201 + $0x104] sm:$0xf]
        %v532 = vld [vmem:[%s201 + $0x108] sm:$0xf]
        %v533 = vld [vmem:[%s201 + $0x10c] sm:$0xf]
        %v534 = vld [vmem:[%s201 + $0x110] sm:$0xf]
        %v535 = vld [vmem:[%s201 + $0x114] sm:$0xf]
        %v536 = vld [vmem:[%s201 + $0x118] sm:$0xf]
        %v537 = vld [vmem:[%s201 + $0x11c] sm:$0xf]
        %v538 = vld [vmem:[%s201 + $0x120] sm:$0xf]
        %v539 = vld [vmem:[%s201 + $0x124] sm:$0xf]
        %v540 = vld [vmem:[%s201 + $0x128] sm:$0xf]
        %v541 = vld [vmem:[%s201 + $0x12c] sm:$0xf]
        %v542 = vld [vmem:[%s201 + $0x130] sm:$0xf]
        %v543 = vld [vmem:[%s201 + $0x134] sm:$0xf]
        %v544 = vld [vmem:[%s201 + $0x138] sm:$0xf]
        %v545 = vld [vmem:[%s201 + $0x13c] sm:$0xf]
        %v546 = vld [vmem:[%s201 + $0x140] sm:$0xf]
        %v547 = vld [vmem:[%s201 + $0x144] sm:$0xf]
        %v548 = vld [vmem:[%s201 + $0x148] sm:$0xf]
        %v549 = vld [vmem:[%s201 + $0x14c] sm:$0xf]
        %v550 = vld [vmem:[%s201 + $0x150] sm:$0xf]
        %v551 = vld [vmem:[%s201 + $0x154] sm:$0xf]
        %v552 = vld [vmem:[%s201 + $0x158] sm:$0xf]
        %v553 = vld [vmem:[%s201 + $0x15c] sm:$0xf]
        %v554 = vld [vmem:[%s201 + $0x160] sm:$0xf]
        %v555 = vld [vmem:[%s201 + $0x164] sm:$0xf]
        %v556 = vld [vmem:[%s201 + $0x168] sm:$0xf]
        %v557 = vld [vmem:[%s201 + $0x16c] sm:$0xf]
        %v558 = vld [vmem:[%s201 + $0x170] sm:$0xf]
        %v559 = vld [vmem:[%s201 + $0x174] sm:$0xf]
        %v560 = vld [vmem:[%s201 + $0x178] sm:$0xf]
        %v561 = vld [vmem:[%s201 + $0x17c] sm:$0xf]
        %v562 = vld [vmem:[%s201 + $0x180] sm:$0xf]
        %v563 = vld [vmem:[%s201 + $0x184] sm:$0xf]
        %v564 = vld [vmem:[%s201 + $0x188] sm:$0xf]
        %v565 = vld [vmem:[%s201 + $0x18c] sm:$0xf]
        %v566 = vld [vmem:[%s201 + $0x190] sm:$0xf]
        %v567 = vld [vmem:[%s201 + $0x194] sm:$0xf]
        %v568 = vld [vmem:[%s201 + $0x198] sm:$0xf]
        %v569 = vld [vmem:[%s201 + $0x19c] sm:$0xf]
        %v570 = vld [vmem:[%s201 + $0x1a0] sm:$0xf]
        %v571 = vld [vmem:[%s201 + $0x1a4] sm:$0xf]
        %v572 = vld [vmem:[%s201 + $0x1a8] sm:$0xf]
        %v573 = vld [vmem:[%s201 + $0x1ac] sm:$0xf]
        %v574 = vld [vmem:[%s201 + $0x1b0] sm:$0xf]
        %v575 = vld [vmem:[%s201 + $0x1b4] sm:$0xf]
        %v576 = vld [vmem:[%s201 + $0x1b8] sm:$0xf]
        %v577 = vld [vmem:[%s201 + $0x1bc] sm:$0xf]
        %v578 = vld [vmem:[%s201 + $0x1c0] sm:$0xf]
        %v579 = vld [vmem:[%s201 + $0x1c4] sm:$0xf]
        %v580 = vld [vmem:[%s201 + $0x1c8] sm:$0xf]
        %v581 = vld [vmem:[%s201 + $0x1cc] sm:$0xf]
        %v582 = vld [vmem:[%s201 + $0x1d0] sm:$0xf]
        %v583 = vld [vmem:[%s201 + $0x1d4] sm:$0xf]
        %v584 = vld [vmem:[%s201 + $0x1d8] sm:$0xf]
        %v585 = vld [vmem:[%s201 + $0x1dc] sm:$0xf]
        %v586 = vld [vmem:[%s201 + $0x1e0] sm:$0xf]
        %v587 = vld [vmem:[%s201 + $0x1e4] sm:$0xf]
        %v588 = vld [vmem:[%s201 + $0x1e8] sm:$0xf]
        %v589 = vld [vmem:[%s201 + $0x1ec] sm:$0xf]
        %v590 = vld [vmem:[%s201 + $0x1f0] sm:$0xf]
        %v591 = vld [vmem:[%s201 + $0x1f4] sm:$0xf]
        %v592 = vld [vmem:[%s201 + $0x1f8] sm:$0xf]
        %v593 = vld [vmem:[%s201 + $0x1fc] sm:$0xf]
        %v594 = vld [vmem:[%s201 + $0x200] sm:$0xf]
        %v595 = vld [vmem:[%s201 + $0x204] sm:$0xf]
        %v596 = vld [vmem:[%s201 + $0x208] sm:$0xf]
        %v597 = vld [vmem:[%s201 + $0x20c] sm:$0xf]
        %v598 = vld [vmem:[%s201 + $0x210] sm:$0xf]
        %v599 = vld [vmem:[%s201 + $0x214] sm:$0xf]
        %v600 = vld [vmem:[%s201 + $0x218] sm:$0xf]
        %v601 = vld [vmem:[%s201 + $0x21c] sm:$0xf]
        %v602 = vld [vmem:[%s201 + $0x220] sm:$0xf]
        %v603 = vld [vmem:[%s201 + $0x224] sm:$0xf]
        %v604 = vld [vmem:[%s201 + $0x228] sm:$0xf]
        %v605 = vld [vmem:[%s201 + $0x22c] sm:$0xf]
        %v606 = vld [vmem:[%s201 + $0x230] sm:$0xf]
        %v607 = vld [vmem:[%s201 + $0x234] sm:$0xf]
        %v608 = vld [vmem:[%s201 + $0x238] sm:$0xf]
        %v609 = vld [vmem:[%s201 + $0x23c] sm:$0xf]
        %v610 = vld [vmem:[%s201 + $0x240] sm:$0xf]
        %v611 = vld [vmem:[%s201 + $0x244] sm:$0xf]
        %v612 = vld [vmem:[%s201 + $0x248] sm:$0xf]
        %v613 = vld [vmem:[%s201 + $0x24c] sm:$0xf]
        %v614 = vld [vmem:[%s201 + $0x250] sm:$0xf]
        %v615 = vld [vmem:[%s201 + $0x254] sm:$0xf]
        %v616 = vld [vmem:[%s201 + $0x258] sm:$0xf]
        %v617 = vld [vmem:[%s201 + $0x25c] sm:$0xf]
        %v618 = vld [vmem:[%s201 + $0x260] sm:$0xf]
        %v619 = vld [vmem:[%s201 + $0x264] sm:$0xf]
        %v620 = vld [vmem:[%s201 + $0x268] sm:$0xf]
        %v621 = vld [vmem:[%s201 + $0x26c] sm:$0xf]
        %v622 = vld [vmem:[%s201 + $0x270] sm:$0xf]
        %v623 = vld [vmem:[%s201 + $0x274] sm:$0xf]
        %v624 = vld [vmem:[%s201 + $0x278] sm:$0xf]
        %v625 = vld [vmem:[%s201 + $0x27c] sm:$0xf]
        %v626 = vld [vmem:[%s201 + $0x280] sm:$0xf]
        %v627 = vld [vmem:[%s201 + $0x284] sm:$0xf]
        %v628 = vld [vmem:[%s201 + $0x288] sm:$0xf]
        %v629 = vld [vmem:[%s201 + $0x28c] sm:$0xf]
        %v630 = vld [vmem:[%s201 + $0x290] sm:$0xf]
        %v631 = vld [vmem:[%s201 + $0x294] sm:$0xf]
        %v632 = vld [vmem:[%s201 + $0x298] sm:$0xf]
        %v633 = vld [vmem:[%s201 + $0x29c] sm:$0xf]
        %v634 = vld [vmem:[%s201 + $0x2a0] sm:$0xf]
        %v635 = vld [vmem:[%s201 + $0x2a4] sm:$0xf]
        %v636 = vld [vmem:[%s201 + $0x2a8] sm:$0xf]
        %v637 = vld [vmem:[%s201 + $0x2ac] sm:$0xf]
        %v638 = vld [vmem:[%s201 + $0x2b0] sm:$0xf]
        %v639 = vld [vmem:[%s201 + $0x2b4] sm:$0xf]
        %v640 = vld [vmem:[%s201 + $0x2b8] sm:$0xf]
        %v641 = vld [vmem:[%s201 + $0x2bc] sm:$0xf]
        %v642 = vld [vmem:[%s201 + $0x2c0] sm:$0xf]
        %v643 = vld [vmem:[%s201 + $0x2c4] sm:$0xf]
        %v644 = vld [vmem:[%s201 + $0x2c8] sm:$0xf]
        %v645 = vld [vmem:[%s201 + $0x2cc] sm:$0xf]
        %v646 = vld [vmem:[%s201 + $0x2d0] sm:$0xf]
        %v647 = vld [vmem:[%s201 + $0x2d4] sm:$0xf]
        %v648 = vld [vmem:[%s201 + $0x2d8] sm:$0xf]
        %v649 = vld [vmem:[%s201 + $0x2dc] sm:$0xf]
        %v650 = vld [vmem:[%s201 + $0x2e0] sm:$0xf]
        %v651 = vld [vmem:[%s201 + $0x2e4] sm:$0xf]
        %v652 = vld [vmem:[%s201 + $0x2e8] sm:$0xf]
        %v653 = vld [vmem:[%s201 + $0x2ec] sm:$0xf]
        %v654 = vld [vmem:[%s201 + $0x2f0] sm:$0xf]
        %v655 = vld [vmem:[%s201 + $0x2f4] sm:$0xf]
        %v656 = vld [vmem:[%s201 + $0x2f8] sm:$0xf]
        %v657 = vld [vmem:[%s201 + $0x2fc] sm:$0xf]
        %v658 = vld [vmem:[%s201 + $0x300] sm:$0xf]
        %v659 = vld [vmem:[%s201 + $0x304] sm:$0xf]
        %v660 = vld [vmem:[%s201 + $0x308] sm:$0xf]
        %v661 = vld [vmem:[%s201 + $0x30c] sm:$0xf]
        %v662 = vld [vmem:[%s201 + $0x310] sm:$0xf]
        %v663 = vld [vmem:[%s201 + $0x314] sm:$0xf]
        %v664 = vld [vmem:[%s201 + $0x318] sm:$0xf]
        %v665 = vld [vmem:[%s201 + $0x31c] sm:$0xf]
        %v666 = vld [vmem:[%s201 + $0x320] sm:$0xf]
        %v667 = vld [vmem:[%s201 + $0x324] sm:$0xf]
        %v668 = vld [vmem:[%s201 + $0x328] sm:$0xf]
        %v669 = vld [vmem:[%s201 + $0x32c] sm:$0xf]
        %v670 = vld [vmem:[%s201 + $0x330] sm:$0xf]
        %v671 = vld [vmem:[%s201 + $0x334] sm:$0xf]
        %v672 = vld [vmem:[%s201 + $0x338] sm:$0xf]
        %v673 = vld [vmem:[%s201 + $0x33c] sm:$0xf]
        %v674 = vld [vmem:[%s201 + $0x340] sm:$0xf]
        %v675 = vld [vmem:[%s201 + $0x344] sm:$0xf]
        %v676 = vld [vmem:[%s201 + $0x348] sm:$0xf]
        %v677 = vld [vmem:[%s201 + $0x34c] sm:$0xf]
        %v678 = vld [vmem:[%s201 + $0x350] sm:$0xf]
        %v679 = vld [vmem:[%s201 + $0x354] sm:$0xf]
        %v680 = vld [vmem:[%s201 + $0x358] sm:$0xf]
        %v681 = vld [vmem:[%s201 + $0x35c] sm:$0xf]
        %v682 = vld [vmem:[%s201 + $0x360] sm:$0xf]
        %v683 = vld [vmem:[%s201 + $0x364] sm:$0xf]
        %v684 = vld [vmem:[%s201 + $0x368] sm:$0xf]
        %v685 = vld [vmem:[%s201 + $0x36c] sm:$0xf]
        %v686 = vld [vmem:[%s201 + $0x370] sm:$0xf]
        %v687 = vld [vmem:[%s201 + $0x374] sm:$0xf]
        %v688 = vld [vmem:[%s201 + $0x378] sm:$0xf]
        %v689 = vld [vmem:[%s201 + $0x37c] sm:$0xf]
        %v690 = vld [vmem:[%s201 + $0x380] sm:$0xf]
        %v691 = vld [vmem:[%s201 + $0x384] sm:$0xf]
        %v692 = vld [vmem:[%s201 + $0x388] sm:$0xf]
        %v693 = vld [vmem:[%s201 + $0x38c] sm:$0xf]
        %v694 = vld [vmem:[%s201 + $0x390] sm:$0xf]
        %v695 = vld [vmem:[%s201 + $0x394] sm:$0xf]
        %v696 = vld [vmem:[%s201 + $0x398] sm:$0xf]
        %v697 = vld [vmem:[%s201 + $0x39c] sm:$0xf]
        %v698 = vld [vmem:[%s201 + $0x3a0] sm:$0xf]
        %v699 = vld [vmem:[%s201 + $0x3a4] sm:$0xf]
        %v700 = vld [vmem:[%s201 + $0x3a8] sm:$0xf]
        %v701 = vld [vmem:[%s201 + $0x3ac] sm:$0xf]
        %v702 = vld [vmem:[%s201 + $0x3b0] sm:$0xf]
        %v703 = vld [vmem:[%s201 + $0x3b4] sm:$0xf]
        %v704 = vld [vmem:[%s201 + $0x3b8] sm:$0xf]
        %v705 = vld [vmem:[%s201 + $0x3bc] sm:$0xf]
        %v706 = vld [vmem:[%s201 + $0x3c0] sm:$0xf]
        %v707 = vld [vmem:[%s201 + $0x3c4] sm:$0xf]
        %v708 = vld [vmem:[%s201 + $0x3c8] sm:$0xf]
        %v709 = vld [vmem:[%s201 + $0x3cc] sm:$0xf]
        %v710 = vld [vmem:[%s201 + $0x3d0] sm:$0xf]
        %v711 = vld [vmem:[%s201 + $0x3d4] sm:$0xf]
        %v712 = vld [vmem:[%s201 + $0x3d8] sm:$0xf]
        %v713 = vld [vmem:[%s201 + $0x3dc] sm:$0xf]
        %v714 = vld [vmem:[%s201 + $0x3e0] sm:$0xf]
        %v715 = vld [vmem:[%s201 + $0x3e4] sm:$0xf]
        %v716 = vld [vmem:[%s201 + $0x3e8] sm:$0xf]
        %v717 = vld [vmem:[%s201 + $0x3ec] sm:$0xf]
        %v718 = vld [vmem:[%s201 + $0x3f0] sm:$0xf]
        %v719 = vld [vmem:[%s201 + $0x3f4] sm:$0xf]
        %v720 = vld [vmem:[%s201 + $0x3f8] sm:$0xf]
        %v721 = vld [vmem:[%s201 + $0x3fc] sm:$0xf]
        %v722 = vld [vmem:[%s201 + $0x400] sm:$0xf]
        %v723 = vld [vmem:[%s201 + $0x404] sm:$0xf]
        %v724 = vld [vmem:[%s201 + $0x408] sm:$0xf]
        %v725 = vld [vmem:[%s201 + $0x40c] sm:$0xf]
        %v726 = vld [vmem:[%s201 + $0x410] sm:$0xf]
        %v727 = vld [vmem:[%s201 + $0x414] sm:$0xf]
        %v728 = vld [vmem:[%s201 + $0x418] sm:$0xf]
        %v729 = vld [vmem:[%s201 + $0x41c] sm:$0xf]
        %v730 = vld [vmem:[%s201 + $0x420] sm:$0xf]
        %v731 = vld [vmem:[%s201 + $0x424] sm:$0xf]
        %v732 = vld [vmem:[%s201 + $0x428] sm:$0xf]
        %v733 = vld [vmem:[%s201 + $0x42c] sm:$0xf]
        %v734 = vld [vmem:[%s201 + $0x430] sm:$0xf]
        %v735 = vld [vmem:[%s201 + $0x434] sm:$0xf]
        %v736 = vld [vmem:[%s201 + $0x438] sm:$0xf]
        %v737 = vld [vmem:[%s201 + $0x43c] sm:$0xf]
        %v738 = vld [vmem:[%s201 + $0x440] sm:$0xf]
        %v739 = vld [vmem:[%s201 + $0x444] sm:$0xf]
        %v740 = vld [vmem:[%s201 + $0x448] sm:$0xf]
        %v741 = vld [vmem:[%s201 + $0x44c] sm:$0xf]
        %v742 = vld [vmem:[%s201 + $0x450] sm:$0xf]
        %v743 = vld [vmem:[%s201 + $0x454] sm:$0xf]
        %v744 = vld [vmem:[%s201 + $0x458] sm:$0xf]
        %v745 = vld [vmem:[%s201 + $0x45c] sm:$0xf]
        %v746 = vld [vmem:[%s201 + $0x460] sm:$0xf]
        %v747 = vld [vmem:[%s201 + $0x464] sm:$0xf]
        %v748 = vld [vmem:[%s201 + $0x468] sm:$0xf]
        %v749 = vld [vmem:[%s201 + $0x46c] sm:$0xf]
        %v750 = vld [vmem:[%s201 + $0x470] sm:$0xf]
        %v751 = vld [vmem:[%s201 + $0x474] sm:$0xf]
        %v752 = vld [vmem:[%s201 + $0x478] sm:$0xf]
        %v753 = vld [vmem:[%s201 + $0x47c] sm:$0xf]
        %v754 = vld [vmem:[%s201 + $0x480] sm:$0xf]
        %v755 = vld [vmem:[%s201 + $0x484] sm:$0xf]
        %v756 = vld [vmem:[%s201 + $0x488] sm:$0xf]
        %v757 = vld [vmem:[%s201 + $0x48c] sm:$0xf]
        %v758 = vld [vmem:[%s201 + $0x490] sm:$0xf]
        %v759 = vld [vmem:[%s201 + $0x494] sm:$0xf]
        %v760 = vld [vmem:[%s201 + $0x498] sm:$0xf]
        %v761 = vld [vmem:[%s201 + $0x49c] sm:$0xf]
        %v762 = vld [vmem:[%s201 + $0x4a0] sm:$0xf]
        %v763 = vld [vmem:[%s201 + $0x4a4] sm:$0xf]
        %v764 = vld [vmem:[%s201 + $0x4a8] sm:$0xf]
        %v765 = vld [vmem:[%s201 + $0x4ac] sm:$0xf]
        %v766 = vld [vmem:[%s201 + $0x4b0] sm:$0xf]
        %v767 = vld [vmem:[%s201 + $0x4b4] sm:$0xf]
        %v768 = vld [vmem:[%s201 + $0x4b8] sm:$0xf]
        %v769 = vld [vmem:[%s201 + $0x4bc] sm:$0xf]
        %v770 = vld [vmem:[%s201 + $0x4c0] sm:$0xf]
        %v771 = vld [vmem:[%s201 + $0x4c4] sm:$0xf]
        %v772 = vld [vmem:[%s201 + $0x4c8] sm:$0xf]
        %v773 = vld [vmem:[%s201 + $0x4cc] sm:$0xf]
        %v774 = vld [vmem:[%s201 + $0x4d0] sm:$0xf]
        %v775 = vld [vmem:[%s201 + $0x4d4] sm:$0xf]
        %v776 = vld [vmem:[%s201 + $0x4d8] sm:$0xf]
        %v777 = vld [vmem:[%s201 + $0x4dc] sm:$0xf]
        %v778 = vld [vmem:[%s201 + $0x4e0] sm:$0xf]
        %v779 = vld [vmem:[%s201 + $0x4e4] sm:$0xf]
        %v780 = vld [vmem:[%s201 + $0x4e8] sm:$0xf]
        %v781 = vld [vmem:[%s201 + $0x4ec] sm:$0xf]
        %v782 = vld [vmem:[%s201 + $0x4f0] sm:$0xf]
        %v783 = vld [vmem:[%s201 + $0x4f4] sm:$0xf]
        %v784 = vld [vmem:[%s201 + $0x4f8] sm:$0xf]
        %v785 = vld [vmem:[%s201 + $0x4fc] sm:$0xf]
        %v786 = vld [vmem:[%s201 + $0x500] sm:$0xf]
        %v787 = vld [vmem:[%s201 + $0x504] sm:$0xf]
        %v788 = vld [vmem:[%s201 + $0x508] sm:$0xf]
        %v789 = vld [vmem:[%s201 + $0x50c] sm:$0xf]
        %v790 = vld [vmem:[%s201 + $0x510] sm:$0xf]
        %v791 = vld [vmem:[%s201 + $0x514] sm:$0xf]
        %v792 = vld [vmem:[%s201 + $0x518] sm:$0xf]
        %v793 = vld [vmem:[%s201 + $0x51c] sm:$0xf]
        %v794 = vld [vmem:[%s201 + $0x520] sm:$0xf]
        %v795 = vld [vmem:[%s201 + $0x524] sm:$0xf]
        %v796 = vld [vmem:[%s201 + $0x528] sm:$0xf]
        %v797 = vld [vmem:[%s201 + $0x52c] sm:$0xf]
        %v798 = vld [vmem:[%s201 + $0x530] sm:$0xf]
        %v799 = vld [vmem:[%s201 + $0x534] sm:$0xf]
        %v800 = vld [vmem:[%s201 + $0x538] sm:$0xf]
        %v801 = vld [vmem:[%s201 + $0x53c] sm:$0xf]
        %v802 = vld [vmem:[%s201 + $0x540] sm:$0xf]
        %v803 = vld [vmem:[%s201 + $0x544] sm:$0xf]
        %v804 = vld [vmem:[%s201 + $0x548] sm:$0xf]
        %v805 = vld [vmem:[%s201 + $0x54c] sm:$0xf]
        %v806 = vld [vmem:[%s201 + $0x550] sm:$0xf]
        %v807 = vld [vmem:[%s201 + $0x554] sm:$0xf]
        %v808 = vld [vmem:[%s201 + $0x558] sm:$0xf]
        %v809 = vld [vmem:[%s201 + $0x55c] sm:$0xf]
        %v810 = vld [vmem:[%s201 + $0x560] sm:$0xf]
        %v811 = vld [vmem:[%s201 + $0x564] sm:$0xf]
        %v812 = vld [vmem:[%s201 + $0x568] sm:$0xf]
        %v813 = vld [vmem:[%s201 + $0x56c] sm:$0xf]
        %v814 = vld [vmem:[%s201 + $0x570] sm:$0xf]
        %v815 = vld [vmem:[%s201 + $0x574] sm:$0xf]
        %v816 = vld [vmem:[%s201 + $0x578] sm:$0xf]
        %v817 = vld [vmem:[%s201 + $0x57c] sm:$0xf]
        %v818 = vld [vmem:[%s201 + $0x580] sm:$0xf]
        %v819 = vld [vmem:[%s201 + $0x584] sm:$0xf]
        %v820 = vld [vmem:[%s201 + $0x588] sm:$0xf]
        %v821 = vld [vmem:[%s201 + $0x58c] sm:$0xf]
        %v822 = vld [vmem:[%s201 + $0x590] sm:$0xf]
        %v823 = vld [vmem:[%s201 + $0x594] sm:$0xf]
        %v824 = vld [vmem:[%s201 + $0x598] sm:$0xf]
        %v825 = vld [vmem:[%s201 + $0x59c] sm:$0xf]
        %v826 = vld [vmem:[%s201 + $0x5a0] sm:$0xf]
        %v827 = vld [vmem:[%s201 + $0x5a4] sm:$0xf]
        %v828 = vld [vmem:[%s201 + $0x5a8] sm:$0xf]
        %v829 = vld [vmem:[%s201 + $0x5ac] sm:$0xf]
        %v830 = vld [vmem:[%s201 + $0x5b0] sm:$0xf]
        %v831 = vld [vmem:[%s201 + $0x5b4] sm:$0xf]
        %v832 = vld [vmem:[%s201 + $0x5b8] sm:$0xf]
        %v833 = vld [vmem:[%s201 + $0x5bc] sm:$0xf]
        %v834 = vld [vmem:[%s201 + $0x5c0] sm:$0xf]
        %v835 = vld [vmem:[%s201 + $0x5c4] sm:$0xf]
        %v836 = vld [vmem:[%s201 + $0x5c8] sm:$0xf]
        %v837 = vld [vmem:[%s201 + $0x5cc] sm:$0xf]
        %v838 = vld [vmem:[%s201 + $0x5d0] sm:$0xf]
        %v839 = vld [vmem:[%s201 + $0x5d4] sm:$0xf]
        %v840 = vld [vmem:[%s201 + $0x5d8] sm:$0xf]
        %v841 = vld [vmem:[%s201 + $0x5dc] sm:$0xf]
        %v842 = vld [vmem:[%s201 + $0x5e0] sm:$0xf]
        %v843 = vld [vmem:[%s201 + $0x5e4] sm:$0xf]
        %v844 = vld [vmem:[%s201 + $0x5e8] sm:$0xf]
        %v845 = vld [vmem:[%s201 + $0x5ec] sm:$0xf]
        %v846 = vld [vmem:[%s201 + $0x5f0] sm:$0xf]
        %v847 = vld [vmem:[%s201 + $0x5f4] sm:$0xf]
        %v848 = vld [vmem:[%s201 + $0x5f8] sm:$0xf]
        %v849 = vld [vmem:[%s201 + $0x5fc] sm:$0xf]
        %v850 = vld [vmem:[%s201 + $0x600] sm:$0xf]
        %v851 = vld [vmem:[%s201 + $0x604] sm:$0xf]
        %v852 = vld [vmem:[%s201 + $0x608] sm:$0xf]
        %v853 = vld [vmem:[%s201 + $0x60c] sm:$0xf]
        %v854 = vld [vmem:[%s201 + $0x610] sm:$0xf]
        %v855 = vld [vmem:[%s201 + $0x614] sm:$0xf]
        %v856 = vld [vmem:[%s201 + $0x618] sm:$0xf]
        %v857 = vld [vmem:[%s201 + $0x61c] sm:$0xf]
        %v858 = vld [vmem:[%s201 + $0x620] sm:$0xf]
        %v859 = vld [vmem:[%s201 + $0x624] sm:$0xf]
        %v860 = vld [vmem:[%s201 + $0x628] sm:$0xf]
        %v861 = vld [vmem:[%s201 + $0x62c] sm:$0xf]
        %v862 = vld [vmem:[%s201 + $0x630] sm:$0xf]
        %v863 = vld [vmem:[%s201 + $0x634] sm:$0xf]
        %v864 = vld [vmem:[%s201 + $0x638] sm:$0xf]
        %v865 = vld [vmem:[%s201 + $0x63c] sm:$0xf]
        %v866 = vld [vmem:[%s201 + $0x640] sm:$0xf]
        %v867 = vld [vmem:[%s201 + $0x644] sm:$0xf]
        %v868 = vld [vmem:[%s201 + $0x648] sm:$0xf]
        %v869 = vld [vmem:[%s201 + $0x64c] sm:$0xf]
        %v870 = vld [vmem:[%s201 + $0x650] sm:$0xf]
        %v871 = vld [vmem:[%s201 + $0x654] sm:$0xf]
        %v872 = vld [vmem:[%s201 + $0x658] sm:$0xf]
        %v873 = vld [vmem:[%s201 + $0x65c] sm:$0xf]
        %v874 = vld [vmem:[%s201 + $0x660] sm:$0xf]
        %v875 = vld [vmem:[%s201 + $0x664] sm:$0xf]
        %v876 = vld [vmem:[%s201 + $0x668] sm:$0xf]
        %v877 = vld [vmem:[%s201 + $0x66c] sm:$0xf]
        %v878 = vld [vmem:[%s201 + $0x670] sm:$0xf]
        %v879 = vld [vmem:[%s201 + $0x674] sm:$0xf]
        %v880 = vld [vmem:[%s201 + $0x678] sm:$0xf]
        %v881 = vld [vmem:[%s201 + $0x67c] sm:$0xf]
        %v882 = vld [vmem:[%s201 + $0x680] sm:$0xf]
        %v883 = vld [vmem:[%s201 + $0x684] sm:$0xf]
        %v884 = vld [vmem:[%s201 + $0x688] sm:$0xf]
        %v885 = vld [vmem:[%s201 + $0x68c] sm:$0xf]
        %v886 = vld [vmem:[%s201 + $0x690] sm:$0xf]
        %v887 = vld [vmem:[%s201 + $0x694] sm:$0xf]
        %v888 = vld [vmem:[%s201 + $0x698] sm:$0xf]
        %v889 = vld [vmem:[%s201 + $0x69c] sm:$0xf]
        %v890 = vld [vmem:[%s201 + $0x6a0] sm:$0xf]
        %v891 = vld [vmem:[%s201 + $0x6a4] sm:$0xf]
        %v892 = vld [vmem:[%s201 + $0x6a8] sm:$0xf]
        %v893 = vld [vmem:[%s201 + $0x6ac] sm:$0xf]
        %v894 = vld [vmem:[%s201 + $0x6b0] sm:$0xf]
        %v895 = vld [vmem:[%s201 + $0x6b4] sm:$0xf]
        %v896 = vld [vmem:[%s201 + $0x6b8] sm:$0xf]
        %v897 = vld [vmem:[%s201 + $0x6bc] sm:$0xf]
        %v898 = vld [vmem:[%s201 + $0x6c0] sm:$0xf]
        %v899 = vld [vmem:[%s201 + $0x6c4] sm:$0xf]
        %v900 = vld [vmem:[%s201 + $0x6c8] sm:$0xf]
        %v901 = vld [vmem:[%s201 + $0x6cc] sm:$0xf]
        %v902 = vld [vmem:[%s201 + $0x6d0] sm:$0xf]
        %v903 = vld [vmem:[%s201 + $0x6d4] sm:$0xf]
        %v904 = vld [vmem:[%s201 + $0x6d8] sm:$0xf]
        %v905 = vld [vmem:[%s201 + $0x6dc] sm:$0xf]
        %v906 = vld [vmem:[%s201 + $0x6e0] sm:$0xf]
        %v907 = vld [vmem:[%s201 + $0x6e4] sm:$0xf]
        %v908 = vld [vmem:[%s201 + $0x6e8] sm:$0xf]
        %v909 = vld [vmem:[%s201 + $0x6ec] sm:$0xf]
        %v910 = vld [vmem:[%s201 + $0x6f0] sm:$0xf]
        %v911 = vld [vmem:[%s201 + $0x6f4] sm:$0xf]
        %v912 = vld [vmem:[%s201 + $0x6f8] sm:$0xf]
        %v913 = vld [vmem:[%s201 + $0x6fc] sm:$0xf]
        %v914 = vld [vmem:[%s201 + $0x700] sm:$0xf]
        %v915 = vld [vmem:[%s201 + $0x704] sm:$0xf]
        %v916 = vld [vmem:[%s201 + $0x708] sm:$0xf]
        %v917 = vld [vmem:[%s201 + $0x70c] sm:$0xf]
        %v918 = vld [vmem:[%s201 + $0x710] sm:$0xf]
        %v919 = vld [vmem:[%s201 + $0x714] sm:$0xf]
        %v920 = vld [vmem:[%s201 + $0x718] sm:$0xf]
        %v921 = vld [vmem:[%s201 + $0x71c] sm:$0xf]
        %v922 = vld [vmem:[%s201 + $0x720] sm:$0xf]
        %v923 = vld [vmem:[%s201 + $0x724] sm:$0xf]
        %v924 = vld [vmem:[%s201 + $0x728] sm:$0xf]
        %v925 = vld [vmem:[%s201 + $0x72c] sm:$0xf]
        %v926 = vld [vmem:[%s201 + $0x730] sm:$0xf]
        %v927 = vld [vmem:[%s201 + $0x734] sm:$0xf]
        %v928 = vld [vmem:[%s201 + $0x738] sm:$0xf]
        %v929 = vld [vmem:[%s201 + $0x73c] sm:$0xf]
        %v930 = vld [vmem:[%s201 + $0x740] sm:$0xf]
        %v931 = vld [vmem:[%s201 + $0x744] sm:$0xf]
        %v932 = vld [vmem:[%s201 + $0x748] sm:$0xf]
        %v933 = vld [vmem:[%s201 + $0x74c] sm:$0xf]
        %v934 = vld [vmem:[%s201 + $0x750] sm:$0xf]
        %v935 = vld [vmem:[%s201 + $0x754] sm:$0xf]
        %v936 = vld [vmem:[%s201 + $0x758] sm:$0xf]
        %v937 = vld [vmem:[%s201 + $0x75c] sm:$0xf]
        %v938 = vld [vmem:[%s201 + $0x760] sm:$0xf]
        %v939 = vld [vmem:[%s201 + $0x764] sm:$0xf]
        %v940 = vld [vmem:[%s201 + $0x768] sm:$0xf]
        %v941 = vld [vmem:[%s201 + $0x76c] sm:$0xf]
        %v942 = vld [vmem:[%s201 + $0x770] sm:$0xf]
        %v943 = vld [vmem:[%s201 + $0x774] sm:$0xf]
        %v944 = vld [vmem:[%s201 + $0x778] sm:$0xf]
        %v945 = vld [vmem:[%s201 + $0x77c] sm:$0xf]
        %v946 = vld [vmem:[%s201 + $0x780] sm:$0xf]
        %v947 = vld [vmem:[%s201 + $0x784] sm:$0xf]
        %v948 = vld [vmem:[%s201 + $0x788] sm:$0xf]
        %v949 = vld [vmem:[%s201 + $0x78c] sm:$0xf]
        %v950 = vld [vmem:[%s201 + $0x790] sm:$0xf]
        %v951 = vld [vmem:[%s201 + $0x794] sm:$0xf]
        %v952 = vld [vmem:[%s201 + $0x798] sm:$0xf]
        %v953 = vld [vmem:[%s201 + $0x79c] sm:$0xf]
        %v954 = vld [vmem:[%s201 + $0x7a0] sm:$0xf]
        %v955 = vld [vmem:[%s201 + $0x7a4] sm:$0xf]
        %v956 = vld [vmem:[%s201 + $0x7a8] sm:$0xf]
        %v957 = vld [vmem:[%s201 + $0x7ac] sm:$0xf]
        %v958 = vld [vmem:[%s201 + $0x7b0] sm:$0xf]
        %v959 = vld [vmem:[%s201 + $0x7b4] sm:$0xf]
        %v960 = vld [vmem:[%s201 + $0x7b8] sm:$0xf]
        %v961 = vld [vmem:[%s201 + $0x7bc] sm:$0xf]
        %v962 = vld [vmem:[%s201 + $0x7c0] sm:$0xf]
        %v963 = vld [vmem:[%s201 + $0x7c4] sm:$0xf]
        %v964 = vld [vmem:[%s201 + $0x7c8] sm:$0xf]
        %v965 = vld [vmem:[%s201 + $0x7cc] sm:$0xf]
        %v966 = vld [vmem:[%s201 + $0x7d0] sm:$0xf]
        %v967 = vld [vmem:[%s201 + $0x7d4] sm:$0xf]
        %v968 = vld [vmem:[%s201 + $0x7d8] sm:$0xf]
        %v969 = vld [vmem:[%s201 + $0x7dc] sm:$0xf]
        %v970 = vld [vmem:[%s201 + $0x7e0] sm:$0xf]
        %v971 = vld [vmem:[%s201 + $0x7e4] sm:$0xf]
        %v972 = vld [vmem:[%s201 + $0x7e8] sm:$0xf]
        %v973 = vld [vmem:[%s201 + $0x7ec] sm:$0xf]
        %v974 = vld [vmem:[%s201 + $0x7f0] sm:$0xf]
        %v975 = vld [vmem:[%s201 + $0x7f4] sm:$0xf]
        %v976 = vld [vmem:[%s201 + $0x7f8] sm:$0xf]
        %v977 = vld [vmem:[%s201 + $0x7fc] sm:$0xf]
        %v1490 = vunpack.c.l.b16 %v466
        %v1491 = vunpack.c.l.b16 %v467
        %v1492 = vunpack.c.l.b16 %v468
        %v1493 = vunpack.c.l.b16 %v469
        %v1494 = vunpack.c.l.b16 %v470
        %v1495 = vunpack.c.l.b16 %v471
        %v1496 = vunpack.c.l.b16 %v472
        %v1497 = vunpack.c.l.b16 %v473
        %v1498 = vunpack.c.l.b16 %v474
        %v1499 = vunpack.c.l.b16 %v475
        %v1500 = vunpack.c.l.b16 %v476
        %v1501 = vunpack.c.l.b16 %v477
        %v1502 = vunpack.c.l.b16 %v478
        %v1503 = vunpack.c.l.b16 %v479
        %v1504 = vunpack.c.l.b16 %v480
        %v1505 = vunpack.c.l.b16 %v481
        %v1506 = vunpack.c.l.b16 %v482
        %v1507 = vunpack.c.l.b16 %v483
        %v1508 = vunpack.c.l.b16 %v484
        %v1509 = vunpack.c.l.b16 %v485
        %v1510 = vunpack.c.l.b16 %v486
        %v1511 = vunpack.c.l.b16 %v487
        %v1512 = vunpack.c.l.b16 %v488
        %v1513 = vunpack.c.l.b16 %v489
        %v1514 = vunpack.c.l.b16 %v490
        %v1515 = vunpack.c.l.b16 %v491
        %v1516 = vunpack.c.l.b16 %v492
        %v1517 = vunpack.c.l.b16 %v493
        %v1518 = vunpack.c.l.b16 %v494
        %v1519 = vunpack.c.l.b16 %v495
        %v1520 = vunpack.c.l.b16 %v496
        %v1521 = vunpack.c.l.b16 %v497
        %v1522 = vunpack.c.l.b16 %v498
        %v1523 = vunpack.c.l.b16 %v499
        %v1524 = vunpack.c.l.b16 %v500
        %v1525 = vunpack.c.l.b16 %v501
        %v1526 = vunpack.c.l.b16 %v502
        %v1527 = vunpack.c.l.b16 %v503
        %v1528 = vunpack.c.l.b16 %v504
        %v1529 = vunpack.c.l.b16 %v505
        %v1530 = vunpack.c.l.b16 %v506
        %v1531 = vunpack.c.l.b16 %v507
        %v1532 = vunpack.c.l.b16 %v508
        %v1533 = vunpack.c.l.b16 %v509
        %v1534 = vunpack.c.l.b16 %v510
        %v1535 = vunpack.c.l.b16 %v511
        %v1536 = vunpack.c.l.b16 %v512
        %v1537 = vunpack.c.l.b16 %v513
        %v1538 = vunpack.c.l.b16 %v514
        %v1539 = vunpack.c.l.b16 %v515
        %v1540 = vunpack.c.l.b16 %v516
        %v1541 = vunpack.c.l.b16 %v517
        %v1542 = vunpack.c.l.b16 %v518
        %v1543 = vunpack.c.l.b16 %v519
        %v1544 = vunpack.c.l.b16 %v520
        %v1545 = vunpack.c.l.b16 %v521
        %v1546 = vunpack.c.l.b16 %v522
        %v1547 = vunpack.c.l.b16 %v523
        %v1548 = vunpack.c.l.b16 %v524
        %v1549 = vunpack.c.l.b16 %v525
        %v1550 = vunpack.c.l.b16 %v526
        %v1551 = vunpack.c.l.b16 %v527
        %v1552 = vunpack.c.l.b16 %v528
        %v1553 = vunpack.c.l.b16 %v529
        %v1554 = vunpack.c.l.b16 %v530
        %v1555 = vunpack.c.l.b16 %v531
        %v1556 = vunpack.c.l.b16 %v532
        %v1557 = vunpack.c.l.b16 %v533
        %v1558 = vunpack.c.l.b16 %v534
        %v1559 = vunpack.c.l.b16 %v535
        %v1560 = vunpack.c.l.b16 %v536
        %v1561 = vunpack.c.l.b16 %v537
        %v1562 = vunpack.c.l.b16 %v538
        %v1563 = vunpack.c.l.b16 %v539
        %v1564 = vunpack.c.l.b16 %v540
        %v1565 = vunpack.c.l.b16 %v541
        %v1566 = vunpack.c.l.b16 %v542
        %v1567 = vunpack.c.l.b16 %v543
        %v1568 = vunpack.c.l.b16 %v544
        %v1569 = vunpack.c.l.b16 %v545
        %v1570 = vunpack.c.l.b16 %v546
        %v1571 = vunpack.c.l.b16 %v547
        %v1572 = vunpack.c.l.b16 %v548
        %v1573 = vunpack.c.l.b16 %v549
        %v1574 = vunpack.c.l.b16 %v550
        %v1575 = vunpack.c.l.b16 %v551
        %v1576 = vunpack.c.l.b16 %v552
        %v1577 = vunpack.c.l.b16 %v553
        %v1578 = vunpack.c.l.b16 %v554
        %v1579 = vunpack.c.l.b16 %v555
        %v1580 = vunpack.c.l.b16 %v556
        %v1581 = vunpack.c.l.b16 %v557
        %v1582 = vunpack.c.l.b16 %v558
        %v1583 = vunpack.c.l.b16 %v559
        %v1584 = vunpack.c.l.b16 %v560
        %v1585 = vunpack.c.l.b16 %v561
        %v1586 = vunpack.c.l.b16 %v562
        %v1587 = vunpack.c.l.b16 %v563
        %v1588 = vunpack.c.l.b16 %v564
        %v1589 = vunpack.c.l.b16 %v565
        %v1590 = vunpack.c.l.b16 %v566
        %v1591 = vunpack.c.l.b16 %v567
        %v1592 = vunpack.c.l.b16 %v568
        %v1593 = vunpack.c.l.b16 %v569
        %v1594 = vunpack.c.l.b16 %v570
        %v1595 = vunpack.c.l.b16 %v571
        %v1596 = vunpack.c.l.b16 %v572
        %v1597 = vunpack.c.l.b16 %v573
        %v1598 = vunpack.c.l.b16 %v574
        %v1599 = vunpack.c.l.b16 %v575
        %v1600 = vunpack.c.l.b16 %v576
        %v1601 = vunpack.c.l.b16 %v577
        %v1602 = vunpack.c.l.b16 %v578
        %v1603 = vunpack.c.l.b16 %v579
        %v1604 = vunpack.c.l.b16 %v580
        %v1605 = vunpack.c.l.b16 %v581
        %v1606 = vunpack.c.l.b16 %v582
        %v1607 = vunpack.c.l.b16 %v583
        %v1608 = vunpack.c.l.b16 %v584
        %v1609 = vunpack.c.l.b16 %v585
        %v1610 = vunpack.c.l.b16 %v586
        %v1611 = vunpack.c.l.b16 %v587
        %v1612 = vunpack.c.l.b16 %v588
        %v1613 = vunpack.c.l.b16 %v589
        %v1614 = vunpack.c.l.b16 %v590
        %v1615 = vunpack.c.l.b16 %v591
        %v1616 = vunpack.c.l.b16 %v592
        %v1617 = vunpack.c.l.b16 %v593
        %v1618 = vunpack.c.l.b16 %v594
        %v1619 = vunpack.c.l.b16 %v595
        %v1620 = vunpack.c.l.b16 %v596
        %v1621 = vunpack.c.l.b16 %v597
        %v1622 = vunpack.c.l.b16 %v598
        %v1623 = vunpack.c.l.b16 %v599
        %v1624 = vunpack.c.l.b16 %v600
        %v1625 = vunpack.c.l.b16 %v601
        %v1626 = vunpack.c.l.b16 %v602
        %v1627 = vunpack.c.l.b16 %v603
        %v1628 = vunpack.c.l.b16 %v604
        %v1629 = vunpack.c.l.b16 %v605
        %v1630 = vunpack.c.l.b16 %v606
        %v1631 = vunpack.c.l.b16 %v607
        %v1632 = vunpack.c.l.b16 %v608
        %v1633 = vunpack.c.l.b16 %v609
        %v1634 = vunpack.c.l.b16 %v610
        %v1635 = vunpack.c.l.b16 %v611
        %v1636 = vunpack.c.l.b16 %v612
        %v1637 = vunpack.c.l.b16 %v613
        %v1638 = vunpack.c.l.b16 %v614
        %v1639 = vunpack.c.l.b16 %v615
        %v1640 = vunpack.c.l.b16 %v616
        %v1641 = vunpack.c.l.b16 %v617
        %v1642 = vunpack.c.l.b16 %v618
        %v1643 = vunpack.c.l.b16 %v619
        %v1644 = vunpack.c.l.b16 %v620
        %v1645 = vunpack.c.l.b16 %v621
        %v1646 = vunpack.c.l.b16 %v622
        %v1647 = vunpack.c.l.b16 %v623
        %v1648 = vunpack.c.l.b16 %v624
        %v1649 = vunpack.c.l.b16 %v625
        %v1650 = vunpack.c.l.b16 %v626
        %v1651 = vunpack.c.l.b16 %v627
        %v1652 = vunpack.c.l.b16 %v628
        %v1653 = vunpack.c.l.b16 %v629
        %v1654 = vunpack.c.l.b16 %v630
        %v1655 = vunpack.c.l.b16 %v631
        %v1656 = vunpack.c.l.b16 %v632
        %v1657 = vunpack.c.l.b16 %v633
        %v1658 = vunpack.c.l.b16 %v634
        %v1659 = vunpack.c.l.b16 %v635
        %v1660 = vunpack.c.l.b16 %v636
        %v1661 = vunpack.c.l.b16 %v637
        %v1662 = vunpack.c.l.b16 %v638
        %v1663 = vunpack.c.l.b16 %v639
        %v1664 = vunpack.c.l.b16 %v640
        %v1665 = vunpack.c.l.b16 %v641
        %v1666 = vunpack.c.l.b16 %v642
        %v1667 = vunpack.c.l.b16 %v643
        %v1668 = vunpack.c.l.b16 %v644
        %v1669 = vunpack.c.l.b16 %v645
        %v1670 = vunpack.c.l.b16 %v646
        %v1671 = vunpack.c.l.b16 %v647
        %v1672 = vunpack.c.l.b16 %v648
        %v1673 = vunpack.c.l.b16 %v649
        %v1674 = vunpack.c.l.b16 %v650
        %v1675 = vunpack.c.l.b16 %v651
        %v1676 = vunpack.c.l.b16 %v652
        %v1677 = vunpack.c.l.b16 %v653
        %v1678 = vunpack.c.l.b16 %v654
        %v1679 = vunpack.c.l.b16 %v655
        %v1680 = vunpack.c.l.b16 %v656
        %v1681 = vunpack.c.l.b16 %v657
        %v1682 = vunpack.c.l.b16 %v658
        %v1683 = vunpack.c.l.b16 %v659
        %v1684 = vunpack.c.l.b16 %v660
        %v1685 = vunpack.c.l.b16 %v661
        %v1686 = vunpack.c.l.b16 %v662
        %v1687 = vunpack.c.l.b16 %v663
        %v1688 = vunpack.c.l.b16 %v664
        %v1689 = vunpack.c.l.b16 %v665
        %v1690 = vunpack.c.l.b16 %v666
        %v1691 = vunpack.c.l.b16 %v667
        %v1692 = vunpack.c.l.b16 %v668
        %v1693 = vunpack.c.l.b16 %v669
        %v1694 = vunpack.c.l.b16 %v670
        %v1695 = vunpack.c.l.b16 %v671
        %v1696 = vunpack.c.l.b16 %v672
        %v1697 = vunpack.c.l.b16 %v673
        %v1698 = vunpack.c.l.b16 %v674
        %v1699 = vunpack.c.l.b16 %v675
        %v1700 = vunpack.c.l.b16 %v676
        %v1701 = vunpack.c.l.b16 %v677
        %v1702 = vunpack.c.l.b16 %v678
        %v1703 = vunpack.c.l.b16 %v679
        %v1704 = vunpack.c.l.b16 %v680
        %v1705 = vunpack.c.l.b16 %v681
        %v1706 = vunpack.c.l.b16 %v682
        %v1707 = vunpack.c.l.b16 %v683
        %v1708 = vunpack.c.l.b16 %v684
        %v1709 = vunpack.c.l.b16 %v685
        %v1710 = vunpack.c.l.b16 %v686
        %v1711 = vunpack.c.l.b16 %v687
        %v1712 = vunpack.c.l.b16 %v688
        %v1713 = vunpack.c.l.b16 %v689
        %v1714 = vunpack.c.l.b16 %v690
        %v1715 = vunpack.c.l.b16 %v691
        %v1716 = vunpack.c.l.b16 %v692
        %v1717 = vunpack.c.l.b16 %v693
        %v1718 = vunpack.c.l.b16 %v694
        %v1719 = vunpack.c.l.b16 %v695
        %v1720 = vunpack.c.l.b16 %v696
        %v1721 = vunpack.c.l.b16 %v697
        %v1722 = vunpack.c.l.b16 %v698
        %v1723 = vunpack.c.l.b16 %v699
        %v1724 = vunpack.c.l.b16 %v700
        %v1725 = vunpack.c.l.b16 %v701
        %v1726 = vunpack.c.l.b16 %v702
        %v1727 = vunpack.c.l.b16 %v703
        %v1728 = vunpack.c.l.b16 %v704
        %v1729 = vunpack.c.l.b16 %v705
        %v1730 = vunpack.c.l.b16 %v706
        %v1731 = vunpack.c.l.b16 %v707
        %v1732 = vunpack.c.l.b16 %v708
        %v1733 = vunpack.c.l.b16 %v709
        %v1734 = vunpack.c.l.b16 %v710
        %v1735 = vunpack.c.l.b16 %v711
        %v1736 = vunpack.c.l.b16 %v712
        %v1737 = vunpack.c.l.b16 %v713
        %v1738 = vunpack.c.l.b16 %v714
        %v1739 = vunpack.c.l.b16 %v715
        %v1740 = vunpack.c.l.b16 %v716
        %v1741 = vunpack.c.l.b16 %v717
        %v1742 = vunpack.c.l.b16 %v718
        %v1743 = vunpack.c.l.b16 %v719
        %v1744 = vunpack.c.l.b16 %v720
        %v1745 = vunpack.c.l.b16 %v721
        %v1746 = vunpack.c.l.b16 %v722
        %v1747 = vunpack.c.l.b16 %v723
        %v1748 = vunpack.c.l.b16 %v724
        %v1749 = vunpack.c.l.b16 %v725
        %v1750 = vunpack.c.l.b16 %v726
        %v1751 = vunpack.c.l.b16 %v727
        %v1752 = vunpack.c.l.b16 %v728
        %v1753 = vunpack.c.l.b16 %v729
        %v1754 = vunpack.c.l.b16 %v730
        %v1755 = vunpack.c.l.b16 %v731
        %v1756 = vunpack.c.l.b16 %v732
        %v1757 = vunpack.c.l.b16 %v733
        %v1758 = vunpack.c.l.b16 %v734
        %v1759 = vunpack.c.l.b16 %v735
        %v1760 = vunpack.c.l.b16 %v736
        %v1761 = vunpack.c.l.b16 %v737
        %v1762 = vunpack.c.l.b16 %v738
        %v1763 = vunpack.c.l.b16 %v739
        %v1764 = vunpack.c.l.b16 %v740
        %v1765 = vunpack.c.l.b16 %v741
        %v1766 = vunpack.c.l.b16 %v742
        %v1767 = vunpack.c.l.b16 %v743
        %v1768 = vunpack.c.l.b16 %v744
        %v1769 = vunpack.c.l.b16 %v745
        %v1770 = vunpack.c.l.b16 %v746
        %v1771 = vunpack.c.l.b16 %v747
        %v1772 = vunpack.c.l.b16 %v748
        %v1773 = vunpack.c.l.b16 %v749
        %v1774 = vunpack.c.l.b16 %v750
        %v1775 = vunpack.c.l.b16 %v751
        %v1776 = vunpack.c.l.b16 %v752
        %v1777 = vunpack.c.l.b16 %v753
        %v1778 = vunpack.c.l.b16 %v754
        %v1779 = vunpack.c.l.b16 %v755
        %v1780 = vunpack.c.l.b16 %v756
        %v1781 = vunpack.c.l.b16 %v757
        %v1782 = vunpack.c.l.b16 %v758
        %v1783 = vunpack.c.l.b16 %v759
        %v1784 = vunpack.c.l.b16 %v760
        %v1785 = vunpack.c.l.b16 %v761
        %v1786 = vunpack.c.l.b16 %v762
        %v1787 = vunpack.c.l.b16 %v763
        %v1788 = vunpack.c.l.b16 %v764
        %v1789 = vunpack.c.l.b16 %v765
        %v1790 = vunpack.c.l.b16 %v766
        %v1791 = vunpack.c.l.b16 %v767
        %v1792 = vunpack.c.l.b16 %v768
        %v1793 = vunpack.c.l.b16 %v769
        %v1794 = vunpack.c.l.b16 %v770
        %v1795 = vunpack.c.l.b16 %v771
        %v1796 = vunpack.c.l.b16 %v772
        %v1797 = vunpack.c.l.b16 %v773
        %v1798 = vunpack.c.l.b16 %v774
        %v1799 = vunpack.c.l.b16 %v775
        %v1800 = vunpack.c.l.b16 %v776
        %v1801 = vunpack.c.l.b16 %v777
        %v1802 = vunpack.c.l.b16 %v778
        %v1803 = vunpack.c.l.b16 %v779
        %v1804 = vunpack.c.l.b16 %v780
        %v1805 = vunpack.c.l.b16 %v781
        %v1806 = vunpack.c.l.b16 %v782
        %v1807 = vunpack.c.l.b16 %v783
        %v1808 = vunpack.c.l.b16 %v784
        %v1809 = vunpack.c.l.b16 %v785
        %v1810 = vunpack.c.l.b16 %v786
        %v1811 = vunpack.c.l.b16 %v787
        %v1812 = vunpack.c.l.b16 %v788
        %v1813 = vunpack.c.l.b16 %v789
        %v1814 = vunpack.c.l.b16 %v790
        %v1815 = vunpack.c.l.b16 %v791
        %v1816 = vunpack.c.l.b16 %v792
        %v1817 = vunpack.c.l.b16 %v793
        %v1818 = vunpack.c.l.b16 %v794
        %v1819 = vunpack.c.l.b16 %v795
        %v1820 = vunpack.c.l.b16 %v796
        %v1821 = vunpack.c.l.b16 %v797
        %v1822 = vunpack.c.l.b16 %v798
        %v1823 = vunpack.c.l.b16 %v799
        %v1824 = vunpack.c.l.b16 %v800
        %v1825 = vunpack.c.l.b16 %v801
        %v1826 = vunpack.c.l.b16 %v802
        %v1827 = vunpack.c.l.b16 %v803
        %v1828 = vunpack.c.l.b16 %v804
        %v1829 = vunpack.c.l.b16 %v805
        %v1830 = vunpack.c.l.b16 %v806
        %v1831 = vunpack.c.l.b16 %v807
        %v1832 = vunpack.c.l.b16 %v808
        %v1833 = vunpack.c.l.b16 %v809
        %v1834 = vunpack.c.l.b16 %v810
        %v1835 = vunpack.c.l.b16 %v811
        %v1836 = vunpack.c.l.b16 %v812
        %v1837 = vunpack.c.l.b16 %v813
        %v1838 = vunpack.c.l.b16 %v814
        %v1839 = vunpack.c.l.b16 %v815
        %v1840 = vunpack.c.l.b16 %v816
        %v1841 = vunpack.c.l.b16 %v817
        %v1842 = vunpack.c.l.b16 %v818
        %v1843 = vunpack.c.l.b16 %v819
        %v1844 = vunpack.c.l.b16 %v820
        %v1845 = vunpack.c.l.b16 %v821
        %v1846 = vunpack.c.l.b16 %v822
        %v1847 = vunpack.c.l.b16 %v823
        %v1848 = vunpack.c.l.b16 %v824
        %v1849 = vunpack.c.l.b16 %v825
        %v1850 = vunpack.c.l.b16 %v826
        %v1851 = vunpack.c.l.b16 %v827
        %v1852 = vunpack.c.l.b16 %v828
        %v1853 = vunpack.c.l.b16 %v829
        %v1854 = vunpack.c.l.b16 %v830
        %v1855 = vunpack.c.l.b16 %v831
        %v1856 = vunpack.c.l.b16 %v832
        %v1857 = vunpack.c.l.b16 %v833
        %v1858 = vunpack.c.l.b16 %v834
        %v1859 = vunpack.c.l.b16 %v835
        %v1860 = vunpack.c.l.b16 %v836
        %v1861 = vunpack.c.l.b16 %v837
        %v1862 = vunpack.c.l.b16 %v838
        %v1863 = vunpack.c.l.b16 %v839
        %v1864 = vunpack.c.l.b16 %v840
        %v1865 = vunpack.c.l.b16 %v841
        %v1866 = vunpack.c.l.b16 %v842
        %v1867 = vunpack.c.l.b16 %v843
        %v1868 = vunpack.c.l.b16 %v844
        %v1869 = vunpack.c.l.b16 %v845
        %v1870 = vunpack.c.l.b16 %v846
        %v1871 = vunpack.c.l.b16 %v847
        %v1872 = vunpack.c.l.b16 %v848
        %v1873 = vunpack.c.l.b16 %v849
        %v1874 = vunpack.c.l.b16 %v850
        %v1875 = vunpack.c.l.b16 %v851
        %v1876 = vunpack.c.l.b16 %v852
        %v1877 = vunpack.c.l.b16 %v853
        %v1878 = vunpack.c.l.b16 %v854
        %v1879 = vunpack.c.l.b16 %v855
        %v1880 = vunpack.c.l.b16 %v856
        %v1881 = vunpack.c.l.b16 %v857
        %v1882 = vunpack.c.l.b16 %v858
        %v1883 = vunpack.c.l.b16 %v859
        %v1884 = vunpack.c.l.b16 %v860
        %v1885 = vunpack.c.l.b16 %v861
        %v1886 = vunpack.c.l.b16 %v862
        %v1887 = vunpack.c.l.b16 %v863
        %v1888 = vunpack.c.l.b16 %v864
        %v1889 = vunpack.c.l.b16 %v865
        %v1890 = vunpack.c.l.b16 %v866
        %v1891 = vunpack.c.l.b16 %v867
        %v1892 = vunpack.c.l.b16 %v868
        %v1893 = vunpack.c.l.b16 %v869
        %v1894 = vunpack.c.l.b16 %v870
        %v1895 = vunpack.c.l.b16 %v871
        %v1896 = vunpack.c.l.b16 %v872
        %v1897 = vunpack.c.l.b16 %v873
        %v1898 = vunpack.c.l.b16 %v874
        %v1899 = vunpack.c.l.b16 %v875
        %v1900 = vunpack.c.l.b16 %v876
        %v1901 = vunpack.c.l.b16 %v877
        %v1902 = vunpack.c.l.b16 %v878
        %v1903 = vunpack.c.l.b16 %v879
        %v1904 = vunpack.c.l.b16 %v880
        %v1905 = vunpack.c.l.b16 %v881
        %v1906 = vunpack.c.l.b16 %v882
        %v1907 = vunpack.c.l.b16 %v883
        %v1908 = vunpack.c.l.b16 %v884
        %v1909 = vunpack.c.l.b16 %v885
        %v1910 = vunpack.c.l.b16 %v886
        %v1911 = vunpack.c.l.b16 %v887
        %v1912 = vunpack.c.l.b16 %v888
        %v1913 = vunpack.c.l.b16 %v889
        %v1914 = vunpack.c.l.b16 %v890
        %v1915 = vunpack.c.l.b16 %v891
        %v1916 = vunpack.c.l.b16 %v892
        %v1917 = vunpack.c.l.b16 %v893
        %v1918 = vunpack.c.l.b16 %v894
        %v1919 = vunpack.c.l.b16 %v895
        %v1920 = vunpack.c.l.b16 %v896
        %v1921 = vunpack.c.l.b16 %v897
        %v1922 = vunpack.c.l.b16 %v898
        %v1923 = vunpack.c.l.b16 %v899
        %v1924 = vunpack.c.l.b16 %v900
        %v1925 = vunpack.c.l.b16 %v901
        %v1926 = vunpack.c.l.b16 %v902
        %v1927 = vunpack.c.l.b16 %v903
        %v1928 = vunpack.c.l.b16 %v904
        %v1929 = vunpack.c.l.b16 %v905
        %v1930 = vunpack.c.l.b16 %v906
        %v1931 = vunpack.c.l.b16 %v907
        %v1932 = vunpack.c.l.b16 %v908
        %v1933 = vunpack.c.l.b16 %v909
        %v1934 = vunpack.c.l.b16 %v910
        %v1935 = vunpack.c.l.b16 %v911
        %v1936 = vunpack.c.l.b16 %v912
        %v1937 = vunpack.c.l.b16 %v913
        %v1938 = vunpack.c.l.b16 %v914
        %v1939 = vunpack.c.l.b16 %v915
        %v1940 = vunpack.c.l.b16 %v916
        %v1941 = vunpack.c.l.b16 %v917
        %v1942 = vunpack.c.l.b16 %v918
        %v1943 = vunpack.c.l.b16 %v919
        %v1944 = vunpack.c.l.b16 %v920
        %v1945 = vunpack.c.l.b16 %v921
        %v1946 = vunpack.c.l.b16 %v922
        %v1947 = vunpack.c.l.b16 %v923
        %v1948 = vunpack.c.l.b16 %v924
        %v1949 = vunpack.c.l.b16 %v925
        %v1950 = vunpack.c.l.b16 %v926
        %v1951 = vunpack.c.l.b16 %v927
        %v1952 = vunpack.c.l.b16 %v928
        %v1953 = vunpack.c.l.b16 %v929
        %v1954 = vunpack.c.l.b16 %v930
        %v1955 = vunpack.c.l.b16 %v931
        %v1956 = vunpack.c.l.b16 %v932
        %v1957 = vunpack.c.l.b16 %v933
        %v1958 = vunpack.c.l.b16 %v934
        %v1959 = vunpack.c.l.b16 %v935
        %v1960 = vunpack.c.l.b16 %v936
        %v1961 = vunpack.c.l.b16 %v937
        %v1962 = vunpack.c.l.b16 %v938
        %v1963 = vunpack.c.l.b16 %v939
        %v1964 = vunpack.c.l.b16 %v940
        %v1965 = vunpack.c.l.b16 %v941
        %v1966 = vunpack.c.l.b16 %v942
        %v1967 = vunpack.c.l.b16 %v943
        %v1968 = vunpack.c.l.b16 %v944
        %v1969 = vunpack.c.l.b16 %v945
        %v1970 = vunpack.c.l.b16 %v946
        %v1971 = vunpack.c.l.b16 %v947
        %v1972 = vunpack.c.l.b16 %v948
        %v1973 = vunpack.c.l.b16 %v949
        %v1974 = vunpack.c.l.b16 %v950
        %v1975 = vunpack.c.l.b16 %v951
        %v1976 = vunpack.c.l.b16 %v952
        %v1977 = vunpack.c.l.b16 %v953
        %v1978 = vunpack.c.l.b16 %v954
        %v1979 = vunpack.c.l.b16 %v955
        %v1980 = vunpack.c.l.b16 %v956
        %v1981 = vunpack.c.l.b16 %v957
        %v1982 = vunpack.c.l.b16 %v958
        %v1983 = vunpack.c.l.b16 %v959
        %v1984 = vunpack.c.l.b16 %v960
        %v1985 = vunpack.c.l.b16 %v961
        %v1986 = vunpack.c.l.b16 %v962
        %v1987 = vunpack.c.l.b16 %v963
        %v1988 = vunpack.c.l.b16 %v964
        %v1989 = vunpack.c.l.b16 %v965
        %v1990 = vunpack.c.l.b16 %v966
        %v1991 = vunpack.c.l.b16 %v967
        %v1992 = vunpack.c.l.b16 %v968
        %v1993 = vunpack.c.l.b16 %v969
        %v1994 = vunpack.c.l.b16 %v970
        %v1995 = vunpack.c.l.b16 %v971
        %v1996 = vunpack.c.l.b16 %v972
        %v1997 = vunpack.c.l.b16 %v973
        %v1998 = vunpack.c.l.b16 %v974
        %v1999 = vunpack.c.l.b16 %v975
        %v2000 = vunpack.c.l.b16 %v976
        %v2001 = vunpack.c.l.b16 %v977
        %v2002 = vpack.c.b16 %v1491, %v1490
        %v2003 = vpack.c.b16 %v1493, %v1492
        %v2004 = vpack.c.b16 %v1495, %v1494
        %v2005 = vpack.c.b16 %v1497, %v1496
        %v2006 = vpack.c.b16 %v1499, %v1498
        %v2007 = vpack.c.b16 %v1501, %v1500
        %v2008 = vpack.c.b16 %v1503, %v1502
        %v2009 = vpack.c.b16 %v1505, %v1504
        %v2010 = vpack.c.b16 %v1507, %v1506
        %v2011 = vpack.c.b16 %v1509, %v1508
        %v2012 = vpack.c.b16 %v1511, %v1510
        %v2013 = vpack.c.b16 %v1513, %v1512
        %v2014 = vpack.c.b16 %v1515, %v1514
        %v2015 = vpack.c.b16 %v1517, %v1516
        %v2016 = vpack.c.b16 %v1519, %v1518
        %v2017 = vpack.c.b16 %v1521, %v1520
        %v2018 = vpack.c.b16 %v1523, %v1522
        %v2019 = vpack.c.b16 %v1525, %v1524
        %v2020 = vpack.c.b16 %v1527, %v1526
        %v2021 = vpack.c.b16 %v1529, %v1528
        %v2022 = vpack.c.b16 %v1531, %v1530
        %v2023 = vpack.c.b16 %v1533, %v1532
        %v2024 = vpack.c.b16 %v1535, %v1534
        %v2025 = vpack.c.b16 %v1537, %v1536
        %v2026 = vpack.c.b16 %v1539, %v1538
        %v2027 = vpack.c.b16 %v1541, %v1540
        %v2028 = vpack.c.b16 %v1543, %v1542
        %v2029 = vpack.c.b16 %v1545, %v1544
        %v2030 = vpack.c.b16 %v1547, %v1546
        %v2031 = vpack.c.b16 %v1549, %v1548
        %v2032 = vpack.c.b16 %v1551, %v1550
        %v2033 = vpack.c.b16 %v1553, %v1552
        %v2034 = vpack.c.b16 %v1555, %v1554
        %v2035 = vpack.c.b16 %v1557, %v1556
        %v2036 = vpack.c.b16 %v1559, %v1558
        %v2037 = vpack.c.b16 %v1561, %v1560
        %v2038 = vpack.c.b16 %v1563, %v1562
        %v2039 = vpack.c.b16 %v1565, %v1564
        %v2040 = vpack.c.b16 %v1567, %v1566
        %v2041 = vpack.c.b16 %v1569, %v1568
        %v2042 = vpack.c.b16 %v1571, %v1570
        %v2043 = vpack.c.b16 %v1573, %v1572
        %v2044 = vpack.c.b16 %v1575, %v1574
        %v2045 = vpack.c.b16 %v1577, %v1576
        %v2046 = vpack.c.b16 %v1579, %v1578
        %v2047 = vpack.c.b16 %v1581, %v1580
        %v2048 = vpack.c.b16 %v1583, %v1582
        %v2049 = vpack.c.b16 %v1585, %v1584
        %v2050 = vpack.c.b16 %v1587, %v1586
        %v2051 = vpack.c.b16 %v1589, %v1588
        %v2052 = vpack.c.b16 %v1591, %v1590
        %v2053 = vpack.c.b16 %v1593, %v1592
        %v2054 = vpack.c.b16 %v1595, %v1594
        %v2055 = vpack.c.b16 %v1597, %v1596
        %v2056 = vpack.c.b16 %v1599, %v1598
        %v2057 = vpack.c.b16 %v1601, %v1600
        %v2058 = vpack.c.b16 %v1603, %v1602
        %v2059 = vpack.c.b16 %v1605, %v1604
        %v2060 = vpack.c.b16 %v1607, %v1606
        %v2061 = vpack.c.b16 %v1609, %v1608
        %v2062 = vpack.c.b16 %v1611, %v1610
        %v2063 = vpack.c.b16 %v1613, %v1612
        %v2064 = vpack.c.b16 %v1615, %v1614
        %v2065 = vpack.c.b16 %v1617, %v1616
        %v2066 = vpack.c.b16 %v1619, %v1618
        %v2067 = vpack.c.b16 %v1621, %v1620
        %v2068 = vpack.c.b16 %v1623, %v1622
        %v2069 = vpack.c.b16 %v1625, %v1624
        %v2070 = vpack.c.b16 %v1627, %v1626
        %v2071 = vpack.c.b16 %v1629, %v1628
        %v2072 = vpack.c.b16 %v1631, %v1630
        %v2073 = vpack.c.b16 %v1633, %v1632
        %v2074 = vpack.c.b16 %v1635, %v1634
        %v2075 = vpack.c.b16 %v1637, %v1636
        %v2076 = vpack.c.b16 %v1639, %v1638
        %v2077 = vpack.c.b16 %v1641, %v1640
        %v2078 = vpack.c.b16 %v1643, %v1642
        %v2079 = vpack.c.b16 %v1645, %v1644
        %v2080 = vpack.c.b16 %v1647, %v1646
        %v2081 = vpack.c.b16 %v1649, %v1648
        %v2082 = vpack.c.b16 %v1651, %v1650
        %v2083 = vpack.c.b16 %v1653, %v1652
        %v2084 = vpack.c.b16 %v1655, %v1654
        %v2085 = vpack.c.b16 %v1657, %v1656
        %v2086 = vpack.c.b16 %v1659, %v1658
        %v2087 = vpack.c.b16 %v1661, %v1660
        %v2088 = vpack.c.b16 %v1663, %v1662
        %v2089 = vpack.c.b16 %v1665, %v1664
        %v2090 = vpack.c.b16 %v1667, %v1666
        %v2091 = vpack.c.b16 %v1669, %v1668
        %v2092 = vpack.c.b16 %v1671, %v1670
        %v2093 = vpack.c.b16 %v1673, %v1672
        %v2094 = vpack.c.b16 %v1675, %v1674
        %v2095 = vpack.c.b16 %v1677, %v1676
        %v2096 = vpack.c.b16 %v1679, %v1678
        %v2097 = vpack.c.b16 %v1681, %v1680
        %v2098 = vpack.c.b16 %v1683, %v1682
        %v2099 = vpack.c.b16 %v1685, %v1684
        %v2100 = vpack.c.b16 %v1687, %v1686
        %v2101 = vpack.c.b16 %v1689, %v1688
        %v2102 = vpack.c.b16 %v1691, %v1690
        %v2103 = vpack.c.b16 %v1693, %v1692
        %v2104 = vpack.c.b16 %v1695, %v1694
        %v2105 = vpack.c.b16 %v1697, %v1696
        %v2106 = vpack.c.b16 %v1699, %v1698
        %v2107 = vpack.c.b16 %v1701, %v1700
        %v2108 = vpack.c.b16 %v1703, %v1702
        %v2109 = vpack.c.b16 %v1705, %v1704
        %v2110 = vpack.c.b16 %v1707, %v1706
        %v2111 = vpack.c.b16 %v1709, %v1708
        %v2112 = vpack.c.b16 %v1711, %v1710
        %v2113 = vpack.c.b16 %v1713, %v1712
        %v2114 = vpack.c.b16 %v1715, %v1714
        %v2115 = vpack.c.b16 %v1717, %v1716
        %v2116 = vpack.c.b16 %v1719, %v1718
        %v2117 = vpack.c.b16 %v1721, %v1720
        %v2118 = vpack.c.b16 %v1723, %v1722
        %v2119 = vpack.c.b16 %v1725, %v1724
        %v2120 = vpack.c.b16 %v1727, %v1726
        %v2121 = vpack.c.b16 %v1729, %v1728
        %v2122 = vpack.c.b16 %v1731, %v1730
        %v2123 = vpack.c.b16 %v1733, %v1732
        %v2124 = vpack.c.b16 %v1735, %v1734
        %v2125 = vpack.c.b16 %v1737, %v1736
        %v2126 = vpack.c.b16 %v1739, %v1738
        %v2127 = vpack.c.b16 %v1741, %v1740
        %v2128 = vpack.c.b16 %v1743, %v1742
        %v2129 = vpack.c.b16 %v1745, %v1744
        %v2130 = vpack.c.b16 %v1747, %v1746
        %v2131 = vpack.c.b16 %v1749, %v1748
        %v2132 = vpack.c.b16 %v1751, %v1750
        %v2133 = vpack.c.b16 %v1753, %v1752
        %v2134 = vpack.c.b16 %v1755, %v1754
        %v2135 = vpack.c.b16 %v1757, %v1756
        %v2136 = vpack.c.b16 %v1759, %v1758
        %v2137 = vpack.c.b16 %v1761, %v1760
        %v2138 = vpack.c.b16 %v1763, %v1762
        %v2139 = vpack.c.b16 %v1765, %v1764
        %v2140 = vpack.c.b16 %v1767, %v1766
        %v2141 = vpack.c.b16 %v1769, %v1768
        %v2142 = vpack.c.b16 %v1771, %v1770
        %v2143 = vpack.c.b16 %v1773, %v1772
        %v2144 = vpack.c.b16 %v1775, %v1774
        %v2145 = vpack.c.b16 %v1777, %v1776
        %v2146 = vpack.c.b16 %v1779, %v1778
        %v2147 = vpack.c.b16 %v1781, %v1780
        %v2148 = vpack.c.b16 %v1783, %v1782
        %v2149 = vpack.c.b16 %v1785, %v1784
        %v2150 = vpack.c.b16 %v1787, %v1786
        %v2151 = vpack.c.b16 %v1789, %v1788
        %v2152 = vpack.c.b16 %v1791, %v1790
        %v2153 = vpack.c.b16 %v1793, %v1792
        %v2154 = vpack.c.b16 %v1795, %v1794
        %v2155 = vpack.c.b16 %v1797, %v1796
        %v2156 = vpack.c.b16 %v1799, %v1798
        %v2157 = vpack.c.b16 %v1801, %v1800
        %v2158 = vpack.c.b16 %v1803, %v1802
        %v2159 = vpack.c.b16 %v1805, %v1804
        %v2160 = vpack.c.b16 %v1807, %v1806
        %v2161 = vpack.c.b16 %v1809, %v1808
        %v2162 = vpack.c.b16 %v1811, %v1810
        %v2163 = vpack.c.b16 %v1813, %v1812
        %v2164 = vpack.c.b16 %v1815, %v1814
        %v2165 = vpack.c.b16 %v1817, %v1816
        %v2166 = vpack.c.b16 %v1819, %v1818
        %v2167 = vpack.c.b16 %v1821, %v1820
        %v2168 = vpack.c.b16 %v1823, %v1822
        %v2169 = vpack.c.b16 %v1825, %v1824
        %v2170 = vpack.c.b16 %v1827, %v1826
        %v2171 = vpack.c.b16 %v1829, %v1828
        %v2172 = vpack.c.b16 %v1831, %v1830
        %v2173 = vpack.c.b16 %v1833, %v1832
        %v2174 = vpack.c.b16 %v1835, %v1834
        %v2175 = vpack.c.b16 %v1837, %v1836
        %v2176 = vpack.c.b16 %v1839, %v1838
        %v2177 = vpack.c.b16 %v1841, %v1840
        %v2178 = vpack.c.b16 %v1843, %v1842
        %v2179 = vpack.c.b16 %v1845, %v1844
        %v2180 = vpack.c.b16 %v1847, %v1846
        %v2181 = vpack.c.b16 %v1849, %v1848
        %v2182 = vpack.c.b16 %v1851, %v1850
        %v2183 = vpack.c.b16 %v1853, %v1852
        %v2184 = vpack.c.b16 %v1855, %v1854
        %v2185 = vpack.c.b16 %v1857, %v1856
        %v2186 = vpack.c.b16 %v1859, %v1858
        %v2187 = vpack.c.b16 %v1861, %v1860
        %v2188 = vpack.c.b16 %v1863, %v1862
        %v2189 = vpack.c.b16 %v1865, %v1864
        %v2190 = vpack.c.b16 %v1867, %v1866
        %v2191 = vpack.c.b16 %v1869, %v1868
        %v2192 = vpack.c.b16 %v1871, %v1870
        %v2193 = vpack.c.b16 %v1873, %v1872
        %v2194 = vpack.c.b16 %v1875, %v1874
        %v2195 = vpack.c.b16 %v1877, %v1876
        %v2196 = vpack.c.b16 %v1879, %v1878
        %v2197 = vpack.c.b16 %v1881, %v1880
        %v2198 = vpack.c.b16 %v1883, %v1882
        %v2199 = vpack.c.b16 %v1885, %v1884
        %v2200 = vpack.c.b16 %v1887, %v1886
        %v2201 = vpack.c.b16 %v1889, %v1888
        %v2202 = vpack.c.b16 %v1891, %v1890
        %v2203 = vpack.c.b16 %v1893, %v1892
        %v2204 = vpack.c.b16 %v1895, %v1894
        %v2205 = vpack.c.b16 %v1897, %v1896
        %v2206 = vpack.c.b16 %v1899, %v1898
        %v2207 = vpack.c.b16 %v1901, %v1900
        %v2208 = vpack.c.b16 %v1903, %v1902
        %v2209 = vpack.c.b16 %v1905, %v1904
        %v2210 = vpack.c.b16 %v1907, %v1906
        %v2211 = vpack.c.b16 %v1909, %v1908
        %v2212 = vpack.c.b16 %v1911, %v1910
        %v2213 = vpack.c.b16 %v1913, %v1912
        %v2214 = vpack.c.b16 %v1915, %v1914
        %v2215 = vpack.c.b16 %v1917, %v1916
        %v2216 = vpack.c.b16 %v1919, %v1918
        %v2217 = vpack.c.b16 %v1921, %v1920
        %v2218 = vpack.c.b16 %v1923, %v1922
        %v2219 = vpack.c.b16 %v1925, %v1924
        %v2220 = vpack.c.b16 %v1927, %v1926
        %v2221 = vpack.c.b16 %v1929, %v1928
        %v2222 = vpack.c.b16 %v1931, %v1930
        %v2223 = vpack.c.b16 %v1933, %v1932
        %v2224 = vpack.c.b16 %v1935, %v1934
        %v2225 = vpack.c.b16 %v1937, %v1936
        %v2226 = vpack.c.b16 %v1939, %v1938
        %v2227 = vpack.c.b16 %v1941, %v1940
        %v2228 = vpack.c.b16 %v1943, %v1942
        %v2229 = vpack.c.b16 %v1945, %v1944
        %v2230 = vpack.c.b16 %v1947, %v1946
        %v2231 = vpack.c.b16 %v1949, %v1948
        %v2232 = vpack.c.b16 %v1951, %v1950
        %v2233 = vpack.c.b16 %v1953, %v1952
        %v2234 = vpack.c.b16 %v1955, %v1954
        %v2235 = vpack.c.b16 %v1957, %v1956
        %v2236 = vpack.c.b16 %v1959, %v1958
        %v2237 = vpack.c.b16 %v1961, %v1960
        %v2238 = vpack.c.b16 %v1963, %v1962
        %v2239 = vpack.c.b16 %v1965, %v1964
        %v2240 = vpack.c.b16 %v1967, %v1966
        %v2241 = vpack.c.b16 %v1969, %v1968
        %v2242 = vpack.c.b16 %v1971, %v1970
        %v2243 = vpack.c.b16 %v1973, %v1972
        %v2244 = vpack.c.b16 %v1975, %v1974
        %v2245 = vpack.c.b16 %v1977, %v1976
        %v2246 = vpack.c.b16 %v1979, %v1978
        %v2247 = vpack.c.b16 %v1981, %v1980
        %v2248 = vpack.c.b16 %v1983, %v1982
        %v2249 = vpack.c.b16 %v1985, %v1984
        %v2250 = vpack.c.b16 %v1987, %v1986
        %v2251 = vpack.c.b16 %v1989, %v1988
        %v2252 = vpack.c.b16 %v1991, %v1990
        %v2253 = vpack.c.b16 %v1993, %v1992
        %v2254 = vpack.c.b16 %v1995, %v1994
        %v2255 = vpack.c.b16 %v1997, %v1996
        %v2256 = vpack.c.b16 %v1999, %v1998
        %v2257 = vpack.c.b16 %v2001, %v2000
        %2514 = vmatprep.subr.bf16.mxu0 0
        %2515 = vmatpush1.bf16.msra.mxu0 %v2002
        %2516 = vmatprep.subr.bf16.mxu0 0
        %2517 = vmatpush1.bf16.msra.mxu0 %v2003
        %2518 = vmatprep.subr.bf16.mxu0 0
        %2519 = vmatpush1.bf16.msra.mxu0 %v2004
        %2520 = vmatprep.subr.bf16.mxu0 0
        %2521 = vmatpush1.bf16.msra.mxu0 %v2005
        %2522 = vmatprep.subr.bf16.mxu0 0
        %2523 = vmatpush1.bf16.msra.mxu0 %v2006
        %2524 = vmatprep.subr.bf16.mxu0 0
        %2525 = vmatpush1.bf16.msra.mxu0 %v2007
        %2526 = vmatprep.subr.bf16.mxu0 0
        %2527 = vmatpush1.bf16.msra.mxu0 %v2008
        %2528 = vmatprep.subr.bf16.mxu0 0
        %2529 = vmatpush1.bf16.msra.mxu0 %v2009
        %2530 = vmatprep.subr.bf16.mxu0 0
        %2531 = vmatpush1.bf16.msra.mxu0 %v2010
        %2532 = vmatprep.subr.bf16.mxu0 0
        %2533 = vmatpush1.bf16.msra.mxu0 %v2011
        %2534 = vmatprep.subr.bf16.mxu0 0
        %2535 = vmatpush1.bf16.msra.mxu0 %v2012
        %2536 = vmatprep.subr.bf16.mxu0 0
        %2537 = vmatpush1.bf16.msra.mxu0 %v2013
        %2538 = vmatprep.subr.bf16.mxu0 0
        %2539 = vmatpush1.bf16.msra.mxu0 %v2014
        %2540 = vmatprep.subr.bf16.mxu0 0
        %2541 = vmatpush1.bf16.msra.mxu0 %v2015
        %2542 = vmatprep.subr.bf16.mxu0 0
        %2543 = vmatpush1.bf16.msra.mxu0 %v2016
        %2544 = vmatprep.subr.bf16.mxu0 0
        %2545 = vmatpush1.bf16.msra.mxu0 %v2017
        %2546 = vmatprep.mubr.bf16.mxu0 %v435
        %2547 = vmatmul.mubr.bf16.gmra.mrb[0].mxu0 %v434
        %v2548 = vpop.f32.mrb[0].mxu0
        %v2549 = vadd.f32 0.0, %v2548
        %v2550 = vpop.f32.mrb[0].mxu0
        %v2551 = vpop.f32.mrb[0].mxu0
        %v2552 = vpop.f32.mrb[0].mxu0
        %2553 = vdwg.mxu0
        %2554 = vmatprep.subr.bf16.mxu0 0
        %2555 = vmatpush1.bf16.msra.mxu0 %v2018
        %2556 = vmatprep.subr.bf16.mxu0 0
        %2557 = vmatpush1.bf16.msra.mxu0 %v2019
        %2558 = vmatprep.subr.bf16.mxu0 0
        %2559 = vmatpush1.bf16.msra.mxu0 %v2020
        %2560 = vmatprep.subr.bf16.mxu0 0
        %2561 = vmatpush1.bf16.msra.mxu0 %v2021
        %2562 = vmatprep.subr.bf16.mxu0 0
        %2563 = vmatpush1.bf16.msra.mxu0 %v2022
        %2564 = vmatprep.subr.bf16.mxu0 0
        %2565 = vmatpush1.bf16.msra.mxu0 %v2023
        %2566 = vmatprep.subr.bf16.mxu0 0
        %2567 = vmatpush1.bf16.msra.mxu0 %v2024
        %2568 = vmatprep.subr.bf16.mxu0 0
        %2569 = vmatpush1.bf16.msra.mxu0 %v2025
        %2570 = vmatprep.subr.bf16.mxu0 0
        %2571 = vmatpush1.bf16.msra.mxu0 %v2026
        %2572 = vmatprep.subr.bf16.mxu0 0
        %2573 = vmatpush1.bf16.msra.mxu0 %v2027
        %2574 = vmatprep.subr.bf16.mxu0 0
        %2575 = vmatpush1.bf16.msra.mxu0 %v2028
        %2576 = vmatprep.subr.bf16.mxu0 0
        %2577 = vmatpush1.bf16.msra.mxu0 %v2029
        %2578 = vmatprep.subr.bf16.mxu0 0
        %2579 = vmatpush1.bf16.msra.mxu0 %v2030
        %2580 = vmatprep.subr.bf16.mxu0 0
        %2581 = vmatpush1.bf16.msra.mxu0 %v2031
        %2582 = vmatprep.subr.bf16.mxu0 0
        %2583 = vmatpush1.bf16.msra.mxu0 %v2032
        %2584 = vmatprep.subr.bf16.mxu0 0
        %2585 = vmatpush1.bf16.msra.mxu0 %v2033
        %2586 = vmatprep.mubr.bf16.mxu0 %v437
        %2587 = vmatmul.mubr.bf16.gmra.mrb[0].mxu0 %v436
        %v2588 = vpop.f32.mrb[0].mxu0
        %v2589 = vadd.f32 %v2549, %v2588
        %v2590 = vpop.f32.mrb[0].mxu0
        %v2591 = vpop.f32.mrb[0].mxu0
        %v2592 = vpop.f32.mrb[0].mxu0
        %2593 = vdwg.mxu0
        %2594 = vmatprep.subr.bf16.mxu0 0
        %2595 = vmatpush1.bf16.msra.mxu0 %v2034
        %2596 = vmatprep.subr.bf16.mxu0 0
        %2597 = vmatpush1.bf16.msra.mxu0 %v2035
        %2598 = vmatprep.subr.bf16.mxu0 0
        %2599 = vmatpush1.bf16.msra.mxu0 %v2036
        %2600 = vmatprep.subr.bf16.mxu0 0
        %2601 = vmatpush1.bf16.msra.mxu0 %v2037
        %2602 = vmatprep.subr.bf16.mxu0 0
        %2603 = vmatpush1.bf16.msra.mxu0 %v2038
        %2604 = vmatprep.subr.bf16.mxu0 0
        %2605 = vmatpush1.bf16.msra.mxu0 %v2039
        %2606 = vmatprep.subr.bf16.mxu0 0
        %2607 = vmatpush1.bf16.msra.mxu0 %v2040
        %2608 = vmatprep.subr.bf16.mxu0 0
        %2609 = vmatpush1.bf16.msra.mxu0 %v2041
        %2610 = vmatprep.subr.bf16.mxu0 0
        %2611 = vmatpush1.bf16.msra.mxu0 %v2042
        %2612 = vmatprep.subr.bf16.mxu0 0
        %2613 = vmatpush1.bf16.msra.mxu0 %v2043
        %2614 = vmatprep.subr.bf16.mxu0 0
        %2615 = vmatpush1.bf16.msra.mxu0 %v2044
        %2616 = vmatprep.subr.bf16.mxu0 0
        %2617 = vmatpush1.bf16.msra.mxu0 %v2045
        %2618 = vmatprep.subr.bf16.mxu0 0
        %2619 = vmatpush1.bf16.msra.mxu0 %v2046
        %2620 = vmatprep.subr.bf16.mxu0 0
        %2621 = vmatpush1.bf16.msra.mxu0 %v2047
        %2622 = vmatprep.subr.bf16.mxu0 0
        %2623 = vmatpush1.bf16.msra.mxu0 %v2048
        %2624 = vmatprep.subr.bf16.mxu0 0
        %2625 = vmatpush1.bf16.msra.mxu0 %v2049
        %2626 = vmatprep.mubr.bf16.mxu0 %v439
        %2627 = vmatmul.mubr.bf16.gmra.mrb[0].mxu0 %v438
        %v2628 = vpop.f32.mrb[0].mxu0
        %v2629 = vadd.f32 %v2589, %v2628
        %v2630 = vpop.f32.mrb[0].mxu0
        %v2631 = vpop.f32.mrb[0].mxu0
        %v2632 = vpop.f32.mrb[0].mxu0
        %2633 = vdwg.mxu0
        %2634 = vmatprep.subr.bf16.mxu0 0
        %2635 = vmatpush1.bf16.msra.mxu0 %v2050
        %2636 = vmatprep.subr.bf16.mxu0 0
        %2637 = vmatpush1.bf16.msra.mxu0 %v2051
        %2638 = vmatprep.subr.bf16.mxu0 0
        %2639 = vmatpush1.bf16.msra.mxu0 %v2052
        %2640 = vmatprep.subr.bf16.mxu0 0
        %2641 = vmatpush1.bf16.msra.mxu0 %v2053
        %2642 = vmatprep.subr.bf16.mxu0 0
        %2643 = vmatpush1.bf16.msra.mxu0 %v2054
        %2644 = vmatprep.subr.bf16.mxu0 0
        %2645 = vmatpush1.bf16.msra.mxu0 %v2055
        %2646 = vmatprep.subr.bf16.mxu0 0
        %2647 = vmatpush1.bf16.msra.mxu0 %v2056
        %2648 = vmatprep.subr.bf16.mxu0 0
        %2649 = vmatpush1.bf16.msra.mxu0 %v2057
        %2650 = vmatprep.subr.bf16.mxu0 0
        %2651 = vmatpush1.bf16.msra.mxu0 %v2058
        %2652 = vmatprep.subr.bf16.mxu0 0
        %2653 = vmatpush1.bf16.msra.mxu0 %v2059
        %2654 = vmatprep.subr.bf16.mxu0 0
        %2655 = vmatpush1.bf16.msra.mxu0 %v2060
        %2656 = vmatprep.subr.bf16.mxu0 0
        %2657 = vmatpush1.bf16.msra.mxu0 %v2061
        %2658 = vmatprep.subr.bf16.mxu0 0
        %2659 = vmatpush1.bf16.msra.mxu0 %v2062
        %2660 = vmatprep.subr.bf16.mxu0 0
        %2661 = vmatpush1.bf16.msra.mxu0 %v2063
        %2662 = vmatprep.subr.bf16.mxu0 0
        %2663 = vmatpush1.bf16.msra.mxu0 %v2064
        %2664 = vmatprep.subr.bf16.mxu0 0
        %2665 = vmatpush1.bf16.msra.mxu0 %v2065
        %2666 = vmatprep.mubr.bf16.mxu0 %v441
        %2667 = vmatmul.mubr.bf16.gmra.mrb[0].mxu0 %v440
        %v2668 = vpop.f32.mrb[0].mxu0
        %v2669 = vadd.f32 %v2629, %v2668
        %v2670 = vpop.f32.mrb[0].mxu0
        %v2671 = vpop.f32.mrb[0].mxu0
        %v2672 = vpop.f32.mrb[0].mxu0
        %2673 = vdwg.mxu0
        %2674 = vmatprep.subr.bf16.mxu0 0
        %2675 = vmatpush1.bf16.msra.mxu0 %v2066
        %2676 = vmatprep.subr.bf16.mxu0 0
        %2677 = vmatpush1.bf16.msra.mxu0 %v2067
        %2678 = vmatprep.subr.bf16.mxu0 0
        %2679 = vmatpush1.bf16.msra.mxu0 %v2068
        %2680 = vmatprep.subr.bf16.mxu0 0
        %2681 = vmatpush1.bf16.msra.mxu0 %v2069
        %2682 = vmatprep.subr.bf16.mxu0 0
        %2683 = vmatpush1.bf16.msra.mxu0 %v2070
        %2684 = vmatprep.subr.bf16.mxu0 0
        %2685 = vmatpush1.bf16.msra.mxu0 %v2071
        %2686 = vmatprep.subr.bf16.mxu0 0
        %2687 = vmatpush1.bf16.msra.mxu0 %v2072
        %2688 = vmatprep.subr.bf16.mxu0 0
        %2689 = vmatpush1.bf16.msra.mxu0 %v2073
        %2690 = vmatprep.subr.bf16.mxu0 0
        %2691 = vmatpush1.bf16.msra.mxu0 %v2074
        %2692 = vmatprep.subr.bf16.mxu0 0
        %2693 = vmatpush1.bf16.msra.mxu0 %v2075
        %2694 = vmatprep.subr.bf16.mxu0 0
        %2695 = vmatpush1.bf16.msra.mxu0 %v2076
        %2696 = vmatprep.subr.bf16.mxu0 0
        %2697 = vmatpush1.bf16.msra.mxu0 %v2077
        %2698 = vmatprep.subr.bf16.mxu0 0
        %2699 = vmatpush1.bf16.msra.mxu0 %v2078
        %2700 = vmatprep.subr.bf16.mxu0 0
        %2701 = vmatpush1.bf16.msra.mxu0 %v2079
        %2702 = vmatprep.subr.bf16.mxu0 0
        %2703 = vmatpush1.bf16.msra.mxu0 %v2080
        %2704 = vmatprep.subr.bf16.mxu0 0
        %2705 = vmatpush1.bf16.msra.mxu0 %v2081
        %2706 = vmatprep.mubr.bf16.mxu0 %v443
        %2707 = vmatmul.mubr.bf16.gmra.mrb[0].mxu0 %v442
        %v2708 = vpop.f32.mrb[0].mxu0
        %v2709 = vadd.f32 %v2669, %v2708
        %v2710 = vpop.f32.mrb[0].mxu0
        %v2711 = vpop.f32.mrb[0].mxu0
        %v2712 = vpop.f32.mrb[0].mxu0
        %2713 = vdwg.mxu0
        %2714 = vmatprep.subr.bf16.mxu0 0
        %2715 = vmatpush1.bf16.msra.mxu0 %v2082
        %2716 = vmatprep.subr.bf16.mxu0 0
        %2717 = vmatpush1.bf16.msra.mxu0 %v2083
        %2718 = vmatprep.subr.bf16.mxu0 0
        %2719 = vmatpush1.bf16.msra.mxu0 %v2084
        %2720 = vmatprep.subr.bf16.mxu0 0
        %2721 = vmatpush1.bf16.msra.mxu0 %v2085
        %2722 = vmatprep.subr.bf16.mxu0 0
        %2723 = vmatpush1.bf16.msra.mxu0 %v2086
        %2724 = vmatprep.subr.bf16.mxu0 0
        %2725 = vmatpush1.bf16.msra.mxu0 %v2087
        %2726 = vmatprep.subr.bf16.mxu0 0
        %2727 = vmatpush1.bf16.msra.mxu0 %v2088
        %2728 = vmatprep.subr.bf16.mxu0 0
        %2729 = vmatpush1.bf16.msra.mxu0 %v2089
        %2730 = vmatprep.subr.bf16.mxu0 0
        %2731 = vmatpush1.bf16.msra.mxu0 %v2090
        %2732 = vmatprep.subr.bf16.mxu0 0
        %2733 = vmatpush1.bf16.msra.mxu0 %v2091
        %2734 = vmatprep.subr.bf16.mxu0 0
        %2735 = vmatpush1.bf16.msra.mxu0 %v2092
        %2736 = vmatprep.subr.bf16.mxu0 0
        %2737 = vmatpush1.bf16.msra.mxu0 %v2093
        %2738 = vmatprep.subr.bf16.mxu0 0
        %2739 = vmatpush1.bf16.msra.mxu0 %v2094
        %2740 = vmatprep.subr.bf16.mxu0 0
        %2741 = vmatpush1.bf16.msra.mxu0 %v2095
        %2742 = vmatprep.subr.bf16.mxu0 0
        %2743 = vmatpush1.bf16.msra.mxu0 %v2096
        %2744 = vmatprep.subr.bf16.mxu0 0
        %2745 = vmatpush1.bf16.msra.mxu0 %v2097
        %2746 = vmatprep.mubr.bf16.mxu0 %v445
        %2747 = vmatmul.mubr.bf16.gmra.mrb[0].mxu0 %v444
        %v2748 = vpop.f32.mrb[0].mxu0
        %v2749 = vadd.f32 %v2709, %v2748
        %v2750 = vpop.f32.mrb[0].mxu0
        %v2751 = vpop.f32.mrb[0].mxu0
        %v2752 = vpop.f32.mrb[0].mxu0
        %2753 = vdwg.mxu0
        %2754 = vmatprep.subr.bf16.mxu0 0
        %2755 = vmatpush1.bf16.msra.mxu0 %v2098
        %2756 = vmatprep.subr.bf16.mxu0 0
        %2757 = vmatpush1.bf16.msra.mxu0 %v2099
        %2758 = vmatprep.subr.bf16.mxu0 0
        %2759 = vmatpush1.bf16.msra.mxu0 %v2100
        %2760 = vmatprep.subr.bf16.mxu0 0
        %2761 = vmatpush1.bf16.msra.mxu0 %v2101
        %2762 = vmatprep.subr.bf16.mxu0 0
        %2763 = vmatpush1.bf16.msra.mxu0 %v2102
        %2764 = vmatprep.subr.bf16.mxu0 0
        %2765 = vmatpush1.bf16.msra.mxu0 %v2103
        %2766 = vmatprep.subr.bf16.mxu0 0
        %2767 = vmatpush1.bf16.msra.mxu0 %v2104
        %2768 = vmatprep.subr.bf16.mxu0 0
        %2769 = vmatpush1.bf16.msra.mxu0 %v2105
        %2770 = vmatprep.subr.bf16.mxu0 0
        %2771 = vmatpush1.bf16.msra.mxu0 %v2106
        %2772 = vmatprep.subr.bf16.mxu0 0
        %2773 = vmatpush1.bf16.msra.mxu0 %v2107
        %2774 = vmatprep.subr.bf16.mxu0 0
        %2775 = vmatpush1.bf16.msra.mxu0 %v2108
        %2776 = vmatprep.subr.bf16.mxu0 0
        %2777 = vmatpush1.bf16.msra.mxu0 %v2109
        %2778 = vmatprep.subr.bf16.mxu0 0
        %2779 = vmatpush1.bf16.msra.mxu0 %v2110
        %2780 = vmatprep.subr.bf16.mxu0 0
        %2781 = vmatpush1.bf16.msra.mxu0 %v2111
        %2782 = vmatprep.subr.bf16.mxu0 0
        %2783 = vmatpush1.bf16.msra.mxu0 %v2112
        %2784 = vmatprep.subr.bf16.mxu0 0
        %2785 = vmatpush1.bf16.msra.mxu0 %v2113
        %2786 = vmatprep.mubr.bf16.mxu0 %v447
        %2787 = vmatmul.mubr.bf16.gmra.mrb[0].mxu0 %v446
        %v2788 = vpop.f32.mrb[0].mxu0
        %v2789 = vadd.f32 %v2749, %v2788
        %v2790 = vpop.f32.mrb[0].mxu0
        %v2791 = vpop.f32.mrb[0].mxu0
        %v2792 = vpop.f32.mrb[0].mxu0
        %2793 = vdwg.mxu0
        %2794 = vmatprep.subr.bf16.mxu0 0
        %2795 = vmatpush1.bf16.msra.mxu0 %v2114
        %2796 = vmatprep.subr.bf16.mxu0 0
        %2797 = vmatpush1.bf16.msra.mxu0 %v2115
        %2798 = vmatprep.subr.bf16.mxu0 0
        %2799 = vmatpush1.bf16.msra.mxu0 %v2116
        %2800 = vmatprep.subr.bf16.mxu0 0
        %2801 = vmatpush1.bf16.msra.mxu0 %v2117
        %2802 = vmatprep.subr.bf16.mxu0 0
        %2803 = vmatpush1.bf16.msra.mxu0 %v2118
        %2804 = vmatprep.subr.bf16.mxu0 0
        %2805 = vmatpush1.bf16.msra.mxu0 %v2119
        %2806 = vmatprep.subr.bf16.mxu0 0
        %2807 = vmatpush1.bf16.msra.mxu0 %v2120
        %2808 = vmatprep.subr.bf16.mxu0 0
        %2809 = vmatpush1.bf16.msra.mxu0 %v2121
        %2810 = vmatprep.subr.bf16.mxu0 0
        %2811 = vmatpush1.bf16.msra.mxu0 %v2122
        %2812 = vmatprep.subr.bf16.mxu0 0
        %2813 = vmatpush1.bf16.msra.mxu0 %v2123
        %2814 = vmatprep.subr.bf16.mxu0 0
        %2815 = vmatpush1.bf16.msra.mxu0 %v2124
        %2816 = vmatprep.subr.bf16.mxu0 0
        %2817 = vmatpush1.bf16.msra.mxu0 %v2125
        %2818 = vmatprep.subr.bf16.mxu0 0
        %2819 = vmatpush1.bf16.msra.mxu0 %v2126
        %2820 = vmatprep.subr.bf16.mxu0 0
        %2821 = vmatpush1.bf16.msra.mxu0 %v2127
        %2822 = vmatprep.subr.bf16.mxu0 0
        %2823 = vmatpush1.bf16.msra.mxu0 %v2128
        %2824 = vmatprep.subr.bf16.mxu0 0
        %2825 = vmatpush1.bf16.msra.mxu0 %v2129
        %2826 = vmatprep.mubr.bf16.mxu0 %v449
        %2827 = vmatmul.mubr.bf16.gmra.mrb[0].mxu0 %v448
        %v2828 = vpop.f32.mrb[0].mxu0
        %v2829 = vadd.f32 %v2789, %v2828
        %v2830 = vpop.f32.mrb[0].mxu0
        %v2831 = vpop.f32.mrb[0].mxu0
        %v2832 = vpop.f32.mrb[0].mxu0
        %2833 = vdwg.mxu0
        %2834 = vmatprep.subr.bf16.mxu0 0
        %2835 = vmatpush1.bf16.msra.mxu0 %v2130
        %2836 = vmatprep.subr.bf16.mxu0 0
        %2837 = vmatpush1.bf16.msra.mxu0 %v2131
        %2838 = vmatprep.subr.bf16.mxu0 0
        %2839 = vmatpush1.bf16.msra.mxu0 %v2132
        %2840 = vmatprep.subr.bf16.mxu0 0
        %2841 = vmatpush1.bf16.msra.mxu0 %v2133
        %2842 = vmatprep.subr.bf16.mxu0 0
        %2843 = vmatpush1.bf16.msra.mxu0 %v2134
        %2844 = vmatprep.subr.bf16.mxu0 0
        %2845 = vmatpush1.bf16.msra.mxu0 %v2135
        %2846 = vmatprep.subr.bf16.mxu0 0
        %2847 = vmatpush1.bf16.msra.mxu0 %v2136
        %2848 = vmatprep.subr.bf16.mxu0 0
        %2849 = vmatpush1.bf16.msra.mxu0 %v2137
        %2850 = vmatprep.subr.bf16.mxu0 0
        %2851 = vmatpush1.bf16.msra.mxu0 %v2138
        %2852 = vmatprep.subr.bf16.mxu0 0
        %2853 = vmatpush1.bf16.msra.mxu0 %v2139
        %2854 = vmatprep.subr.bf16.mxu0 0
        %2855 = vmatpush1.bf16.msra.mxu0 %v2140
        %2856 = vmatprep.subr.bf16.mxu0 0
        %2857 = vmatpush1.bf16.msra.mxu0 %v2141
        %2858 = vmatprep.subr.bf16.mxu0 0
        %2859 = vmatpush1.bf16.msra.mxu0 %v2142
        %2860 = vmatprep.subr.bf16.mxu0 0
        %2861 = vmatpush1.bf16.msra.mxu0 %v2143
        %2862 = vmatprep.subr.bf16.mxu0 0
        %2863 = vmatpush1.bf16.msra.mxu0 %v2144
        %2864 = vmatprep.subr.bf16.mxu0 0
        %2865 = vmatpush1.bf16.msra.mxu0 %v2145
        %2866 = vmatprep.mubr.bf16.mxu0 %v451
        %2867 = vmatmul.mubr.bf16.gmra.mrb[0].mxu0 %v450
        %v2868 = vpop.f32.mrb[0].mxu0
        %v2869 = vadd.f32 %v2829, %v2868
        %v2870 = vpop.f32.mrb[0].mxu0
        %v2871 = vpop.f32.mrb[0].mxu0
        %v2872 = vpop.f32.mrb[0].mxu0
        %2873 = vdwg.mxu0
        %2874 = vmatprep.subr.bf16.mxu0 0
        %2875 = vmatpush1.bf16.msra.mxu0 %v2146
        %2876 = vmatprep.subr.bf16.mxu0 0
        %2877 = vmatpush1.bf16.msra.mxu0 %v2147
        %2878 = vmatprep.subr.bf16.mxu0 0
        %2879 = vmatpush1.bf16.msra.mxu0 %v2148
        %2880 = vmatprep.subr.bf16.mxu0 0
        %2881 = vmatpush1.bf16.msra.mxu0 %v2149
        %2882 = vmatprep.subr.bf16.mxu0 0
        %2883 = vmatpush1.bf16.msra.mxu0 %v2150
        %2884 = vmatprep.subr.bf16.mxu0 0
        %2885 = vmatpush1.bf16.msra.mxu0 %v2151
        %2886 = vmatprep.subr.bf16.mxu0 0
        %2887 = vmatpush1.bf16.msra.mxu0 %v2152
        %2888 = vmatprep.subr.bf16.mxu0 0
        %2889 = vmatpush1.bf16.msra.mxu0 %v2153
        %2890 = vmatprep.subr.bf16.mxu0 0
        %2891 = vmatpush1.bf16.msra.mxu0 %v2154
        %2892 = vmatprep.subr.bf16.mxu0 0
        %2893 = vmatpush1.bf16.msra.mxu0 %v2155
        %2894 = vmatprep.subr.bf16.mxu0 0
        %2895 = vmatpush1.bf16.msra.mxu0 %v2156
        %2896 = vmatprep.subr.bf16.mxu0 0
        %2897 = vmatpush1.bf16.msra.mxu0 %v2157
        %2898 = vmatprep.subr.bf16.mxu0 0
        %2899 = vmatpush1.bf16.msra.mxu0 %v2158
        %2900 = vmatprep.subr.bf16.mxu0 0
        %2901 = vmatpush1.bf16.msra.mxu0 %v2159
        %2902 = vmatprep.subr.bf16.mxu0 0
        %2903 = vmatpush1.bf16.msra.mxu0 %v2160
        %2904 = vmatprep.subr.bf16.mxu0 0
        %2905 = vmatpush1.bf16.msra.mxu0 %v2161
        %2906 = vmatprep.mubr.bf16.mxu0 %v453
        %2907 = vmatmul.mubr.bf16.gmra.mrb[0].mxu0 %v452
        %v2908 = vpop.f32.mrb[0].mxu0
        %v2909 = vadd.f32 %v2869, %v2908
        %v2910 = vpop.f32.mrb[0].mxu0
        %v2911 = vpop.f32.mrb[0].mxu0
        %v2912 = vpop.f32.mrb[0].mxu0
        %2913 = vdwg.mxu0
        %2914 = vmatprep.subr.bf16.mxu0 0
        %2915 = vmatpush1.bf16.msra.mxu0 %v2162
        %2916 = vmatprep.subr.bf16.mxu0 0
        %2917 = vmatpush1.bf16.msra.mxu0 %v2163
        %2918 = vmatprep.subr.bf16.mxu0 0
        %2919 = vmatpush1.bf16.msra.mxu0 %v2164
        %2920 = vmatprep.subr.bf16.mxu0 0
        %2921 = vmatpush1.bf16.msra.mxu0 %v2165
        %2922 = vmatprep.subr.bf16.mxu0 0
        %2923 = vmatpush1.bf16.msra.mxu0 %v2166
        %2924 = vmatprep.subr.bf16.mxu0 0
        %2925 = vmatpush1.bf16.msra.mxu0 %v2167
        %2926 = vmatprep.subr.bf16.mxu0 0
        %2927 = vmatpush1.bf16.msra.mxu0 %v2168
        %2928 = vmatprep.subr.bf16.mxu0 0
        %2929 = vmatpush1.bf16.msra.mxu0 %v2169
        %2930 = vmatprep.subr.bf16.mxu0 0
        %2931 = vmatpush1.bf16.msra.mxu0 %v2170
        %2932 = vmatprep.subr.bf16.mxu0 0
        %2933 = vmatpush1.bf16.msra.mxu0 %v2171
        %2934 = vmatprep.subr.bf16.mxu0 0
        %2935 = vmatpush1.bf16.msra.mxu0 %v2172
        %2936 = vmatprep.subr.bf16.mxu0 0
        %2937 = vmatpush1.bf16.msra.mxu0 %v2173
        %2938 = vmatprep.subr.bf16.mxu0 0
        %2939 = vmatpush1.bf16.msra.mxu0 %v2174
        %2940 = vmatprep.subr.bf16.mxu0 0
        %2941 = vmatpush1.bf16.msra.mxu0 %v2175
        %2942 = vmatprep.subr.bf16.mxu0 0
        %2943 = vmatpush1.bf16.msra.mxu0 %v2176
        %2944 = vmatprep.subr.bf16.mxu0 0
        %2945 = vmatpush1.bf16.msra.mxu0 %v2177
        %2946 = vmatprep.mubr.bf16.mxu0 %v455
        %2947 = vmatmul.mubr.bf16.gmra.mrb[0].mxu0 %v454
        %v2948 = vpop.f32.mrb[0].mxu0
        %v2949 = vadd.f32 %v2909, %v2948
        %v2950 = vpop.f32.mrb[0].mxu0
        %v2951 = vpop.f32.mrb[0].mxu0
        %v2952 = vpop.f32.mrb[0].mxu0
        %2953 = vdwg.mxu0
        %2954 = vmatprep.subr.bf16.mxu0 0
        %2955 = vmatpush1.bf16.msra.mxu0 %v2178
        %2956 = vmatprep.subr.bf16.mxu0 0
        %2957 = vmatpush1.bf16.msra.mxu0 %v2179
        %2958 = vmatprep.subr.bf16.mxu0 0
        %2959 = vmatpush1.bf16.msra.mxu0 %v2180
        %2960 = vmatprep.subr.bf16.mxu0 0
        %2961 = vmatpush1.bf16.msra.mxu0 %v2181
        %2962 = vmatprep.subr.bf16.mxu0 0
        %2963 = vmatpush1.bf16.msra.mxu0 %v2182
        %2964 = vmatprep.subr.bf16.mxu0 0
        %2965 = vmatpush1.bf16.msra.mxu0 %v2183
        %2966 = vmatprep.subr.bf16.mxu0 0
        %2967 = vmatpush1.bf16.msra.mxu0 %v2184
        %2968 = vmatprep.subr.bf16.mxu0 0
        %2969 = vmatpush1.bf16.msra.mxu0 %v2185
        %2970 = vmatprep.subr.bf16.mxu0 0
        %2971 = vmatpush1.bf16.msra.mxu0 %v2186
        %2972 = vmatprep.subr.bf16.mxu0 0
        %2973 = vmatpush1.bf16.msra.mxu0 %v2187
        %2974 = vmatprep.subr.bf16.mxu0 0
        %2975 = vmatpush1.bf16.msra.mxu0 %v2188
        %2976 = vmatprep.subr.bf16.mxu0 0
        %2977 = vmatpush1.bf16.msra.mxu0 %v2189
        %2978 = vmatprep.subr.bf16.mxu0 0
        %2979 = vmatpush1.bf16.msra.mxu0 %v2190
        %2980 = vmatprep.subr.bf16.mxu0 0
        %2981 = vmatpush1.bf16.msra.mxu0 %v2191
        %2982 = vmatprep.subr.bf16.mxu0 0
        %2983 = vmatpush1.bf16.msra.mxu0 %v2192
        %2984 = vmatprep.subr.bf16.mxu0 0
        %2985 = vmatpush1.bf16.msra.mxu0 %v2193
        %2986 = vmatprep.mubr.bf16.mxu0 %v457
        %2987 = vmatmul.mubr.bf16.gmra.mrb[0].mxu0 %v456
        %v2988 = vpop.f32.mrb[0].mxu0
        %v2989 = vadd.f32 %v2949, %v2988
        %v2990 = vpop.f32.mrb[0].mxu0
        %v2991 = vpop.f32.mrb[0].mxu0
        %v2992 = vpop.f32.mrb[0].mxu0
        %2993 = vdwg.mxu0
        %2994 = vmatprep.subr.bf16.mxu0 0
        %2995 = vmatpush1.bf16.msra.mxu0 %v2194
        %2996 = vmatprep.subr.bf16.mxu0 0
        %2997 = vmatpush1.bf16.msra.mxu0 %v2195
        %2998 = vmatprep.subr.bf16.mxu0 0
        %2999 = vmatpush1.bf16.msra.mxu0 %v2196
        %3000 = vmatprep.subr.bf16.mxu0 0
        %3001 = vmatpush1.bf16.msra.mxu0 %v2197
        %3002 = vmatprep.subr.bf16.mxu0 0
        %3003 = vmatpush1.bf16.msra.mxu0 %v2198
        %3004 = vmatprep.subr.bf16.mxu0 0
        %3005 = vmatpush1.bf16.msra.mxu0 %v2199
        %3006 = vmatprep.subr.bf16.mxu0 0
        %3007 = vmatpush1.bf16.msra.mxu0 %v2200
        %3008 = vmatprep.subr.bf16.mxu0 0
        %3009 = vmatpush1.bf16.msra.mxu0 %v2201
        %3010 = vmatprep.subr.bf16.mxu0 0
        %3011 = vmatpush1.bf16.msra.mxu0 %v2202
        %3012 = vmatprep.subr.bf16.mxu0 0
        %3013 = vmatpush1.bf16.msra.mxu0 %v2203
        %3014 = vmatprep.subr.bf16.mxu0 0
        %3015 = vmatpush1.bf16.msra.mxu0 %v2204
        %3016 = vmatprep.subr.bf16.mxu0 0
        %3017 = vmatpush1.bf16.msra.mxu0 %v2205
        %3018 = vmatprep.subr.bf16.mxu0 0
        %3019 = vmatpush1.bf16.msra.mxu0 %v2206
        %3020 = vmatprep.subr.bf16.mxu0 0
        %3021 = vmatpush1.bf16.msra.mxu0 %v2207
        %3022 = vmatprep.subr.bf16.mxu0 0
        %3023 = vmatpush1.bf16.msra.mxu0 %v2208
        %3024 = vmatprep.subr.bf16.mxu0 0
        %3025 = vmatpush1.bf16.msra.mxu0 %v2209
        %3026 = vmatprep.mubr.bf16.mxu0 %v459
        %3027 = vmatmul.mubr.bf16.gmra.mrb[0].mxu0 %v458
        %v3028 = vpop.f32.mrb[0].mxu0
        %v3029 = vadd.f32 %v2989, %v3028
        %v3030 = vpop.f32.mrb[0].mxu0
        %v3031 = vpop.f32.mrb[0].mxu0
        %v3032 = vpop.f32.mrb[0].mxu0
        %3033 = vdwg.mxu0
        %3034 = vmatprep.subr.bf16.mxu0 0
        %3035 = vmatpush1.bf16.msra.mxu0 %v2210
        %3036 = vmatprep.subr.bf16.mxu0 0
        %3037 = vmatpush1.bf16.msra.mxu0 %v2211
        %3038 = vmatprep.subr.bf16.mxu0 0
        %3039 = vmatpush1.bf16.msra.mxu0 %v2212
        %3040 = vmatprep.subr.bf16.mxu0 0
        %3041 = vmatpush1.bf16.msra.mxu0 %v2213
        %3042 = vmatprep.subr.bf16.mxu0 0
        %3043 = vmatpush1.bf16.msra.mxu0 %v2214
        %3044 = vmatprep.subr.bf16.mxu0 0
        %3045 = vmatpush1.bf16.msra.mxu0 %v2215
        %3046 = vmatprep.subr.bf16.mxu0 0
        %3047 = vmatpush1.bf16.msra.mxu0 %v2216
        %3048 = vmatprep.subr.bf16.mxu0 0
        %3049 = vmatpush1.bf16.msra.mxu0 %v2217
        %3050 = vmatprep.subr.bf16.mxu0 0
        %3051 = vmatpush1.bf16.msra.mxu0 %v2218
        %3052 = vmatprep.subr.bf16.mxu0 0
        %3053 = vmatpush1.bf16.msra.mxu0 %v2219
        %3054 = vmatprep.subr.bf16.mxu0 0
        %3055 = vmatpush1.bf16.msra.mxu0 %v2220
        %3056 = vmatprep.subr.bf16.mxu0 0
        %3057 = vmatpush1.bf16.msra.mxu0 %v2221
        %3058 = vmatprep.subr.bf16.mxu0 0
        %3059 = vmatpush1.bf16.msra.mxu0 %v2222
        %3060 = vmatprep.subr.bf16.mxu0 0
        %3061 = vmatpush1.bf16.msra.mxu0 %v2223
        %3062 = vmatprep.subr.bf16.mxu0 0
        %3063 = vmatpush1.bf16.msra.mxu0 %v2224
        %3064 = vmatprep.subr.bf16.mxu0 0
        %3065 = vmatpush1.bf16.msra.mxu0 %v2225
        %3066 = vmatprep.mubr.bf16.mxu0 %v461
        %3067 = vmatmul.mubr.bf16.gmra.mrb[0].mxu0 %v460
        %v3068 = vpop.f32.mrb[0].mxu0
        %v3069 = vadd.f32 %v3029, %v3068
        %v3070 = vpop.f32.mrb[0].mxu0
        %v3071 = vpop.f32.mrb[0].mxu0
        %v3072 = vpop.f32.mrb[0].mxu0
        %3073 = vdwg.mxu0
        %3074 = vmatprep.subr.bf16.mxu0 0
        %3075 = vmatpush1.bf16.msra.mxu0 %v2226
        %3076 = vmatprep.subr.bf16.mxu0 0
        %3077 = vmatpush1.bf16.msra.mxu0 %v2227
        %3078 = vmatprep.subr.bf16.mxu0 0
        %3079 = vmatpush1.bf16.msra.mxu0 %v2228
        %3080 = vmatprep.subr.bf16.mxu0 0
        %3081 = vmatpush1.bf16.msra.mxu0 %v2229
        %3082 = vmatprep.subr.bf16.mxu0 0
        %3083 = vmatpush1.bf16.msra.mxu0 %v2230
        %3084 = vmatprep.subr.bf16.mxu0 0
        %3085 = vmatpush1.bf16.msra.mxu0 %v2231
        %3086 = vmatprep.subr.bf16.mxu0 0
        %3087 = vmatpush1.bf16.msra.mxu0 %v2232
        %3088 = vmatprep.subr.bf16.mxu0 0
        %3089 = vmatpush1.bf16.msra.mxu0 %v2233
        %3090 = vmatprep.subr.bf16.mxu0 0
        %3091 = vmatpush1.bf16.msra.mxu0 %v2234
        %3092 = vmatprep.subr.bf16.mxu0 0
        %3093 = vmatpush1.bf16.msra.mxu0 %v2235
        %3094 = vmatprep.subr.bf16.mxu0 0
        %3095 = vmatpush1.bf16.msra.mxu0 %v2236
        %3096 = vmatprep.subr.bf16.mxu0 0
        %3097 = vmatpush1.bf16.msra.mxu0 %v2237
        %3098 = vmatprep.subr.bf16.mxu0 0
        %3099 = vmatpush1.bf16.msra.mxu0 %v2238
        %3100 = vmatprep.subr.bf16.mxu0 0
        %3101 = vmatpush1.bf16.msra.mxu0 %v2239
        %3102 = vmatprep.subr.bf16.mxu0 0
        %3103 = vmatpush1.bf16.msra.mxu0 %v2240
        %3104 = vmatprep.subr.bf16.mxu0 0
        %3105 = vmatpush1.bf16.msra.mxu0 %v2241
        %3106 = vmatprep.mubr.bf16.mxu0 %v463
        %3107 = vmatmul.mubr.bf16.gmra.mrb[0].mxu0 %v462
        %v3108 = vpop.f32.mrb[0].mxu0
        %v3109 = vadd.f32 %v3069, %v3108
        %v3110 = vpop.f32.mrb[0].mxu0
        %v3111 = vpop.f32.mrb[0].mxu0
        %v3112 = vpop.f32.mrb[0].mxu0
        %3113 = vdwg.mxu0
        %3114 = vmatprep.subr.bf16.mxu0 0
        %3115 = vmatpush1.bf16.msra.mxu0 %v2242
        %3116 = vmatprep.subr.bf16.mxu0 0
        %3117 = vmatpush1.bf16.msra.mxu0 %v2243
        %3118 = vmatprep.subr.bf16.mxu0 0
        %3119 = vmatpush1.bf16.msra.mxu0 %v2244
        %3120 = vmatprep.subr.bf16.mxu0 0
        %3121 = vmatpush1.bf16.msra.mxu0 %v2245
        %3122 = vmatprep.subr.bf16.mxu0 0
        %3123 = vmatpush1.bf16.msra.mxu0 %v2246
        %3124 = vmatprep.subr.bf16.mxu0 0
        %3125 = vmatpush1.bf16.msra.mxu0 %v2247
        %3126 = vmatprep.subr.bf16.mxu0 0
        %3127 = vmatpush1.bf16.msra.mxu0 %v2248
        %3128 = vmatprep.subr.bf16.mxu0 0
        %3129 = vmatpush1.bf16.msra.mxu0 %v2249
        %3130 = vmatprep.subr.bf16.mxu0 0
        %3131 = vmatpush1.bf16.msra.mxu0 %v2250
        %3132 = vmatprep.subr.bf16.mxu0 0
        %3133 = vmatpush1.bf16.msra.mxu0 %v2251
        %3134 = vmatprep.subr.bf16.mxu0 0
        %3135 = vmatpush1.bf16.msra.mxu0 %v2252
        %3136 = vmatprep.subr.bf16.mxu0 0
        %3137 = vmatpush1.bf16.msra.mxu0 %v2253
        %3138 = vmatprep.subr.bf16.mxu0 0
        %3139 = vmatpush1.bf16.msra.mxu0 %v2254
        %3140 = vmatprep.subr.bf16.mxu0 0
        %3141 = vmatpush1.bf16.msra.mxu0 %v2255
        %3142 = vmatprep.subr.bf16.mxu0 0
        %3143 = vmatpush1.bf16.msra.mxu0 %v2256
        %3144 = vmatprep.subr.bf16.mxu0 0
        %3145 = vmatpush1.bf16.msra.mxu0 %v2257
        %3146 = vmatprep.mubr.bf16.mxu0 %v465
        %3147 = vmatmul.mubr.bf16.gmra.mrb[0].mxu0 %v464
        %v3148 = vpop.f32.mrb[0].mxu0
        %v3149 = vadd.f32 %v3109, %v3148
        %v3150 = vpop.f32.mrb[0].mxu0
        %v3151 = vpop.f32.mrb[0].mxu0
        %v3152 = vpop.f32.mrb[0].mxu0
        %3153 = vdwg.mxu0
        %v3154 = vadd.f32 %v257, %v3149
        %3155 = vst [vmem:[#allocation2] sm:$0x3] %v3154
        // Predicated region
        $region45: #{simple_model_forward.2} parent=31 // pred_check
          %p3156 = pneg %p239
        $region46: #{simple_model_forward.2} parent=31 // pred_check_branch
          %3158 = sbr.rel (%p3156) target = $region48
        $region47: #{simple_model_forward.2} parent=31 // pred_region
          %v3159 = vld [vmem:[#allocation2] sm:$0x3]
          %v3160 = vld [vmem:[%s209] sm:$0x1]
          %v3162 = vlaneseq
          %v3163 = vshrl.u32 %v3162, 7
          %v3164 = vsub.s32 0, %v3163
          %v3165 = vrot.slane %v3160, %v3164
          %v3167 = vadd.f32 %v3159, %v3165
          %v3168 = vmax.f32 %v3167, 0.0
          %v3169 = vpack.c.bf16 %v3168, %v3168
          %3170 = vst [vmem:[%s237] sm:$0x1] %v3169
        $region48: #{simple_model_forward.2} parent=31 // pred_fallthru
          _
        %p3171 = scmp.lt.s32.totalorder %s24, 1
        %s3172 = scalar_select %p3171, %s24, 1
        %s3173 = scalar_lea.vmem %s3, %s3172
        // Predicated region
        $region49: #{simple_model_forward.2} parent=31 // pred_check
          %p3174 = pneg %p125
        $region50: #{simple_model_forward.2} parent=31 // pred_check_branch
          %3176 = sbr.rel (%p3174) target = $region52
        $region51: #{simple_model_forward.2} parent=31 // pred_region
          _
        $region52: #{simple_model_forward.2} parent=31 // pred_fallthru
          _
      $region32: #{simple_model_forward.2} parent=5 // pred_fallthru
        _
      %p3177 = scmp.le.s32.totalorder 2, %s15
      // Predicated region
      $region53: #{simple_model_forward.2} parent=5 // pred_check
        %p3178 = pneg %p3177
      $region54: #{simple_model_forward.2} parent=5 // pred_check_branch
        %3180 = sbr.rel (%p3178) target = $region56
      $region55: #{simple_model_forward.2} parent=5 // pred_region
        %s3181 = ssub.s32 %s15, 2
        // Predicated region
        $region57: #{simple_model_forward.2} parent=55 // pred_check
          %p3182 = pneg %p131
        $region58: #{simple_model_forward.2} parent=55 // pred_check_branch
          %3184 = sbr.rel (%p3182) target = $region60
        $region59: #{simple_model_forward.2} parent=55 // pred_region
          %p3185 = scmp.lt.s32.totalorder %s26, 1
          %s3186 = scalar_select %p3185, %s26, 1
          %s3187 = scalar_lea.vmem %s3, %s3186
        $region60: #{simple_model_forward.2} parent=55 // pred_fallthru
          _
      $region56: #{simple_model_forward.2} parent=5 // pred_fallthru
        _
    $region6: #{simple_model_forward.2} parent=1 // loop_footer
      %s19 = sadd.s32 1, %s15
    $region7: #{simple_model_forward.2} parent=1 // loop_footer_branch
      %14 = sbr.rel target = $region3
    $region8: #{simple_model_forward.2} parent=1 // loop_exit
      _
    %3188 = vsyncpa [#allocation4], 1
    %s3189 = scalar_lea.sflag [#allocation4], 1
    %3190 = vsyncpa %s3189, 1
    %3191 = vsyncpa [#allocation6], 1
    %s3192 = scalar_lea.sflag [#allocation6], 1
    %3193 = vsyncpa %s3192, 1

</llo_original>
